<compile_context>
chip_gen: v5e
topology: v5e:2x2
jax: 0.10.0
libtpu: 0.0.40
codegen_flags: <defaults>
</compile_context>

<pallas_src>
import functools

import jax
import jax.numpy as jnp
from jax.experimental import pallas as pl
from jax.experimental.pallas import tpu as pltpu

_SQRT_HALF = 0.7071067811865476
_BN_EPS = 1e-5
_LANES = 128

# Rational approximation of erf for f32 (same coefficients XLA uses for exact erf in
# f32), so nn.GELU()'s exact (erf-based) GELU is reproduced to ~1 ulp.
_ERF_ALPHA = (0.00022905065861350646, 0.0034082910107109506,
              0.050955695062380861, 0.18520832239976145, 1.128379143519084)
_ERF_BETA = (-1.1791602954361697e-7, 2.3547966471313185e-5,
             0.0010179625278914885, 0.014070470171167667,
             0.11098505178285362, 0.49746925110067538, 1.0)


def _erf_f32(x):
    xc = jnp.clip(x, -4.0, 4.0)
    x2 = xc * xc
    p = jnp.full_like(x2, _ERF_ALPHA[0])
    for c in _ERF_ALPHA[1:]:
        p = p * x2 + c
    q = jnp.full_like(x2, _ERF_BETA[0])
    for c in _ERF_BETA[1:]:
        q = q * x2 + c
    # Exact reciprocal (EUP slot).  approx=True would break erf accuracy.
    return xc * p * pl.reciprocal(q, approx=False)


def _gelu_exact(x):
    # torch.nn.GELU() default: 0.5 * x * (1 + erf(x / sqrt(2)))
    return 0.5 * x * (1.0 + _erf_f32(x * _SQRT_HALF))


# ----------------------------- kernels ---------------------------------------
def _dw_gelu_kernel(k, lo, x_ref, dw_ref, y_ref, s_ref, sq_ref, xpad_ref):
    # x_ref   : (1, H, W, Cp) f32   lane-padded NHWC image (no spatial padding)
    # dw_ref  : (k*k + 1, Cp) f32   depthwise taps (tap-major) + bias row
    # y_ref   : (1, H, W, Cp) bf16  GELU(depthwise conv + bias)
    # s_ref   : (1, 1, Cp)    f32   per-image sum(y)      (BN1 partial)
    # sq_ref  : (1, 1, Cp)    f32   per-image sum(y*y)    (BN1 partial)
    # xpad_ref: (H+k-1, W+k-1, Cp) f32  VMEM halo scratch
    _, H, W, Cp = x_ref.shape
    hi = (k - 1) - lo
    Hp, Wp = H + k - 1, W + k - 1

    # 'same' zero halo built in VMEM (no wrapper-side jnp.pad / extra HBM pass).
    # Only the halo border is (re)zeroed each grid step: cheap, and independent of
    # how the batch grid gets split across TensorCores.
    if lo > 0:
        xpad_ref[0:lo, :, :] = jnp.zeros((lo, Wp, Cp), xpad_ref.dtype)
        xpad_ref[lo:lo + H, 0:lo, :] = jnp.zeros((H, lo, Cp), xpad_ref.dtype)
    if hi > 0:
        xpad_ref[lo + H:Hp, :, :] = jnp.zeros((hi, Wp, Cp), xpad_ref.dtype)
        xpad_ref[lo:lo + H, lo + W:Wp, :] = jnp.zeros((H, hi, Cp), xpad_ref.dtype)
    xpad_ref[lo:lo + H, lo:lo + W, :] = x_ref[0]

    dw = dw_ref[...]                                   # (k*k + 1, Cp)

    # Depthwise conv (groups=C, cross-correlation, 'same') as one fused expression
    # tree — no per-tap read-modify-write of an accumulator ref.  Shifts move only
    # along the untiled H axis and the sublane W axis; channel lanes stay aligned.
    acc = None
    for di in range(k):
        row = None
        for dj in range(k):
            t = di * k + dj
            w_t = dw[t:t + 1, :].reshape(1, 1, Cp)
            term = xpad_ref[di:di + H, dj:dj + W, :] * w_t
            row = term if row is None else row + term
        acc = row if acc is None else acc + row

    bias = dw[k * k:k * k + 1, :].reshape(1, 1, Cp)
    y = _gelu_exact(acc + bias)                        # f32 (H, W, Cp)
    y_ref[0] = y.astype(y_ref.dtype)                   # bf16 store to HBM
    # Fused single-pass BN1 statistics in f32 (computed before the bf16 cast).
    s_ref[0] = jnp.sum(jnp.sum(y, axis=0), axis=0, keepdims=True)
    sq_ref[0] = jnp.sum(jnp.sum(y * y, axis=0), axis=0, keepdims=True)


def _pw_gelu_kernel(y_ref, x_ref, p_ref, w_ref, z_ref, s_ref, sq_ref):
    # y_ref: (1, Tm, Cp) bf16  GELU(depthwise) from K1
    # x_ref: (1, Tm, Cp) f32   original lane-padded input -> residual branch
    # p_ref: (3, Cp)     f32   rows: BN1 scale, BN1 shift, pointwise bias
    # w_ref: (Cp, Cp)    bf16  1x1 conv weight (Cin, Cout)
    # z_ref: (1, Tm, Cp) bf16  GELU(pointwise conv + bias)
    # s_ref/sq_ref: (1, 1, Cp) f32  per-tile BN2 partial statistics
    p = p_ref[...]
    r = y_ref[0].astype(jnp.float32) * p[0:1, :] + p[1:2, :] + x_ref[0]
    z = jnp.dot(r.astype(jnp.bfloat16), w_ref[...],
                preferred_element_type=jnp.float32)    # MXU: bf16 in, f32 acc
    z = _gelu_exact(z + p[2:3, :])
    z_ref[0] = z.astype(z_ref.dtype)
    s_ref[0] = jnp.sum(z, axis=0, keepdims=True)
    sq_ref[0] = jnp.sum(z * z, axis=0, keepdims=True)


# ----------------------------- wrapper ----------------------------------------
def _pad_last(v, cp):
    pad = cp - v.shape[-1]
    if pad == 0:
        return v
    return jnp.pad(v, [(0, 0)] * (v.ndim - 1) + [(0, pad)])


def _bn_fold(sum_arr, sq_arr, gamma, beta, count):
    cp = sum_arr.shape[-1]
    s = jnp.sum(sum_arr.reshape(-1, cp), axis=0)
    q = jnp.sum(sq_arr.reshape(-1, cp), axis=0)
    mean = s / count
    # TODO(synk): single-pass E[x^2]-mean^2 can cancel for |mean| >> std channels;
    # switch to per-image-centered partials if that regime ever matters.
    var = jnp.maximum(q / count - mean * mean, 0.0)    # biased (training-mode) var
    scale = gamma * jax.lax.rsqrt(var + _BN_EPS)
    shift = beta - mean * scale
    return scale, shift


def _vmem_limit_bytes():
    # Per-generation scoped-VMEM budget: ~3/4 of physical, capped at 96 MiB
    # (v5e/v6e 128 MiB -> 96 MiB; v7x 64 MiB -> 48 MiB), floor 32 MiB.
    try:
        cap = int(pltpu.get_tpu_info().vmem_capacity_bytes)
    except Exception:
        cap = 64 * 1024 * 1024
    return max(32 * 1024 * 1024, min(cap * 3 // 4, 96 * 1024 * 1024))


@functools.partial(jax.jit, static_argnames=("kernel_size",))
def convmixer_block(x_nchw, params, kernel_size):
    """ConvMixerBlock forward.  x_nchw: (B, C, H, W) -> (B, C, H, W)."""
    B, C, H, W = x_nchw.shape
    k = kernel_size
    HW = H * W
    Cp = ((C + _LANES - 1) // _LANES) * _LANES          # lane-dense channel padding
    lo = (k - 1) // 2                                    # PyTorch 'same' left/top pad
    f32 = jnp.float32
    bf16 = jnp.bfloat16
    vmem = _vmem_limit_bytes()

    # --- layout glue: NCHW -> lane-padded NHWC (no spatial padding, no extra pass) ---
    # TODO(synk): in a stacked ConvMixer keep activations NHWC/lane-padded across
    # blocks so this transpose happens once per model, not per block.
    x = _pad_last(jnp.transpose(x_nchw, (0, 2, 3, 1)).astype(f32), Cp)   # (B,H,W,Cp)
    x2d = x.reshape(B, HW, Cp)                                           # residual operand

    # --- parameter packing (lane-padded, small vectors merged) ---
    dw = jnp.transpose(params["dw_weight"].reshape(C, k * k), (1, 0))    # (k*k, C)
    dwp = jnp.concatenate(
        [_pad_last(dw.astype(f32), Cp),
         _pad_last(params["dw_bias"].astype(f32).reshape(1, C), Cp)],
        axis=0)                                                          # (k*k+1, Cp)
    # BN gammas padded with 0 so padded lanes get BN scale exactly 0 (defensive).
    g1 = _pad_last(params["bn1_gamma"].astype(f32), Cp)
    b1 = _pad_last(params["bn1_beta"].astype(f32), Cp)
    g2 = _pad_last(params["bn2_gamma"].astype(f32), Cp)
    b2 = _pad_last(params["bn2_beta"].astype(f32), Cp)
    pb = _pad_last(params["pw_bias"].astype(f32), Cp)
    pw = jnp.transpose(params["pw_weight"][:, :, 0, 0], (1, 0)).astype(f32)  # (Cin,Cout)
    pw = jnp.pad(pw, ((0, Cp - C), (0, Cp - C))).astype(bf16)                # bf16 MXU input

    # --- kernel 1: depthwise conv + bias + GELU -> bf16 y, BN1 partial stats ---
    y, s1, q1 = pl.pallas_call(
        functools.partial(_dw_gelu_kernel, k, lo),
        grid=(B,),
        in_specs=[
            pl.BlockSpec((1, H, W, Cp), lambda b: (b, 0, 0, 0)),
            pl.BlockSpec((k * k + 1, Cp), lambda b: (0, 0)),
        ],
        out_specs=[
            pl.BlockSpec((1, H, W, Cp), lambda b: (b, 0, 0, 0)),
            pl.BlockSpec((1, 1, Cp), lambda b: (b, 0, 0)),
            pl.BlockSpec((1, 1, Cp), lambda b: (b, 0, 0)),
        ],
        out_shape=[
            jax.ShapeDtypeStruct((B, H, W, Cp), bf16),
            jax.ShapeDtypeStruct((B, 1, Cp), f32),
            jax.ShapeDtypeStruct((B, 1, Cp), f32),
        ],
        scratch_shapes=[pltpu.VMEM((H + k - 1, W + k - 1, Cp), f32)],
        compiler_params=pltpu.CompilerParams(
            dimension_semantics=("parallel",), vmem_limit_bytes=vmem),
    )(x, dwp)

    scale1, shift1 = _bn_fold(s1, q1, g1, b1, B * HW)
    p2 = jnp.stack([scale1, shift1, pb], axis=0)         # (3, Cp)
    y2d = y.reshape(B, HW, Cp)                            # free (contiguous) reshape

    # --- kernel 2: BN1 affine + residual + 1x1 conv (bf16 MXU) + GELU -> bf16 z,
    #               BN2 partial stats.  Tiled over the flattened spatial dim. ---
    if HW > 512:
        tm = next((t for t in (512, 256, 128, 64, 32, 16, 8) if HW % t == 0), HW)
    else:
        tm = HW
    n_m = HW // tm

    z, s2, q2 = pl.pallas_call(
        _pw_gelu_kernel,
        grid=(B, n_m),
        in_specs=[
            pl.BlockSpec((1, tm, Cp), lambda b, m: (b, m, 0)),
            pl.BlockSpec((1, tm, Cp), lambda b, m: (b, m, 0)),
            pl.BlockSpec((3, Cp), lambda b, m: (0, 0)),
            # TODO(synk): single-buffer this broadcast weight (pipeline_mode=
            # pl.Buffered(1)) once VMEM headroom matters (dim >= 1024 on v7x).
            pl.BlockSpec((Cp, Cp), lambda b, m: (0, 0)),
        ],
        out_specs=[
            pl.BlockSpec((1, tm, Cp), lambda b, m: (b, m, 0)),
            pl.BlockSpec((1, 1, Cp), lambda b, m: (b, m, 0)),
            pl.BlockSpec((1, 1, Cp), lambda b, m: (b, m, 0)),
        ],
        out_shape=[
            jax.ShapeDtypeStruct((B, HW, Cp), bf16),
            jax.ShapeDtypeStruct((B, n_m, Cp), f32),
            jax.ShapeDtypeStruct((B, n_m, Cp), f32),
        ],
        compiler_params=pltpu.CompilerParams(
            dimension_semantics=("parallel", "parallel"), vmem_limit_bytes=vmem),
    )(y2d, x2d, p2, pw)

    scale2, shift2 = _bn_fold(s2, q2, g2, b2, B * HW)

    # --- BN2 affine folded into the un-pad + NHWC->NCHW epilogue (XLA fuses it) ---
    out = z.reshape(B, H, W, Cp)[..., :C].astype(f32) * scale2[:C] + shift2[:C]
    return jnp.transpose(out, (0, 3, 1, 2))               # back to NCHW (PyTorch API)


# ------------------------- pure-JAX reference (sanity) -------------------------
def _bn_ref(x, gamma, beta):
    mean = jnp.mean(x, axis=(0, 2, 3), keepdims=True)
    var = jnp.mean((x - mean) ** 2, axis=(0, 2, 3), keepdims=True)
    return ((x - mean) / jnp.sqrt(var + _BN_EPS)) * gamma[None, :, None, None] \
        + beta[None, :, None, None]


def _reference(x_nchw, params, k):
    C = x_nchw.shape[1]
    lo = (k - 1) // 2
    hi = (k - 1) - lo
    y = jax.lax.conv_general_dilated(
        x_nchw, params["dw_weight"], window_strides=(1, 1),
        padding=[(lo, hi), (lo, hi)], feature_group_count=C,
        dimension_numbers=("NCHW", "OIHW", "NCHW"))
    y = y + params["dw_bias"][None, :, None, None]
    y = jax.nn.gelu(y, approximate=False)
    y = _bn_ref(y, params["bn1_gamma"], params["bn1_beta"])
    r = y + x_nchw
    z = jax.lax.conv_general_dilated(
        r, params["pw_weight"], window_strides=(1, 1), padding="VALID",
        dimension_numbers=("NCHW", "OIHW", "NCHW"))
    z = z + params["pw_bias"][None, :, None, None]
    z = jax.nn.gelu(z, approximate=False)
    z = _bn_ref(z, params["bn2_gamma"], params["bn2_beta"])
    return z


if __name__ == "__main__":
    B, C, H, W = 2, 16, 16, 16
    k = 3

    key = jax.random.PRNGKey(0)
    ks = jax.random.split(key, 9)
    params = dict(
        dw_weight=0.2 * jax.random.normal(ks[0], (C, 1, k, k), jnp.float32),
        dw_bias=0.1 * jax.random.normal(ks[1], (C,), jnp.float32),
        bn1_gamma=1.0 + 0.1 * jax.random.normal(ks[2], (C,), jnp.float32),
        bn1_beta=0.1 * jax.random.normal(ks[3], (C,), jnp.float32),
        pw_weight=0.2 * jax.random.normal(ks[4], (C, C, 1, 1), jnp.float32),
        pw_bias=0.1 * jax.random.normal(ks[5], (C,), jnp.float32),
        bn2_gamma=1.0 + 0.1 * jax.random.normal(ks[6], (C,), jnp.float32),
        bn2_beta=0.1 * jax.random.normal(ks[7], (C,), jnp.float32),
    )
    x = jax.random.normal(ks[8], (B, C, H, W), jnp.float32)   # NCHW, like PyTorch

    out = jax.block_until_ready(convmixer_block(x, params, kernel_size=k))
    assert out.shape == (B, C, H, W)
    assert out.dtype == jnp.float32

    ref = jax.block_until_ready(_reference(x, params, k))
    # bf16 HBM intermediates + bf16 MXU inputs (per perf guidance) -> loose tolerance.
    assert jnp.allclose(out, ref, atol=5e-2, rtol=5e-2), "mismatch vs reference"

    print("KERNEL_OK")
</pallas_src>

<mosaic_0001>
module attributes {stable_mosaic.version = 11 : i64} {
  func.func @_dw_gelu_kernel(%arg0: i32, %arg1: memref<1x16x16x128xf32, #tpu.memory_space<vmem>>, %arg2: memref<10x128xf32, #tpu.memory_space<vmem>>, %arg3: memref<1x16x16x128xbf16, #tpu.memory_space<vmem>>, %arg4: memref<1x1x128xf32, #tpu.memory_space<vmem>>, %arg5: memref<1x1x128xf32, #tpu.memory_space<vmem>>, %arg6: memref<18x18x128xf32, #tpu.memory_space<vmem>>) attributes {dimension_semantics = [#tpu.dimension_semantics<parallel>], iteration_bounds = array<i64: 2>, scalar_prefetch = 0 : i64, scratch_operands = 1 : i64, tpu.core_type = #tpu.core_type<tc>, window_params = [{transform_indices = @transform_0, window_bounds = array<i64: 1, 16, 16, 128>}, {pipeline_mode = #tpu.pipeline_mode<synchronous>, transform_indices = @transform_1, window_bounds = array<i64: 10, 128>}, {transform_indices = @transform_2, window_bounds = array<i64: 1, 16, 16, 128>}, {transform_indices = @transform_3, window_bounds = array<i64: 1, 1, 128>}, {transform_indices = @transform_4, window_bounds = array<i64: 1, 1, 128>}]} {
    %cst = arith.constant 0.000000e+00 : f32
    %0 = vector.broadcast %cst : f32 to vector<1x18x128xf32>
    %c0 = arith.constant 0 : index
    %c0_0 = arith.constant 0 : index
    %c0_1 = arith.constant 0 : index
    %1 = vector.load %arg6[%c0, %c0_0, %c0_1] : memref<18x18x128xf32, #tpu.memory_space<vmem>>, vector<1x18x128xf32>
    tpu.vector_store %arg6[%c0, %c0_0, %c0_1], %0 {strides = array<i32>} : memref<18x18x128xf32, #tpu.memory_space<vmem>>, vector<1x18x128xf32>,
    %cst_2 = arith.constant 0.000000e+00 : f32
    %2 = vector.broadcast %cst_2 : f32 to vector<16x1x128xf32>
    %c1 = arith.constant 1 : index
    %c0_3 = arith.constant 0 : index
    %c0_4 = arith.constant 0 : index
    %3 = vector.load %arg6[%c1, %c0_3, %c0_4] : memref<18x18x128xf32, #tpu.memory_space<vmem>>, vector<16x1x128xf32>
    tpu.vector_store %arg6[%c1, %c0_3, %c0_4], %2 {strides = array<i32>} : memref<18x18x128xf32, #tpu.memory_space<vmem>>, vector<16x1x128xf32>,
    %cst_5 = arith.constant 0.000000e+00 : f32
    %4 = vector.broadcast %cst_5 : f32 to vector<1x18x128xf32>
    %c17 = arith.constant 17 : index
    %c0_6 = arith.constant 0 : index
    %c0_7 = arith.constant 0 : index
    %5 = vector.load %arg6[%c17, %c0_6, %c0_7] : memref<18x18x128xf32, #tpu.memory_space<vmem>>, vector<1x18x128xf32>
    tpu.vector_store %arg6[%c17, %c0_6, %c0_7], %4 {strides = array<i32>} : memref<18x18x128xf32, #tpu.memory_space<vmem>>, vector<1x18x128xf32>,
    %cst_8 = arith.constant 0.000000e+00 : f32
    %6 = vector.broadcast %cst_8 : f32 to vector<16x1x128xf32>
    %c1_9 = arith.constant 1 : index
    %c17_10 = arith.constant 17 : index
    %c0_11 = arith.constant 0 : index
    %7 = vector.load %arg6[%c1_9, %c17_10, %c0_11] : memref<18x18x128xf32, #tpu.memory_space<vmem>>, vector<16x1x128xf32>
    tpu.vector_store %arg6[%c1_9, %c17_10, %c0_11], %6 {strides = array<i32>} : memref<18x18x128xf32, #tpu.memory_space<vmem>>, vector<16x1x128xf32>,
    %c0_12 = arith.constant 0 : index
    %c0_13 = arith.constant 0 : index
    %c0_14 = arith.constant 0 : index
    %c0_15 = arith.constant 0 : index
    %8 = vector.load %arg1[%c0_12, %c0_13, %c0_14, %c0_15] : memref<1x16x16x128xf32, #tpu.memory_space<vmem>>, vector<1x16x16x128xf32>
    %9 = vector.shape_cast %8 : vector<1x16x16x128xf32> to vector<16x16x128xf32>
    %c1_16 = arith.constant 1 : index
    %c1_17 = arith.constant 1 : index
    %c0_18 = arith.constant 0 : index
    %10 = vector.load %arg6[%c1_16, %c1_17, %c0_18] : memref<18x18x128xf32, #tpu.memory_space<vmem>>, vector<16x16x128xf32>
    tpu.vector_store %arg6[%c1_16, %c1_17, %c0_18], %9 {strides = array<i32>} : memref<18x18x128xf32, #tpu.memory_space<vmem>>, vector<16x16x128xf32>,
    %c0_19 = arith.constant 0 : index
    %c0_20 = arith.constant 0 : index
    %11 = vector.load %arg2[%c0_19, %c0_20] : memref<10x128xf32, #tpu.memory_space<vmem>>, vector<10x128xf32>
    %12 = vector.extract_strided_slice %11 {offsets = [0, 0], sizes = [1, 128], strides = [1, 1]} : vector<10x128xf32> to vector<1x128xf32>
    %13 = vector.shape_cast %12 : vector<1x128xf32> to vector<1x1x128xf32>
    %c0_21 = arith.constant 0 : index
    %c0_22 = arith.constant 0 : index
    %c0_23 = arith.constant 0 : index
    %14 = vector.load %arg6[%c0_21, %c0_22, %c0_23] : memref<18x18x128xf32, #tpu.memory_space<vmem>>, vector<16x16x128xf32>
    %15 = vector.broadcast %13 : vector<1x1x128xf32> to vector<16x16x128xf32>
    %16 = arith.mulf %14, %15 : vector<16x16x128xf32>
    %17 = vector.extract_strided_slice %11 {offsets = [1, 0], sizes = [1, 128], strides = [1, 1]} : vector<10x128xf32> to vector<1x128xf32>
    %18 = vector.shape_cast %17 : vector<1x128xf32> to vector<1x1x128xf32>
    %c0_24 = arith.constant 0 : index
    %c1_25 = arith.constant 1 : index
    %c0_26 = arith.constant 0 : index
    %19 = vector.load %arg6[%c0_24, %c1_25, %c0_26] : memref<18x18x128xf32, #tpu.memory_space<vmem>>, vector<16x16x128xf32>
    %20 = vector.broadcast %18 : vector<1x1x128xf32> to vector<16x16x128xf32>
    %21 = arith.mulf %19, %20 : vector<16x16x128xf32>
    %22 = arith.addf %16, %21 : vector<16x16x128xf32>
    %23 = vector.extract_strided_slice %11 {offsets = [2, 0], sizes = [1, 128], strides = [1, 1]} : vector<10x128xf32> to vector<1x128xf32>
    %24 = vector.shape_cast %23 : vector<1x128xf32> to vector<1x1x128xf32>
    %c0_27 = arith.constant 0 : index
    %c2 = arith.constant 2 : index
    %c0_28 = arith.constant 0 : index
    %25 = vector.load %arg6[%c0_27, %c2, %c0_28] : memref<18x18x128xf32, #tpu.memory_space<vmem>>, vector<16x16x128xf32>
    %26 = vector.broadcast %24 : vector<1x1x128xf32> to vector<16x16x128xf32>
    %27 = arith.mulf %25, %26 : vector<16x16x128xf32>
    %28 = arith.addf %22, %27 : vector<16x16x128xf32>
    %29 = vector.extract_strided_slice %11 {offsets = [3, 0], sizes = [1, 128], strides = [1, 1]} : vector<10x128xf32> to vector<1x128xf32>
    %30 = vector.shape_cast %29 : vector<1x128xf32> to vector<1x1x128xf32>
    %c1_29 = arith.constant 1 : index
    %c0_30 = arith.constant 0 : index
    %c0_31 = arith.constant 0 : index
    %31 = vector.load %arg6[%c1_29, %c0_30, %c0_31] : memref<18x18x128xf32, #tpu.memory_space<vmem>>, vector<16x16x128xf32>
    %32 = vector.broadcast %30 : vector<1x1x128xf32> to vector<16x16x128xf32>
    %33 = arith.mulf %31, %32 : vector<16x16x128xf32>
    %34 = vector.extract_strided_slice %11 {offsets = [4, 0], sizes = [1, 128], strides = [1, 1]} : vector<10x128xf32> to vector<1x128xf32>
    %35 = vector.shape_cast %34 : vector<1x128xf32> to vector<1x1x128xf32>
    %c1_32 = arith.constant 1 : index
    %c1_33 = arith.constant 1 : index
    %c0_34 = arith.constant 0 : index
    %36 = vector.load %arg6[%c1_32, %c1_33, %c0_34] : memref<18x18x128xf32, #tpu.memory_space<vmem>>, vector<16x16x128xf32>
    %37 = vector.broadcast %35 : vector<1x1x128xf32> to vector<16x16x128xf32>
    %38 = arith.mulf %36, %37 : vector<16x16x128xf32>
    %39 = arith.addf %33, %38 : vector<16x16x128xf32>
    %40 = vector.extract_strided_slice %11 {offsets = [5, 0], sizes = [1, 128], strides = [1, 1]} : vector<10x128xf32> to vector<1x128xf32>
    %41 = vector.shape_cast %40 : vector<1x128xf32> to vector<1x1x128xf32>
    %c1_35 = arith.constant 1 : index
    %c2_36 = arith.constant 2 : index
    %c0_37 = arith.constant 0 : index
    %42 = vector.load %arg6[%c1_35, %c2_36, %c0_37] : memref<18x18x128xf32, #tpu.memory_space<vmem>>, vector<16x16x128xf32>
    %43 = vector.broadcast %41 : vector<1x1x128xf32> to vector<16x16x128xf32>
    %44 = arith.mulf %42, %43 : vector<16x16x128xf32>
    %45 = arith.addf %39, %44 : vector<16x16x128xf32>
    %46 = arith.addf %28, %45 : vector<16x16x128xf32>
    %47 = vector.extract_strided_slice %11 {offsets = [6, 0], sizes = [1, 128], strides = [1, 1]} : vector<10x128xf32> to vector<1x128xf32>
    %48 = vector.shape_cast %47 : vector<1x128xf32> to vector<1x1x128xf32>
    %c2_38 = arith.constant 2 : index
    %c0_39 = arith.constant 0 : index
    %c0_40 = arith.constant 0 : index
    %49 = vector.load %arg6[%c2_38, %c0_39, %c0_40] : memref<18x18x128xf32, #tpu.memory_space<vmem>>, vector<16x16x128xf32>
    %50 = vector.broadcast %48 : vector<1x1x128xf32> to vector<16x16x128xf32>
    %51 = arith.mulf %49, %50 : vector<16x16x128xf32>
    %52 = vector.extract_strided_slice %11 {offsets = [7, 0], sizes = [1, 128], strides = [1, 1]} : vector<10x128xf32> to vector<1x128xf32>
    %53 = vector.shape_cast %52 : vector<1x128xf32> to vector<1x1x128xf32>
    %c2_41 = arith.constant 2 : index
    %c1_42 = arith.constant 1 : index
    %c0_43 = arith.constant 0 : index
    %54 = vector.load %arg6[%c2_41, %c1_42, %c0_43] : memref<18x18x128xf32, #tpu.memory_space<vmem>>, vector<16x16x128xf32>
    %55 = vector.broadcast %53 : vector<1x1x128xf32> to vector<16x16x128xf32>
    %56 = arith.mulf %54, %55 : vector<16x16x128xf32>
    %57 = arith.addf %51, %56 : vector<16x16x128xf32>
    %58 = vector.extract_strided_slice %11 {offsets = [8, 0], sizes = [1, 128], strides = [1, 1]} : vector<10x128xf32> to vector<1x128xf32>
    %59 = vector.shape_cast %58 : vector<1x128xf32> to vector<1x1x128xf32>
    %c2_44 = arith.constant 2 : index
    %c2_45 = arith.constant 2 : index
    %c0_46 = arith.constant 0 : index
    %60 = vector.load %arg6[%c2_44, %c2_45, %c0_46] : memref<18x18x128xf32, #tpu.memory_space<vmem>>, vector<16x16x128xf32>
    %61 = vector.broadcast %59 : vector<1x1x128xf32> to vector<16x16x128xf32>
    %62 = arith.mulf %60, %61 : vector<16x16x128xf32>
    %63 = arith.addf %57, %62 : vector<16x16x128xf32>
    %64 = arith.addf %46, %63 : vector<16x16x128xf32>
    %65 = vector.extract_strided_slice %11 {offsets = [9, 0], sizes = [1, 128], strides = [1, 1]} : vector<10x128xf32> to vector<1x128xf32>
    %66 = vector.shape_cast %65 : vector<1x128xf32> to vector<1x1x128xf32>
    %67 = vector.broadcast %66 : vector<1x1x128xf32> to vector<16x16x128xf32>
    %68 = arith.addf %64, %67 : vector<16x16x128xf32>
    %cst_47 = arith.constant 5.000000e-01 : f32
    %69 = vector.broadcast %cst_47 : f32 to vector<16x16x128xf32>
    %70 = arith.mulf %69, %68 : vector<16x16x128xf32>
    %cst_48 = arith.constant 0.707106769 : f32
    %71 = vector.broadcast %cst_48 : f32 to vector<16x16x128xf32>
    %72 = arith.mulf %68, %71 : vector<16x16x128xf32>
    %cst_49 = arith.constant -4.000000e+00 : f32
    %cst_50 = arith.constant 4.000000e+00 : f32
    %73 = vector.broadcast %cst_49 : f32 to vector<16x16x128xf32>
    %74 = arith.maximumf %73, %72 : vector<16x16x128xf32>
    %75 = vector.broadcast %cst_50 : f32 to vector<16x16x128xf32>
    %76 = arith.minimumf %75, %74 : vector<16x16x128xf32>
    %77 = arith.mulf %76, %76 : vector<16x16x128xf32>
    %cst_51 = arith.constant 2.29050653E-4 : f32
    %78 = vector.broadcast %cst_51 : f32 to vector<16x16x128xf32>
    %79 = arith.mulf %78, %77 : vector<16x16x128xf32>
    %cst_52 = arith.constant 0.00340829091 : f32
    %80 = vector.broadcast %cst_52 : f32 to vector<16x16x128xf32>
    %81 = arith.addf %79, %80 : vector<16x16x128xf32>
    %82 = arith.mulf %81, %77 : vector<16x16x128xf32>
    %cst_53 = arith.constant 0.0509556942 : f32
    %83 = vector.broadcast %cst_53 : f32 to vector<16x16x128xf32>
    %84 = arith.addf %82, %83 : vector<16x16x128xf32>
    %85 = arith.mulf %84, %77 : vector<16x16x128xf32>
    %cst_54 = arith.constant 0.185208321 : f32
    %86 = vector.broadcast %cst_54 : f32 to vector<16x16x128xf32>
    %87 = arith.addf %85, %86 : vector<16x16x128xf32>
    %88 = arith.mulf %87, %77 : vector<16x16x128xf32>
    %cst_55 = arith.constant 1.12837911 : f32
    %89 = vector.broadcast %cst_55 : f32 to vector<16x16x128xf32>
    %90 = arith.addf %88, %89 : vector<16x16x128xf32>
    %cst_56 = arith.constant -1.17916031E-7 : f32
    %91 = vector.broadcast %cst_56 : f32 to vector<16x16x128xf32>
    %92 = arith.mulf %91, %77 : vector<16x16x128xf32>
    %cst_57 = arith.constant 2.35479656E-5 : f32
    %93 = vector.broadcast %cst_57 : f32 to vector<16x16x128xf32>
    %94 = arith.addf %92, %93 : vector<16x16x128xf32>
    %95 = arith.mulf %94, %77 : vector<16x16x128xf32>
    %cst_58 = arith.constant 0.00101796258 : f32
    %96 = vector.broadcast %cst_58 : f32 to vector<16x16x128xf32>
    %97 = arith.addf %95, %96 : vector<16x16x128xf32>
    %98 = arith.mulf %97, %77 : vector<16x16x128xf32>
    %cst_59 = arith.constant 0.0140704699 : f32
    %99 = vector.broadcast %cst_59 : f32 to vector<16x16x128xf32>
    %100 = arith.addf %98, %99 : vector<16x16x128xf32>
    %101 = arith.mulf %100, %77 : vector<16x16x128xf32>
    %cst_60 = arith.constant 0.110985048 : f32
    %102 = vector.broadcast %cst_60 : f32 to vector<16x16x128xf32>
    %103 = arith.addf %101, %102 : vector<16x16x128xf32>
    %104 = arith.mulf %103, %77 : vector<16x16x128xf32>
    %cst_61 = arith.constant 0.497469246 : f32
    %105 = vector.broadcast %cst_61 : f32 to vector<16x16x128xf32>
    %106 = arith.addf %104, %105 : vector<16x16x128xf32>
    %107 = arith.mulf %106, %77 : vector<16x16x128xf32>
    %cst_62 = arith.constant 1.000000e+00 : f32
    %108 = vector.broadcast %cst_62 : f32 to vector<16x16x128xf32>
    %109 = arith.addf %107, %108 : vector<16x16x128xf32>
    %110 = arith.mulf %76, %90 : vector<16x16x128xf32>
    %111 = tpu.reciprocal %109 : vector<16x16x128xf32> -> vector<16x16x128xf32>
    %112 = arith.mulf %110, %111 : vector<16x16x128xf32>
    %cst_63 = arith.constant 1.000000e+00 : f32
    %113 = vector.broadcast %cst_63 : f32 to vector<16x16x128xf32>
    %114 = arith.addf %113, %112 : vector<16x16x128xf32>
    %115 = arith.mulf %70, %114 : vector<16x16x128xf32>
    %116 = arith.truncf %115 : vector<16x16x128xf32> to vector<16x16x128xbf16>
    %c0_64 = arith.constant 0 : index
    %c0_65 = arith.constant 0 : index
    %c0_66 = arith.constant 0 : index
    %c0_67 = arith.constant 0 : index
    %117 = vector.load %arg3[%c0_64, %c0_65, %c0_66, %c0_67] : memref<1x16x16x128xbf16, #tpu.memory_space<vmem>>, vector<1x16x16x128xbf16>
    %118 = vector.shape_cast %117 : vector<1x16x16x128xbf16> to vector<16x16x128xbf16>
    %119 = vector.shape_cast %116 : vector<16x16x128xbf16> to vector<1x16x16x128xbf16>
    tpu.vector_store %arg3[%c0_64, %c0_65, %c0_66, %c0_67], %119 {strides = array<i32>} : memref<1x16x16x128xbf16, #tpu.memory_space<vmem>>, vector<1x16x16x128xbf16>,
    %cst_68 = arith.constant dense<0.000000e+00> : vector<16x128xf32>
    %120 = vector.multi_reduction <add>, %115, %cst_68 [0] : vector<16x16x128xf32> to vector<16x128xf32>
    %cst_69 = arith.constant dense<0.000000e+00> : vector<128xf32>
    %121 = vector.multi_reduction <add>, %120, %cst_69 [0] : vector<16x128xf32> to vector<128xf32>
    %122 = vector.shape_cast %121 : vector<128xf32> to vector<1x128xf32>
    %c0_70 = arith.constant 0 : index
    %c0_71 = arith.constant 0 : index
    %c0_72 = arith.constant 0 : index
    %123 = vector.load %arg4[%c0_70, %c0_71, %c0_72] : memref<1x1x128xf32, #tpu.memory_space<vmem>>, vector<1x1x128xf32>
    %124 = vector.shape_cast %123 : vector<1x1x128xf32> to vector<1x128xf32>
    %125 = vector.shape_cast %122 : vector<1x128xf32> to vector<1x1x128xf32>
    tpu.vector_store %arg4[%c0_70, %c0_71, %c0_72], %125 {strides = array<i32>} : memref<1x1x128xf32, #tpu.memory_space<vmem>>, vector<1x1x128xf32>,
    %126 = arith.mulf %115, %115 : vector<16x16x128xf32>
    %cst_73 = arith.constant dense<0.000000e+00> : vector<16x128xf32>
    %127 = vector.multi_reduction <add>, %126, %cst_73 [0] : vector<16x16x128xf32> to vector<16x128xf32>
    %cst_74 = arith.constant dense<0.000000e+00> : vector<128xf32>
    %128 = vector.multi_reduction <add>, %127, %cst_74 [0] : vector<16x128xf32> to vector<128xf32>
    %129 = vector.shape_cast %128 : vector<128xf32> to vector<1x128xf32>
    %c0_75 = arith.constant 0 : index
    %c0_76 = arith.constant 0 : index
    %c0_77 = arith.constant 0 : index
    %130 = vector.load %arg5[%c0_75, %c0_76, %c0_77] : memref<1x1x128xf32, #tpu.memory_space<vmem>>, vector<1x1x128xf32>
    %131 = vector.shape_cast %130 : vector<1x1x128xf32> to vector<1x128xf32>
    %132 = vector.shape_cast %129 : vector<1x128xf32> to vector<1x1x128xf32>
    tpu.vector_store %arg5[%c0_75, %c0_76, %c0_77], %132 {strides = array<i32>} : memref<1x1x128xf32, #tpu.memory_space<vmem>>, vector<1x1x128xf32>,
    return
  }
  func.func @transform_0(%arg0: i32) -> (i32, i32, i32, i32) {
    %c0_i32 = arith.constant 0 : i32
    %c0_i32_0 = arith.constant 0 : i32
    %c0_i32_1 = arith.constant 0 : i32
    %c0_i32_2 = arith.constant 0 : i32
    return %arg0, %c0_i32, %c0_i32_0, %c0_i32_1 : i32, i32, i32, i32
  }
  func.func @transform_1(%arg0: i32) -> (i32, i32) {
    %c0_i32 = arith.constant 0 : i32
    %c0_i32_0 = arith.constant 0 : i32
    %c0_i32_1 = arith.constant 0 : i32
    return %c0_i32, %c0_i32_0 : i32, i32
  }
  func.func @transform_2(%arg0: i32) -> (i32, i32, i32, i32) {
    %c0_i32 = arith.constant 0 : i32
    %c0_i32_0 = arith.constant 0 : i32
    %c0_i32_1 = arith.constant 0 : i32
    %c0_i32_2 = arith.constant 0 : i32
    return %arg0, %c0_i32, %c0_i32_0, %c0_i32_1 : i32, i32, i32, i32
  }
  func.func @transform_3(%arg0: i32) -> (i32, i32, i32) {
    %c0_i32 = arith.constant 0 : i32
    %c0_i32_0 = arith.constant 0 : i32
    %c0_i32_1 = arith.constant 0 : i32
    return %arg0, %c0_i32, %c0_i32_0 : i32, i32, i32
  }
  func.func @transform_4(%arg0: i32) -> (i32, i32, i32) {
    %c0_i32 = arith.constant 0 : i32
    %c0_i32_0 = arith.constant 0 : i32
    %c0_i32_1 = arith.constant 0 : i32
    return %arg0, %c0_i32, %c0_i32_0 : i32, i32, i32
  }
}

module attributes {stable_mosaic.version = 11 : i64} {
  func.func @_pw_gelu_kernel(%arg0: i32, %arg1: i32, %arg2: memref<1x256x128xbf16, #tpu.memory_space<vmem>>, %arg3: memref<1x256x128xf32, #tpu.memory_space<vmem>>, %arg4: memref<3x128xf32, #tpu.memory_space<vmem>>, %arg5: memref<128x128xbf16, #tpu.memory_space<vmem>>, %arg6: memref<1x256x128xbf16, #tpu.memory_space<vmem>>, %arg7: memref<1x1x128xf32, #tpu.memory_space<vmem>>, %arg8: memref<1x1x128xf32, #tpu.memory_space<vmem>>) attributes {dimension_semantics = [#tpu.dimension_semantics<parallel>, #tpu.dimension_semantics<parallel>], iteration_bounds = array<i64: 2, 1>, scalar_prefetch = 0 : i64, scratch_operands = 0 : i64, tpu.core_type = #tpu.core_type<tc>, window_params = [{transform_indices = @transform_0, window_bounds = array<i64: 1, 256, 128>}, {transform_indices = @transform_1, window_bounds = array<i64: 1, 256, 128>}, {pipeline_mode = #tpu.pipeline_mode<synchronous>, transform_indices = @transform_2, window_bounds = array<i64: 3, 128>}, {pipeline_mode = #tpu.pipeline_mode<synchronous>, transform_indices = @transform_3, window_bounds = array<i64: 128, 128>}, {transform_indices = @transform_4, window_bounds = array<i64: 1, 256, 128>}, {transform_indices = @transform_5, window_bounds = array<i64: 1, 1, 128>}, {transform_indices = @transform_6, window_bounds = array<i64: 1, 1, 128>}]} {
    %c0 = arith.constant 0 : index
    %c0_0 = arith.constant 0 : index
    %0 = vector.load %arg4[%c0, %c0_0] : memref<3x128xf32, #tpu.memory_space<vmem>>, vector<3x128xf32>
    %c0_1 = arith.constant 0 : index
    %c0_2 = arith.constant 0 : index
    %c0_3 = arith.constant 0 : index
    %1 = vector.load %arg2[%c0_1, %c0_2, %c0_3] : memref<1x256x128xbf16, #tpu.memory_space<vmem>>, vector<1x256x128xbf16>
    %2 = vector.shape_cast %1 : vector<1x256x128xbf16> to vector<256x128xbf16>
    %3 = arith.extf %2 : vector<256x128xbf16> to vector<256x128xf32>
    %4 = vector.extract_strided_slice %0 {offsets = [0, 0], sizes = [1, 128], strides = [1, 1]} : vector<3x128xf32> to vector<1x128xf32>
    %5 = vector.broadcast %4 : vector<1x128xf32> to vector<256x128xf32>
    %6 = arith.mulf %3, %5 : vector<256x128xf32>
    %7 = vector.extract_strided_slice %0 {offsets = [1, 0], sizes = [1, 128], strides = [1, 1]} : vector<3x128xf32> to vector<1x128xf32>
    %8 = vector.broadcast %7 : vector<1x128xf32> to vector<256x128xf32>
    %9 = arith.addf %6, %8 : vector<256x128xf32>
    %c0_4 = arith.constant 0 : index
    %c0_5 = arith.constant 0 : index
    %c0_6 = arith.constant 0 : index
    %10 = vector.load %arg3[%c0_4, %c0_5, %c0_6] : memref<1x256x128xf32, #tpu.memory_space<vmem>>, vector<1x256x128xf32>
    %11 = vector.shape_cast %10 : vector<1x256x128xf32> to vector<256x128xf32>
    %12 = arith.addf %9, %11 : vector<256x128xf32>
    %13 = arith.truncf %12 : vector<256x128xf32> to vector<256x128xbf16>
    %c0_7 = arith.constant 0 : index
    %c0_8 = arith.constant 0 : index
    %14 = vector.load %arg5[%c0_7, %c0_8] : memref<128x128xbf16, #tpu.memory_space<vmem>>, vector<128x128xbf16>
    %cst = arith.constant dense<0.000000e+00> : vector<256x128xf32>
    %15 = tpu.matmul %13, %14, %cst {dimension_numbers = #tpu.dot_dimension_numbers<[1], [0], [0], [1], [0, 0, 1, 1], [], []>} : vector<256x128xbf16>, vector<128x128xbf16>, vector<256x128xf32> -> vector<256x128xf32>
    %16 = vector.extract_strided_slice %0 {offsets = [2, 0], sizes = [1, 128], strides = [1, 1]} : vector<3x128xf32> to vector<1x128xf32>
    %17 = vector.broadcast %16 : vector<1x128xf32> to vector<256x128xf32>
    %18 = arith.addf %15, %17 : vector<256x128xf32>
    %cst_9 = arith.constant 5.000000e-01 : f32
    %19 = vector.broadcast %cst_9 : f32 to vector<256x128xf32>
    %20 = arith.mulf %19, %18 : vector<256x128xf32>
    %cst_10 = arith.constant 0.707106769 : f32
    %21 = vector.broadcast %cst_10 : f32 to vector<256x128xf32>
    %22 = arith.mulf %18, %21 : vector<256x128xf32>
    %cst_11 = arith.constant -4.000000e+00 : f32
    %cst_12 = arith.constant 4.000000e+00 : f32
    %23 = vector.broadcast %cst_11 : f32 to vector<256x128xf32>
    %24 = arith.maximumf %23, %22 : vector<256x128xf32>
    %25 = vector.broadcast %cst_12 : f32 to vector<256x128xf32>
    %26 = arith.minimumf %25, %24 : vector<256x128xf32>
    %27 = arith.mulf %26, %26 : vector<256x128xf32>
    %cst_13 = arith.constant 2.29050653E-4 : f32
    %28 = vector.broadcast %cst_13 : f32 to vector<256x128xf32>
    %29 = arith.mulf %28, %27 : vector<256x128xf32>
    %cst_14 = arith.constant 0.00340829091 : f32
    %30 = vector.broadcast %cst_14 : f32 to vector<256x128xf32>
    %31 = arith.addf %29, %30 : vector<256x128xf32>
    %32 = arith.mulf %31, %27 : vector<256x128xf32>
    %cst_15 = arith.constant 0.0509556942 : f32
    %33 = vector.broadcast %cst_15 : f32 to vector<256x128xf32>
    %34 = arith.addf %32, %33 : vector<256x128xf32>
    %35 = arith.mulf %34, %27 : vector<256x128xf32>
    %cst_16 = arith.constant 0.185208321 : f32
    %36 = vector.broadcast %cst_16 : f32 to vector<256x128xf32>
    %37 = arith.addf %35, %36 : vector<256x128xf32>
    %38 = arith.mulf %37, %27 : vector<256x128xf32>
    %cst_17 = arith.constant 1.12837911 : f32
    %39 = vector.broadcast %cst_17 : f32 to vector<256x128xf32>
    %40 = arith.addf %38, %39 : vector<256x128xf32>
    %cst_18 = arith.constant -1.17916031E-7 : f32
    %41 = vector.broadcast %cst_18 : f32 to vector<256x128xf32>
    %42 = arith.mulf %41, %27 : vector<256x128xf32>
    %cst_19 = arith.constant 2.35479656E-5 : f32
    %43 = vector.broadcast %cst_19 : f32 to vector<256x128xf32>
    %44 = arith.addf %42, %43 : vector<256x128xf32>
    %45 = arith.mulf %44, %27 : vector<256x128xf32>
    %cst_20 = arith.constant 0.00101796258 : f32
    %46 = vector.broadcast %cst_20 : f32 to vector<256x128xf32>
    %47 = arith.addf %45, %46 : vector<256x128xf32>
    %48 = arith.mulf %47, %27 : vector<256x128xf32>
    %cst_21 = arith.constant 0.0140704699 : f32
    %49 = vector.broadcast %cst_21 : f32 to vector<256x128xf32>
    %50 = arith.addf %48, %49 : vector<256x128xf32>
    %51 = arith.mulf %50, %27 : vector<256x128xf32>
    %cst_22 = arith.constant 0.110985048 : f32
    %52 = vector.broadcast %cst_22 : f32 to vector<256x128xf32>
    %53 = arith.addf %51, %52 : vector<256x128xf32>
    %54 = arith.mulf %53, %27 : vector<256x128xf32>
    %cst_23 = arith.constant 0.497469246 : f32
    %55 = vector.broadcast %cst_23 : f32 to vector<256x128xf32>
    %56 = arith.addf %54, %55 : vector<256x128xf32>
    %57 = arith.mulf %56, %27 : vector<256x128xf32>
    %cst_24 = arith.constant 1.000000e+00 : f32
    %58 = vector.broadcast %cst_24 : f32 to vector<256x128xf32>
    %59 = arith.addf %57, %58 : vector<256x128xf32>
    %60 = arith.mulf %26, %40 : vector<256x128xf32>
    %61 = tpu.reciprocal %59 : vector<256x128xf32> -> vector<256x128xf32>
    %62 = arith.mulf %60, %61 : vector<256x128xf32>
    %cst_25 = arith.constant 1.000000e+00 : f32
    %63 = vector.broadcast %cst_25 : f32 to vector<256x128xf32>
    %64 = arith.addf %63, %62 : vector<256x128xf32>
    %65 = arith.mulf %20, %64 : vector<256x128xf32>
    %66 = arith.truncf %65 : vector<256x128xf32> to vector<256x128xbf16>
    %c0_26 = arith.constant 0 : index
    %c0_27 = arith.constant 0 : index
    %c0_28 = arith.constant 0 : index
    %67 = vector.load %arg6[%c0_26, %c0_27, %c0_28] : memref<1x256x128xbf16, #tpu.memory_space<vmem>>, vector<1x256x128xbf16>
    %68 = vector.shape_cast %67 : vector<1x256x128xbf16> to vector<256x128xbf16>
    %69 = vector.shape_cast %66 : vector<256x128xbf16> to vector<1x256x128xbf16>
    tpu.vector_store %arg6[%c0_26, %c0_27, %c0_28], %69 {strides = array<i32>} : memref<1x256x128xbf16, #tpu.memory_space<vmem>>, vector<1x256x128xbf16>,
    %cst_29 = arith.constant dense<0.000000e+00> : vector<128xf32>
    %70 = vector.multi_reduction <add>, %65, %cst_29 [0] : vector<256x128xf32> to vector<128xf32>
    %71 = vector.shape_cast %70 : vector<128xf32> to vector<1x128xf32>
    %c0_30 = arith.constant 0 : index
    %c0_31 = arith.constant 0 : index
    %c0_32 = arith.constant 0 : index
    %72 = vector.load %arg7[%c0_30, %c0_31, %c0_32] : memref<1x1x128xf32, #tpu.memory_space<vmem>>, vector<1x1x128xf32>
    %73 = vector.shape_cast %72 : vector<1x1x128xf32> to vector<1x128xf32>
    %74 = vector.shape_cast %71 : vector<1x128xf32> to vector<1x1x128xf32>
    tpu.vector_store %arg7[%c0_30, %c0_31, %c0_32], %74 {strides = array<i32>} : memref<1x1x128xf32, #tpu.memory_space<vmem>>, vector<1x1x128xf32>,
    %75 = arith.mulf %65, %65 : vector<256x128xf32>
    %cst_33 = arith.constant dense<0.000000e+00> : vector<128xf32>
    %76 = vector.multi_reduction <add>, %75, %cst_33 [0] : vector<256x128xf32> to vector<128xf32>
    %77 = vector.shape_cast %76 : vector<128xf32> to vector<1x128xf32>
    %c0_34 = arith.constant 0 : index
    %c0_35 = arith.constant 0 : index
    %c0_36 = arith.constant 0 : index
    %78 = vector.load %arg8[%c0_34, %c0_35, %c0_36] : memref<1x1x128xf32, #tpu.memory_space<vmem>>, vector<1x1x128xf32>
    %79 = vector.shape_cast %78 : vector<1x1x128xf32> to vector<1x128xf32>
    %80 = vector.shape_cast %77 : vector<1x128xf32> to vector<1x1x128xf32>
    tpu.vector_store %arg8[%c0_34, %c0_35, %c0_36], %80 {strides = array<i32>} : memref<1x1x128xf32, #tpu.memory_space<vmem>>, vector<1x1x128xf32>,
    return
  }
  func.func @transform_0(%arg0: i32, %arg1: i32) -> (i32, i32, i32) {
    %c0_i32 = arith.constant 0 : i32
    %c0_i32_0 = arith.constant 0 : i32
    return %arg0, %arg1, %c0_i32 : i32, i32, i32
  }
  func.func @transform_1(%arg0: i32, %arg1: i32) -> (i32, i32, i32) {
    %c0_i32 = arith.constant 0 : i32
    %c0_i32_0 = arith.constant 0 : i32
    return %arg0, %arg1, %c0_i32 : i32, i32, i32
  }
  func.func @transform_2(%arg0: i32, %arg1: i32) -> (i32, i32) {
    %c0_i32 = arith.constant 0 : i32
    %c0_i32_0 = arith.constant 0 : i32
    %c0_i32_1 = arith.constant 0 : i32
    return %c0_i32, %c0_i32_0 : i32, i32
  }
  func.func @transform_3(%arg0: i32, %arg1: i32) -> (i32, i32) {
    %c0_i32 = arith.constant 0 : i32
    %c0_i32_0 = arith.constant 0 : i32
    %c0_i32_1 = arith.constant 0 : i32
    return %c0_i32, %c0_i32_0 : i32, i32
  }
  func.func @transform_4(%arg0: i32, %arg1: i32) -> (i32, i32, i32) {
    %c0_i32 = arith.constant 0 : i32
    %c0_i32_0 = arith.constant 0 : i32
    return %arg0, %arg1, %c0_i32 : i32, i32, i32
  }
  func.func @transform_5(%arg0: i32, %arg1: i32) -> (i32, i32, i32) {
    %c0_i32 = arith.constant 0 : i32
    %c0_i32_0 = arith.constant 0 : i32
    return %arg0, %arg1, %c0_i32 : i32, i32, i32
  }
  func.func @transform_6(%arg0: i32, %arg1: i32) -> (i32, i32, i32) {
    %c0_i32 = arith.constant 0 : i32
    %c0_i32_0 = arith.constant 0 : i32
    return %arg0, %arg1, %c0_i32 : i32, i32, i32
  }
}

</mosaic_0001>

<llo_original>
// kernel: convmixer_block.3
$region0: #{convmixer_block.3}
  #allocation0 [shape = 'u32[]', space=smem, size = 0x4, offset = 0x4, fixed_abs, tag = 'smem constant byte address 0x4 - core index']
  #allocation1 [shape = 'u32[72,128]{1,0:T(1,128)}', space=vmem, size = 0x9000, scoped, tag = 'internal scratch']
  %s0 = inlined_call_operand.vmem [shape: bf16[2,256,128], index: 0, kind: input, shape index: {}]
  %s1 = inlined_call_operand.vmem [shape: f32[2,256,128], index: 1, kind: input, shape index: {}]
  %s2 = inlined_call_operand.vmem [shape: f32[3,128], index: 2, kind: input, shape index: {}]
  %s3 = inlined_call_operand.vmem [shape: bf16[128,128], index: 3, kind: input, shape index: {}]
  %s4 = inlined_call_operand.vmem [shape: bf16[2,256,128], index: 4, kind: output, shape index: {0}]
  %s5 = inlined_call_operand.vmem [shape: f32[2,1,128], index: 5, kind: output, shape index: {1}]
  %s6 = inlined_call_operand.vmem [shape: f32[2,1,128], index: 6, kind: output, shape index: {2}]
  %7 = xla_tuple %s4, %s5, %s6
  %s8 = sld [smem:[#allocation0]]
  $region65: #{convmixer_block.3} parent=0
    _
  %s10 = ssub.s32 1, %s8
  %s11 = scalar_select 0, %s10, %s8
  loop: start=0, step=1, limit=4
  $region2: #{convmixer_block.3} parent=0 // loop_pre_header
    _
  $region3: #{convmixer_block.3} parent=0 // loop_header
    %s13 = sphi 0, %s17
    %p14 = scmp.ge.s32.totalorder %s13, 4
    %s20 = sphi 0, %s32
    %s21 = sphi 0, %s28
    %s22 = sphi 0, %s20
    %s23 = sphi 0, %s21
    %s24 = sphi 0, %s22
    %s25 = sphi 0, %s23
    %s37 = sphi 0, %s39
    %s40 = sphi 0, %s37
    %s41 = sphi 0, %s40
    %s57 = sphi 0, %s41
    %s65 = sphi 0, %s67
    %s68 = sphi 0, %s65
    %s69 = sphi 0, %s68
    %s85 = sphi 0, %s69
    %s89 = sphi 0, %s89
    %s91 = sphi 0, %s89
    %s92 = sphi 0, %s91
    %s106 = sphi 0, %s92
    %s110 = sphi 0, %s110
    %s112 = sphi 0, %s110
    %s113 = sphi 0, %s112
    %s127 = sphi 0, %s113
    %s135 = sphi 0, %s137
    %s138 = sphi 0, %s135
    %s139 = sphi 0, %s138
    %s155 = sphi 0, %s139
    %s163 = sphi 0, %s165
    %s166 = sphi 0, %s163
    %s167 = sphi 0, %s166
    %s183 = sphi 0, %s167
    %s191 = sphi 0, %s193
    %s194 = sphi 0, %s191
    %s195 = sphi 0, %s194
    %s211 = sphi 0, %s195
  $region4: #{convmixer_block.3} parent=0 // loop_header_branch
    %16 = sbr.rel (%p14) target = $region8
  $region5: #{convmixer_block.3} parent=0 // loop_body
    %s18 = ssub.s32 %s13, 1
    %s19 = ssub.s32 %s13, 2
    %s26 = sadd.s32 1, %s21
    %p27 = scmp.ge.s32.totalorder %s26, 1
    %s28 = scalar_select %p27, 0, %s26
    %s29 = sadd.s32 1, %s20
    %s30 = scalar_select %p27, %s29, %s20
    %p31 = scmp.ge.s32.totalorder %s30, 2
    %s32 = scalar_select %p31, 0, %s30
    %s33 = ssub.s32 %s20, %s32
    %s34 = ssub.s32 %s21, %s28
    %s35 = sor.u32 %s33, %s34
    %p36 = scmp.eq.s32.totalorder %s35, 0
    %s38 = sadd.s32 %s37, 1
    %s39 = scalar_select %p36, %s37, %s38
    %p42 = pneg %p36
    %p43 = scmp.eq.s32.totalorder %s13, 1
    %p44 = por %p42, %p43
    %p45 = scmp.ne.s32.totalorder %s37, %s40
    %p46 = scmp.eq.s32.totalorder %s13, 0
    %p47 = por %p45, %p46
    %p48 = scmp.ne.s32.totalorder %s37, %s40
    %p49 = scmp.eq.s32.totalorder %s18, 1
    %p50 = por %p48, %p49
    %p51 = scmp.ne.s32.totalorder %s40, %s41
    %p52 = scmp.eq.s32.totalorder %s18, 0
    %p53 = por %p51, %p52
    %p54 = scmp.ne.s32.totalorder %s40, %s41
    %p55 = scmp.eq.s32.totalorder %s19, 1
    %p56 = por %p54, %p55
    %p58 = scmp.ne.s32.totalorder %s41, %s57
    %p59 = scmp.eq.s32.totalorder %s19, 0
    %p60 = por %p58, %p59
    %s61 = ssub.s32 %s20, %s32
    %s62 = ssub.s32 %s21, %s28
    %s63 = sor.u32 %s61, %s62
    %p64 = scmp.eq.s32.totalorder %s63, 0
    %s66 = sadd.s32 %s65, 1
    %s67 = scalar_select %p64, %s65, %s66
    %p70 = pneg %p64
    %p71 = scmp.eq.s32.totalorder %s13, 1
    %p72 = por %p70, %p71
    %p73 = scmp.ne.s32.totalorder %s65, %s68
    %p74 = scmp.eq.s32.totalorder %s13, 0
    %p75 = por %p73, %p74
    %p76 = scmp.ne.s32.totalorder %s65, %s68
    %p77 = scmp.eq.s32.totalorder %s18, 1
    %p78 = por %p76, %p77
    %p79 = scmp.ne.s32.totalorder %s68, %s69
    %p80 = scmp.eq.s32.totalorder %s18, 0
    %p81 = por %p79, %p80
    %p82 = scmp.ne.s32.totalorder %s68, %s69
    %p83 = scmp.eq.s32.totalorder %s19, 1
    %p84 = por %p82, %p83
    %p86 = scmp.ne.s32.totalorder %s69, %s85
    %p87 = scmp.eq.s32.totalorder %s19, 0
    %p88 = por %p86, %p87
    %s90 = sadd.s32 %s89, 1
    %p93 = scmp.eq.s32.totalorder %s13, 1
    %p94 = scmp.ne.s32.totalorder %s89, %s91
    %p95 = scmp.eq.s32.totalorder %s13, 0
    %p96 = por %p94, %p95
    %p97 = scmp.ne.s32.totalorder %s89, %s91
    %p98 = scmp.eq.s32.totalorder %s18, 1
    %p99 = por %p97, %p98
    %p100 = scmp.ne.s32.totalorder %s91, %s92
    %p101 = scmp.eq.s32.totalorder %s18, 0
    %p102 = por %p100, %p101
    %p103 = scmp.ne.s32.totalorder %s91, %s92
    %p104 = scmp.eq.s32.totalorder %s19, 1
    %p105 = por %p103, %p104
    %p107 = scmp.ne.s32.totalorder %s92, %s106
    %p108 = scmp.eq.s32.totalorder %s19, 0
    %p109 = por %p107, %p108
    %s111 = sadd.s32 %s110, 1
    %p114 = scmp.eq.s32.totalorder %s13, 1
    %p115 = scmp.ne.s32.totalorder %s110, %s112
    %p116 = scmp.eq.s32.totalorder %s13, 0
    %p117 = por %p115, %p116
    %p118 = scmp.ne.s32.totalorder %s110, %s112
    %p119 = scmp.eq.s32.totalorder %s18, 1
    %p120 = por %p118, %p119
    %p121 = scmp.ne.s32.totalorder %s112, %s113
    %p122 = scmp.eq.s32.totalorder %s18, 0
    %p123 = por %p121, %p122
    %p124 = scmp.ne.s32.totalorder %s112, %s113
    %p125 = scmp.eq.s32.totalorder %s19, 1
    %p126 = por %p124, %p125
    %p128 = scmp.ne.s32.totalorder %s113, %s127
    %p129 = scmp.eq.s32.totalorder %s19, 0
    %p130 = por %p128, %p129
    %s131 = ssub.s32 %s20, %s32
    %s132 = ssub.s32 %s21, %s28
    %s133 = sor.u32 %s131, %s132
    %p134 = scmp.eq.s32.totalorder %s133, 0
    %s136 = sadd.s32 %s135, 1
    %s137 = scalar_select %p134, %s135, %s136
    %p140 = pneg %p134
    %p141 = scmp.eq.s32.totalorder %s13, 1
    %p142 = por %p140, %p141
    %p143 = scmp.ne.s32.totalorder %s135, %s138
    %p144 = scmp.eq.s32.totalorder %s13, 0
    %p145 = por %p143, %p144
    %p146 = scmp.ne.s32.totalorder %s135, %s138
    %p147 = scmp.eq.s32.totalorder %s18, 1
    %p148 = por %p146, %p147
    %p149 = scmp.ne.s32.totalorder %s138, %s139
    %p150 = scmp.eq.s32.totalorder %s18, 0
    %p151 = por %p149, %p150
    %p152 = scmp.ne.s32.totalorder %s138, %s139
    %p153 = scmp.eq.s32.totalorder %s19, 1
    %p154 = por %p152, %p153
    %p156 = scmp.ne.s32.totalorder %s139, %s155
    %p157 = scmp.eq.s32.totalorder %s19, 0
    %p158 = por %p156, %p157
    %s159 = ssub.s32 %s20, %s32
    %s160 = ssub.s32 %s21, %s28
    %s161 = sor.u32 %s159, %s160
    %p162 = scmp.eq.s32.totalorder %s161, 0
    %s164 = sadd.s32 %s163, 1
    %s165 = scalar_select %p162, %s163, %s164
    %p168 = pneg %p162
    %p169 = scmp.eq.s32.totalorder %s13, 1
    %p170 = por %p168, %p169
    %p171 = scmp.ne.s32.totalorder %s163, %s166
    %p172 = scmp.eq.s32.totalorder %s13, 0
    %p173 = por %p171, %p172
    %p174 = scmp.ne.s32.totalorder %s163, %s166
    %p175 = scmp.eq.s32.totalorder %s18, 1
    %p176 = por %p174, %p175
    %p177 = scmp.ne.s32.totalorder %s166, %s167
    %p178 = scmp.eq.s32.totalorder %s18, 0
    %p179 = por %p177, %p178
    %p180 = scmp.ne.s32.totalorder %s166, %s167
    %p181 = scmp.eq.s32.totalorder %s19, 1
    %p182 = por %p180, %p181
    %p184 = scmp.ne.s32.totalorder %s167, %s183
    %p185 = scmp.eq.s32.totalorder %s19, 0
    %p186 = por %p184, %p185
    %s187 = ssub.s32 %s20, %s32
    %s188 = ssub.s32 %s21, %s28
    %s189 = sor.u32 %s187, %s188
    %p190 = scmp.eq.s32.totalorder %s189, 0
    %s192 = sadd.s32 %s191, 1
    %s193 = scalar_select %p190, %s191, %s192
    %p196 = pneg %p190
    %p197 = scmp.eq.s32.totalorder %s13, 1
    %p198 = por %p196, %p197
    %p199 = scmp.ne.s32.totalorder %s191, %s194
    %p200 = scmp.eq.s32.totalorder %s13, 0
    %p201 = por %p199, %p200
    %p202 = scmp.ne.s32.totalorder %s191, %s194
    %p203 = scmp.eq.s32.totalorder %s18, 1
    %p204 = por %p202, %p203
    %p205 = scmp.ne.s32.totalorder %s194, %s195
    %p206 = scmp.eq.s32.totalorder %s18, 0
    %p207 = por %p205, %p206
    %p208 = scmp.ne.s32.totalorder %s194, %s195
    %p209 = scmp.eq.s32.totalorder %s19, 1
    %p210 = por %p208, %p209
    %p212 = scmp.ne.s32.totalorder %s195, %s211
    %p213 = scmp.eq.s32.totalorder %s19, 0
    %p214 = por %p212, %p213
    %p215 = scmp.le.s32.totalorder 1, %s13
    %p216 = scmp.lt.s32.totalorder %s13, 3
    %p217 = pnand %p215, %p216
    %p218 = pneg %p217
    // Predicated region
    $region9: #{convmixer_block.3} parent=5 // pred_check
      _
    $region10: #{convmixer_block.3} parent=5 // pred_check_branch
      %220 = sbr.rel (%p217) target = $region12
    $region11: #{convmixer_block.3} parent=5 // pred_region
      %s221 = ssub.s32 %s13, 1
      // Predicated region
      $region13: #{convmixer_block.3} parent=11 // pred_check
        %p222 = pneg %p102
      $region14: #{convmixer_block.3} parent=11 // pred_check_branch
        %224 = sbr.rel (%p222) target = $region16
      $region15: #{convmixer_block.3} parent=11 // pred_region
        _
      $region16: #{convmixer_block.3} parent=11 // pred_fallthru
        _
      // Predicated region
      $region17: #{convmixer_block.3} parent=11 // pred_check
        %p225 = pneg %p123
      $region18: #{convmixer_block.3} parent=11 // pred_check_branch
        %227 = sbr.rel (%p225) target = $region20
      $region19: #{convmixer_block.3} parent=11 // pred_region
        _
      $region20: #{convmixer_block.3} parent=11 // pred_fallthru
        _
    $region12: #{convmixer_block.3} parent=5 // pred_fallthru
      _
    %p228 = scmp.lt.s32.totalorder %s13, 2
    // Predicated region
    $region21: #{convmixer_block.3} parent=5 // pred_check
      %p229 = pneg %p228
    $region22: #{convmixer_block.3} parent=5 // pred_check_branch
      %231 = sbr.rel (%p229) target = $region24
    $region23: #{convmixer_block.3} parent=5 // pred_region
      // Predicated region
      $region25: #{convmixer_block.3} parent=23 // pred_check
        %p232 = pneg %p47
      $region26: #{convmixer_block.3} parent=23 // pred_check_branch
        %234 = sbr.rel (%p232) target = $region28
      $region27: #{convmixer_block.3} parent=23 // pred_region
        %s235 = smul.u32 32, %s21
        %p236 = scmp.lt.s32.totalorder %s20, 1
        %s237 = scalar_select %p236, %s20, 1
        %p238 = scmp.lt.s32.totalorder %s235, 31
        %s239 = scalar_select %p238, %s235, 31
        %s240 = smul.addr %s237, 32
        %s241 = sadd.s32 %s239, %s240
        %s242 = smul.addr %s241, 4
        %s243 = scalar_lea.vmem %s0, %s242
        %s244 = smul.u32 32, %s21
      $region28: #{convmixer_block.3} parent=23 // pred_fallthru
        _
      // Predicated region
      $region29: #{convmixer_block.3} parent=23 // pred_check
        %p245 = pneg %p75
      $region30: #{convmixer_block.3} parent=23 // pred_check_branch
        %247 = sbr.rel (%p245) target = $region32
      $region31: #{convmixer_block.3} parent=23 // pred_region
        %s248 = smul.u32 32, %s21
        %p249 = scmp.lt.s32.totalorder %s20, 1
        %s250 = scalar_select %p249, %s20, 1
        %p251 = scmp.lt.s32.totalorder %s248, 31
        %s252 = scalar_select %p251, %s248, 31
        %s253 = smul.addr %s250, 32
        %s254 = sadd.s32 %s252, %s253
        %s255 = smul.addr %s254, 8
        %s256 = scalar_lea.vmem %s1, %s255
        %s257 = smul.u32 32, %s21
      $region32: #{convmixer_block.3} parent=23 // pred_fallthru
        _
    $region24: #{convmixer_block.3} parent=5 // pred_fallthru
      _
    %p258 = scmp.le.s32.totalorder 1, %s13
    %p259 = scmp.lt.s32.totalorder %s13, 3
    %p260 = pnand %p258, %p259
    %p261 = pneg %p260
    // Predicated region
    $region33: #{convmixer_block.3} parent=5 // pred_check
      _
    $region34: #{convmixer_block.3} parent=5 // pred_check_branch
      %263 = sbr.rel (%p260) target = $region36
    $region35: #{convmixer_block.3} parent=5 // pred_region
      %s264 = ssub.s32 %s13, 1
      %s265 = smul.u32 32, %s23
      %p266 = scmp.lt.s32.totalorder %s22, 1
      %s267 = scalar_select %p266, %s22, 1
      %p268 = scmp.lt.s32.totalorder %s265, 31
      %s269 = scalar_select %p268, %s265, 31
      %s270 = smul.addr %s267, 32
      %s271 = sadd.s32 %s269, %s270
      %s272 = smul.addr %s271, 4
      %s273 = scalar_lea.vmem %s0, %s272
      %p274 = pneg %p53
      %p275 = pneg %p50
      %s276 = smul.u32 32, %s23
      %p277 = scmp.lt.s32.totalorder %s22, 1
      %s278 = scalar_select %p277, %s22, 1
      %p279 = scmp.lt.s32.totalorder %s276, 31
      %s280 = scalar_select %p279, %s276, 31
      %s281 = smul.addr %s278, 32
      %s282 = sadd.s32 %s280, %s281
      %s283 = smul.addr %s282, 8
      %s284 = scalar_lea.vmem %s1, %s283
      %p285 = pneg %p81
      %p286 = pneg %p78
      %p287 = pneg %p102
      %p288 = pneg %p99
      %p289 = pneg %p123
      %p290 = pneg %p120
      %p291 = pneg %p151
      %p292 = pneg %p148
      %s293 = smul.u32 32, %s23
      %p294 = scmp.lt.s32.totalorder %s22, 1
      %s295 = scalar_select %p294, %s22, 1
      %p296 = scmp.lt.s32.totalorder %s293, 31
      %s297 = scalar_select %p296, %s293, 31
      %s298 = smul.addr %s295, 32
      %s299 = sadd.s32 %s297, %s298
      %s300 = smul.addr %s299, 4
      %s301 = scalar_lea.vmem %s4, %s300
      %p302 = pneg %p179
      %p303 = pneg %p176
      %p304 = scmp.lt.s32.totalorder %s22, 1
      %s305 = scalar_select %p304, %s22, 1
      %p306 = scmp.lt.s32.totalorder %s23, 0
      %s307 = scalar_select %p306, %s23, 0
      %s308 = sadd.s32 %s307, %s305
      %s309 = scalar_lea.vmem %s5, %s308
      %p310 = pneg %p207
      %p311 = pneg %p204
      %p312 = scmp.lt.s32.totalorder %s22, 1
      %s313 = scalar_select %p312, %s22, 1
      %p314 = scmp.lt.s32.totalorder %s23, 0
      %s315 = scalar_select %p314, %s23, 0
      %s316 = sadd.s32 %s315, %s313
      %s317 = scalar_lea.vmem %s6, %s316
      %s318 = smul.u32 32, %s23
      %p319 = scmp.lt.s32.totalorder %s22, 1
      %s320 = scalar_select %p319, %s22, 1
      %p321 = scmp.lt.s32.totalorder %s318, 31
      %s322 = scalar_select %p321, %s318, 31
      %s323 = smul.addr %s320, 32
      %s324 = sadd.s32 %s322, %s323
      %s325 = smul.addr %s324, 4
      %s326 = scalar_lea.vmem %s0, %s325
      %s327 = smul.u32 32, %s23
      %s328 = smul.u32 32, %s23
      %p329 = scmp.lt.s32.totalorder %s22, 1
      %s330 = scalar_select %p329, %s22, 1
      %p331 = scmp.lt.s32.totalorder %s328, 31
      %s332 = scalar_select %p331, %s328, 31
      %s333 = smul.addr %s330, 32
      %s334 = sadd.s32 %s332, %s333
      %s335 = smul.addr %s334, 8
      %s336 = scalar_lea.vmem %s1, %s335
      %s337 = smul.u32 32, %s23
      %s338 = smul.u32 32, %s23
      %p339 = scmp.lt.s32.totalorder %s22, 1
      %s340 = scalar_select %p339, %s22, 1
      %p341 = scmp.lt.s32.totalorder %s338, 31
      %s342 = scalar_select %p341, %s338, 31
      %s343 = smul.addr %s340, 32
      %s344 = sadd.s32 %s342, %s343
      %s345 = smul.addr %s344, 4
      %s346 = scalar_lea.vmem %s4, %s345
      %s347 = smul.u32 32, %s23
      %p348 = scmp.lt.s32.totalorder %s22, 1
      %s349 = scalar_select %p348, %s22, 1
      %p350 = scmp.lt.s32.totalorder %s23, 0
      %s351 = scalar_select %p350, %s23, 0
      %s352 = sadd.s32 %s351, %s349
      %s353 = scalar_lea.vmem %s5, %s352
      %p354 = scmp.lt.s32.totalorder %s22, 1
      %s355 = scalar_select %p354, %s22, 1
      %p356 = scmp.lt.s32.totalorder %s23, 0
      %s357 = scalar_select %p356, %s23, 0
      %s358 = sadd.s32 %s357, %s355
      %s359 = scalar_lea.vmem %s6, %s358
      %v360 = vld [vmem:[%s2] sm:$0x7]
      %v361 = vld [vmem:[%s326] sm:$0xf]
      %v362 = vld [vmem:[%s326 + $0x4] sm:$0xf]
      %v363 = vld [vmem:[%s326 + $0x8] sm:$0xf]
      %v364 = vld [vmem:[%s326 + $0xc] sm:$0xf]
      %v365 = vld [vmem:[%s326 + $0x10] sm:$0xf]
      %v366 = vld [vmem:[%s326 + $0x14] sm:$0xf]
      %v367 = vld [vmem:[%s326 + $0x18] sm:$0xf]
      %v368 = vld [vmem:[%s326 + $0x1c] sm:$0xf]
      %v369 = vld [vmem:[%s326 + $0x20] sm:$0xf]
      %v370 = vld [vmem:[%s326 + $0x24] sm:$0xf]
      %v371 = vld [vmem:[%s326 + $0x28] sm:$0xf]
      %v372 = vld [vmem:[%s326 + $0x2c] sm:$0xf]
      %v373 = vld [vmem:[%s326 + $0x30] sm:$0xf]
      %v374 = vld [vmem:[%s326 + $0x34] sm:$0xf]
      %v375 = vld [vmem:[%s326 + $0x38] sm:$0xf]
      %v376 = vld [vmem:[%s326 + $0x3c] sm:$0xf]
      %v377 = vld [vmem:[%s326 + $0x40] sm:$0xf]
      %v378 = vld [vmem:[%s326 + $0x44] sm:$0xf]
      %v379 = vld [vmem:[%s326 + $0x48] sm:$0xf]
      %v380 = vld [vmem:[%s326 + $0x4c] sm:$0xf]
      %v381 = vld [vmem:[%s326 + $0x50] sm:$0xf]
      %v382 = vld [vmem:[%s326 + $0x54] sm:$0xf]
      %v383 = vld [vmem:[%s326 + $0x58] sm:$0xf]
      %v384 = vld [vmem:[%s326 + $0x5c] sm:$0xf]
      %v385 = vld [vmem:[%s326 + $0x60] sm:$0xf]
      %v386 = vld [vmem:[%s326 + $0x64] sm:$0xf]
      %v387 = vld [vmem:[%s326 + $0x68] sm:$0xf]
      %v388 = vld [vmem:[%s326 + $0x6c] sm:$0xf]
      %v389 = vld [vmem:[%s326 + $0x70] sm:$0xf]
      %v390 = vld [vmem:[%s326 + $0x74] sm:$0xf]
      %v391 = vld [vmem:[%s326 + $0x78] sm:$0xf]
      %v392 = vld [vmem:[%s326 + $0x7c] sm:$0xf]
      %v393 = vunpack.c.l.bf16 %v361
      %v394 = vunpack.c.l.bf16 %v362
      %v395 = vunpack.c.l.bf16 %v363
      %v396 = vunpack.c.l.bf16 %v364
      %v397 = vunpack.c.l.bf16 %v365
      %v398 = vunpack.c.l.bf16 %v366
      %v399 = vunpack.c.l.bf16 %v367
      %v400 = vunpack.c.l.bf16 %v368
      %v401 = vunpack.c.l.bf16 %v369
      %v402 = vunpack.c.l.bf16 %v370
      %v403 = vunpack.c.l.bf16 %v371
      %v404 = vunpack.c.l.bf16 %v372
      %v405 = vunpack.c.l.bf16 %v373
      %v406 = vunpack.c.l.bf16 %v374
      %v407 = vunpack.c.l.bf16 %v375
      %v408 = vunpack.c.l.bf16 %v376
      %v409 = vunpack.c.l.bf16 %v377
      %v410 = vunpack.c.l.bf16 %v378
      %v411 = vunpack.c.l.bf16 %v379
      %v412 = vunpack.c.l.bf16 %v380
      %v413 = vunpack.c.l.bf16 %v381
      %v414 = vunpack.c.l.bf16 %v382
      %v415 = vunpack.c.l.bf16 %v383
      %v416 = vunpack.c.l.bf16 %v384
      %v417 = vunpack.c.l.bf16 %v385
      %v418 = vunpack.c.l.bf16 %v386
      %v419 = vunpack.c.l.bf16 %v387
      %v420 = vunpack.c.l.bf16 %v388
      %v421 = vunpack.c.l.bf16 %v389
      %v422 = vunpack.c.l.bf16 %v390
      %v423 = vunpack.c.l.bf16 %v391
      %v424 = vunpack.c.l.bf16 %v392
      %v425 = vperm.slane %v360, 0
      %v426 = vmul.f32 %v393, %v425
      %v427 = vmul.f32 %v394, %v425
      %v428 = vmul.f32 %v395, %v425
      %v429 = vmul.f32 %v396, %v425
      %v430 = vmul.f32 %v397, %v425
      %v431 = vmul.f32 %v398, %v425
      %v432 = vmul.f32 %v399, %v425
      %v433 = vmul.f32 %v400, %v425
      %v434 = vmul.f32 %v401, %v425
      %v435 = vmul.f32 %v402, %v425
      %v436 = vmul.f32 %v403, %v425
      %v437 = vmul.f32 %v404, %v425
      %v438 = vmul.f32 %v405, %v425
      %v439 = vmul.f32 %v406, %v425
      %v440 = vmul.f32 %v407, %v425
      %v441 = vmul.f32 %v408, %v425
      %v442 = vmul.f32 %v409, %v425
      %v443 = vmul.f32 %v410, %v425
      %v444 = vmul.f32 %v411, %v425
      %v445 = vmul.f32 %v412, %v425
      %v446 = vmul.f32 %v413, %v425
      %v447 = vmul.f32 %v414, %v425
      %v448 = vmul.f32 %v415, %v425
      %v449 = vmul.f32 %v416, %v425
      %v450 = vmul.f32 %v417, %v425
      %v451 = vmul.f32 %v418, %v425
      %v452 = vmul.f32 %v419, %v425
      %v453 = vmul.f32 %v420, %v425
      %v454 = vmul.f32 %v421, %v425
      %v455 = vmul.f32 %v422, %v425
      %v456 = vmul.f32 %v423, %v425
      %v457 = vmul.f32 %v424, %v425
      %v458 = vperm.slane %v360, 1
      %v459 = vadd.f32 %v426, %v458
      %v460 = vadd.f32 %v427, %v458
      %v461 = vadd.f32 %v428, %v458
      %v462 = vadd.f32 %v429, %v458
      %v463 = vadd.f32 %v430, %v458
      %v464 = vadd.f32 %v431, %v458
      %v465 = vadd.f32 %v432, %v458
      %v466 = vadd.f32 %v433, %v458
      %v467 = vadd.f32 %v434, %v458
      %v468 = vadd.f32 %v435, %v458
      %v469 = vadd.f32 %v436, %v458
      %v470 = vadd.f32 %v437, %v458
      %v471 = vadd.f32 %v438, %v458
      %v472 = vadd.f32 %v439, %v458
      %v473 = vadd.f32 %v440, %v458
      %v474 = vadd.f32 %v441, %v458
      %v475 = vadd.f32 %v442, %v458
      %v476 = vadd.f32 %v443, %v458
      %v477 = vadd.f32 %v444, %v458
      %v478 = vadd.f32 %v445, %v458
      %v479 = vadd.f32 %v446, %v458
      %v480 = vadd.f32 %v447, %v458
      %v481 = vadd.f32 %v448, %v458
      %v482 = vadd.f32 %v449, %v458
      %v483 = vadd.f32 %v450, %v458
      %v484 = vadd.f32 %v451, %v458
      %v485 = vadd.f32 %v452, %v458
      %v486 = vadd.f32 %v453, %v458
      %v487 = vadd.f32 %v454, %v458
      %v488 = vadd.f32 %v455, %v458
      %v489 = vadd.f32 %v456, %v458
      %v490 = vadd.f32 %v457, %v458
      %v491 = vld [vmem:[%s336] sm:$0xff]
      %v492 = vld [vmem:[%s336 + $0x8] sm:$0xff]
      %v493 = vld [vmem:[%s336 + $0x10] sm:$0xff]
      %v494 = vld [vmem:[%s336 + $0x18] sm:$0xff]
      %v495 = vld [vmem:[%s336 + $0x20] sm:$0xff]
      %v496 = vld [vmem:[%s336 + $0x28] sm:$0xff]
      %v497 = vld [vmem:[%s336 + $0x30] sm:$0xff]
      %v498 = vld [vmem:[%s336 + $0x38] sm:$0xff]
      %v499 = vld [vmem:[%s336 + $0x40] sm:$0xff]
      %v500 = vld [vmem:[%s336 + $0x48] sm:$0xff]
      %v501 = vld [vmem:[%s336 + $0x50] sm:$0xff]
      %v502 = vld [vmem:[%s336 + $0x58] sm:$0xff]
      %v503 = vld [vmem:[%s336 + $0x60] sm:$0xff]
      %v504 = vld [vmem:[%s336 + $0x68] sm:$0xff]
      %v505 = vld [vmem:[%s336 + $0x70] sm:$0xff]
      %v506 = vld [vmem:[%s336 + $0x78] sm:$0xff]
      %v507 = vld [vmem:[%s336 + $0x80] sm:$0xff]
      %v508 = vld [vmem:[%s336 + $0x88] sm:$0xff]
      %v509 = vld [vmem:[%s336 + $0x90] sm:$0xff]
      %v510 = vld [vmem:[%s336 + $0x98] sm:$0xff]
      %v511 = vld [vmem:[%s336 + $0xa0] sm:$0xff]
      %v512 = vld [vmem:[%s336 + $0xa8] sm:$0xff]
      %v513 = vld [vmem:[%s336 + $0xb0] sm:$0xff]
      %v514 = vld [vmem:[%s336 + $0xb8] sm:$0xff]
      %v515 = vld [vmem:[%s336 + $0xc0] sm:$0xff]
      %v516 = vld [vmem:[%s336 + $0xc8] sm:$0xff]
      %v517 = vld [vmem:[%s336 + $0xd0] sm:$0xff]
      %v518 = vld [vmem:[%s336 + $0xd8] sm:$0xff]
      %v519 = vld [vmem:[%s336 + $0xe0] sm:$0xff]
      %v520 = vld [vmem:[%s336 + $0xe8] sm:$0xff]
      %v521 = vld [vmem:[%s336 + $0xf0] sm:$0xff]
      %v522 = vld [vmem:[%s336 + $0xf8] sm:$0xff]
      %v523 = vadd.f32 %v459, %v491
      %v524 = vadd.f32 %v460, %v492
      %v525 = vadd.f32 %v461, %v493
      %v526 = vadd.f32 %v462, %v494
      %v527 = vadd.f32 %v463, %v495
      %v528 = vadd.f32 %v464, %v496
      %v529 = vadd.f32 %v465, %v497
      %v530 = vadd.f32 %v466, %v498
      %v531 = vadd.f32 %v467, %v499
      %v532 = vadd.f32 %v468, %v500
      %v533 = vadd.f32 %v469, %v501
      %v534 = vadd.f32 %v470, %v502
      %v535 = vadd.f32 %v471, %v503
      %v536 = vadd.f32 %v472, %v504
      %v537 = vadd.f32 %v473, %v505
      %v538 = vadd.f32 %v474, %v506
      %v539 = vadd.f32 %v475, %v507
      %v540 = vadd.f32 %v476, %v508
      %v541 = vadd.f32 %v477, %v509
      %v542 = vadd.f32 %v478, %v510
      %v543 = vadd.f32 %v479, %v511
      %v544 = vadd.f32 %v480, %v512
      %v545 = vadd.f32 %v481, %v513
      %v546 = vadd.f32 %v482, %v514
      %v547 = vadd.f32 %v483, %v515
      %v548 = vadd.f32 %v484, %v516
      %v549 = vadd.f32 %v485, %v517
      %v550 = vadd.f32 %v486, %v518
      %v551 = vadd.f32 %v487, %v519
      %v552 = vadd.f32 %v488, %v520
      %v553 = vadd.f32 %v489, %v521
      %v554 = vadd.f32 %v490, %v522
      %v555 = vpack.c.bf16 %v524, %v523
      %v556 = vpack.c.bf16 %v526, %v525
      %v557 = vpack.c.bf16 %v528, %v527
      %v558 = vpack.c.bf16 %v530, %v529
      %v559 = vpack.c.bf16 %v532, %v531
      %v560 = vpack.c.bf16 %v534, %v533
      %v561 = vpack.c.bf16 %v536, %v535
      %v562 = vpack.c.bf16 %v538, %v537
      %v563 = vpack.c.bf16 %v540, %v539
      %v564 = vpack.c.bf16 %v542, %v541
      %v565 = vpack.c.bf16 %v544, %v543
      %v566 = vpack.c.bf16 %v546, %v545
      %v567 = vpack.c.bf16 %v548, %v547
      %v568 = vpack.c.bf16 %v550, %v549
      %v569 = vpack.c.bf16 %v552, %v551
      %v570 = vpack.c.bf16 %v554, %v553
      %v571 = vld [vmem:[%s3] sm:$0xf]
      %v572 = vld [vmem:[%s3 + $0x4] sm:$0xf]
      %v573 = vld [vmem:[%s3 + $0x8] sm:$0xf]
      %v574 = vld [vmem:[%s3 + $0xc] sm:$0xf]
      %v575 = vld [vmem:[%s3 + $0x10] sm:$0xf]
      %v576 = vld [vmem:[%s3 + $0x14] sm:$0xf]
      %v577 = vld [vmem:[%s3 + $0x18] sm:$0xf]
      %v578 = vld [vmem:[%s3 + $0x1c] sm:$0xf]
      %v579 = vld [vmem:[%s3 + $0x20] sm:$0xf]
      %v580 = vld [vmem:[%s3 + $0x24] sm:$0xf]
      %v581 = vld [vmem:[%s3 + $0x28] sm:$0xf]
      %v582 = vld [vmem:[%s3 + $0x2c] sm:$0xf]
      %v583 = vld [vmem:[%s3 + $0x30] sm:$0xf]
      %v584 = vld [vmem:[%s3 + $0x34] sm:$0xf]
      %v585 = vld [vmem:[%s3 + $0x38] sm:$0xf]
      %v586 = vld [vmem:[%s3 + $0x3c] sm:$0xf]
      %v587 = vperm.slane %v360, 2
      %v604 = vunpack.c.l.b16 %v571
      %v605 = vunpack.c.l.b16 %v572
      %v606 = vunpack.c.l.b16 %v573
      %v607 = vunpack.c.l.b16 %v574
      %v608 = vunpack.c.l.b16 %v575
      %v609 = vunpack.c.l.b16 %v576
      %v610 = vunpack.c.l.b16 %v577
      %v611 = vunpack.c.l.b16 %v578
      %v612 = vunpack.c.l.b16 %v579
      %v613 = vunpack.c.l.b16 %v580
      %v614 = vunpack.c.l.b16 %v581
      %v615 = vunpack.c.l.b16 %v582
      %v616 = vunpack.c.l.b16 %v583
      %v617 = vunpack.c.l.b16 %v584
      %v618 = vunpack.c.l.b16 %v585
      %v619 = vunpack.c.l.b16 %v586
      %v620 = vpack.c.b16 %v605, %v604
      %v621 = vpack.c.b16 %v607, %v606
      %v622 = vpack.c.b16 %v609, %v608
      %v623 = vpack.c.b16 %v611, %v610
      %v624 = vpack.c.b16 %v613, %v612
      %v625 = vpack.c.b16 %v615, %v614
      %v626 = vpack.c.b16 %v617, %v616
      %v627 = vpack.c.b16 %v619, %v618
      %636 = vmatpush.bf16.msra.mxu0 %v627
      %637 = vmatpush.bf16.msra.mxu0 %v626
      %638 = vmatpush.bf16.msra.mxu0 %v625
      %639 = vmatpush.bf16.msra.mxu0 %v624
      %640 = vmatpush.bf16.msra.mxu0 %v623
      %641 = vmatpush.bf16.msra.mxu0 %v622
      %642 = vmatpush.bf16.msra.mxu0 %v621
      %643 = vmatpush.bf16.msra.mxu0 %v620
      %644 = vmatmul.bf16.gmra.mxu0 %v555
      %v645 = vpop.f32.mrf.mxu0
      %v646 = vadd.f32 %v587, %v645
      %v647 = vpop.f32.mrf.mxu0
      %v648 = vadd.f32 %v587, %v647
      %649 = vmatmul.bf16.gmra.mxu0 %v556
      %v650 = vpop.f32.mrf.mxu0
      %v651 = vadd.f32 %v587, %v650
      %v652 = vpop.f32.mrf.mxu0
      %v653 = vadd.f32 %v587, %v652
      %654 = vmatmul.bf16.gmra.mxu0 %v557
      %v655 = vpop.f32.mrf.mxu0
      %v656 = vadd.f32 %v587, %v655
      %v657 = vpop.f32.mrf.mxu0
      %v658 = vadd.f32 %v587, %v657
      %659 = vmatmul.bf16.gmra.mxu0 %v558
      %v660 = vpop.f32.mrf.mxu0
      %v661 = vadd.f32 %v587, %v660
      %v662 = vpop.f32.mrf.mxu0
      %v663 = vadd.f32 %v587, %v662
      %664 = vmatmul.bf16.gmra.mxu0 %v559
      %v665 = vpop.f32.mrf.mxu0
      %v666 = vadd.f32 %v587, %v665
      %v667 = vpop.f32.mrf.mxu0
      %v668 = vadd.f32 %v587, %v667
      %669 = vmatmul.bf16.gmra.mxu0 %v560
      %v670 = vpop.f32.mrf.mxu0
      %v671 = vadd.f32 %v587, %v670
      %v672 = vpop.f32.mrf.mxu0
      %v673 = vadd.f32 %v587, %v672
      %674 = vmatmul.bf16.gmra.mxu0 %v561
      %v675 = vpop.f32.mrf.mxu0
      %v676 = vadd.f32 %v587, %v675
      %v677 = vpop.f32.mrf.mxu0
      %v678 = vadd.f32 %v587, %v677
      %679 = vmatmul.bf16.gmra.mxu0 %v562
      %v680 = vpop.f32.mrf.mxu0
      %v681 = vadd.f32 %v587, %v680
      %v682 = vpop.f32.mrf.mxu0
      %v683 = vadd.f32 %v587, %v682
      %684 = vmatmul.bf16.gmra.mxu0 %v563
      %v685 = vpop.f32.mrf.mxu0
      %v686 = vadd.f32 %v587, %v685
      %v687 = vpop.f32.mrf.mxu0
      %v688 = vadd.f32 %v587, %v687
      %689 = vmatmul.bf16.gmra.mxu0 %v564
      %v690 = vpop.f32.mrf.mxu0
      %v691 = vadd.f32 %v587, %v690
      %v692 = vpop.f32.mrf.mxu0
      %v693 = vadd.f32 %v587, %v692
      %694 = vmatmul.bf16.gmra.mxu0 %v565
      %v695 = vpop.f32.mrf.mxu0
      %v696 = vadd.f32 %v587, %v695
      %v697 = vpop.f32.mrf.mxu0
      %v698 = vadd.f32 %v587, %v697
      %699 = vmatmul.bf16.gmra.mxu0 %v566
      %v700 = vpop.f32.mrf.mxu0
      %v701 = vadd.f32 %v587, %v700
      %v702 = vpop.f32.mrf.mxu0
      %v703 = vadd.f32 %v587, %v702
      %704 = vmatmul.bf16.gmra.mxu0 %v567
      %v705 = vpop.f32.mrf.mxu0
      %v706 = vadd.f32 %v587, %v705
      %v707 = vpop.f32.mrf.mxu0
      %v708 = vadd.f32 %v587, %v707
      %709 = vmatmul.bf16.gmra.mxu0 %v568
      %v710 = vpop.f32.mrf.mxu0
      %v711 = vadd.f32 %v587, %v710
      %v712 = vpop.f32.mrf.mxu0
      %v713 = vadd.f32 %v587, %v712
      %714 = vmatmul.bf16.gmra.mxu0 %v569
      %v715 = vpop.f32.mrf.mxu0
      %v716 = vadd.f32 %v587, %v715
      %v717 = vpop.f32.mrf.mxu0
      %v718 = vadd.f32 %v587, %v717
      %719 = vmatmul.bf16.gmra.mxu0 %v570
      %v720 = vpop.f32.mrf.mxu0
      %v721 = vadd.f32 %v587, %v720
      %v722 = vpop.f32.mrf.mxu0
      %v723 = vadd.f32 %v587, %v722
      %724 = vdwg.mxu0
      %v725 = vmul.f32 %v646, 0.5
      %v726 = vmul.f32 %v648, 0.5
      %v727 = vmul.f32 %v651, 0.5
      %v728 = vmul.f32 %v653, 0.5
      %v729 = vmul.f32 %v656, 0.5
      %v730 = vmul.f32 %v658, 0.5
      %v731 = vmul.f32 %v661, 0.5
      %v732 = vmul.f32 %v663, 0.5
      %v733 = vmul.f32 %v666, 0.5
      %v734 = vmul.f32 %v668, 0.5
      %v735 = vmul.f32 %v671, 0.5
      %v736 = vmul.f32 %v673, 0.5
      %v737 = vmul.f32 %v676, 0.5
      %v738 = vmul.f32 %v678, 0.5
      %v739 = vmul.f32 %v681, 0.5
      %v740 = vmul.f32 %v683, 0.5
      %v741 = vmul.f32 %v686, 0.5
      %v742 = vmul.f32 %v688, 0.5
      %v743 = vmul.f32 %v691, 0.5
      %v744 = vmul.f32 %v693, 0.5
      %v745 = vmul.f32 %v696, 0.5
      %v746 = vmul.f32 %v698, 0.5
      %v747 = vmul.f32 %v701, 0.5
      %v748 = vmul.f32 %v703, 0.5
      %v749 = vmul.f32 %v706, 0.5
      %v750 = vmul.f32 %v708, 0.5
      %v751 = vmul.f32 %v711, 0.5
      %v752 = vmul.f32 %v713, 0.5
      %v753 = vmul.f32 %v716, 0.5
      %v754 = vmul.f32 %v718, 0.5
      %v755 = vmul.f32 %v721, 0.5
      %v756 = vmul.f32 %v723, 0.5
      %v757 = vmul.f32 %v646, 0.70710677
      %v758 = vmul.f32 %v648, 0.70710677
      %v759 = vmul.f32 %v651, 0.70710677
      %v760 = vmul.f32 %v653, 0.70710677
      %v761 = vmul.f32 %v656, 0.70710677
      %v762 = vmul.f32 %v658, 0.70710677
      %v763 = vmul.f32 %v661, 0.70710677
      %v764 = vmul.f32 %v663, 0.70710677
      %v765 = vmul.f32 %v666, 0.70710677
      %v766 = vmul.f32 %v668, 0.70710677
      %v767 = vmul.f32 %v671, 0.70710677
      %v768 = vmul.f32 %v673, 0.70710677
      %v769 = vmul.f32 %v676, 0.70710677
      %v770 = vmul.f32 %v678, 0.70710677
      %v771 = vmul.f32 %v681, 0.70710677
      %v772 = vmul.f32 %v683, 0.70710677
      %v773 = vmul.f32 %v686, 0.70710677
      %v774 = vmul.f32 %v688, 0.70710677
      %v775 = vmul.f32 %v691, 0.70710677
      %v776 = vmul.f32 %v693, 0.70710677
      %v777 = vmul.f32 %v696, 0.70710677
      %v778 = vmul.f32 %v698, 0.70710677
      %v779 = vmul.f32 %v701, 0.70710677
      %v780 = vmul.f32 %v703, 0.70710677
      %v781 = vmul.f32 %v706, 0.70710677
      %v782 = vmul.f32 %v708, 0.70710677
      %v783 = vmul.f32 %v711, 0.70710677
      %v784 = vmul.f32 %v713, 0.70710677
      %v785 = vmul.f32 %v716, 0.70710677
      %v786 = vmul.f32 %v718, 0.70710677
      %v787 = vmul.f32 %v721, 0.70710677
      %v788 = vmul.f32 %v723, 0.70710677
      %v789 = vmax.f32 %v757, -4.0
      %v790 = vmax.f32 %v758, -4.0
      %v791 = vmax.f32 %v759, -4.0
      %v792 = vmax.f32 %v760, -4.0
      %v793 = vmax.f32 %v761, -4.0
      %v794 = vmax.f32 %v762, -4.0
      %v795 = vmax.f32 %v763, -4.0
      %v796 = vmax.f32 %v764, -4.0
      %v797 = vmax.f32 %v765, -4.0
      %v798 = vmax.f32 %v766, -4.0
      %v799 = vmax.f32 %v767, -4.0
      %v800 = vmax.f32 %v768, -4.0
      %v801 = vmax.f32 %v769, -4.0
      %v802 = vmax.f32 %v770, -4.0
      %v803 = vmax.f32 %v771, -4.0
      %v804 = vmax.f32 %v772, -4.0
      %v805 = vmax.f32 %v773, -4.0
      %v806 = vmax.f32 %v774, -4.0
      %v807 = vmax.f32 %v775, -4.0
      %v808 = vmax.f32 %v776, -4.0
      %v809 = vmax.f32 %v777, -4.0
      %v810 = vmax.f32 %v778, -4.0
      %v811 = vmax.f32 %v779, -4.0
      %v812 = vmax.f32 %v780, -4.0
      %v813 = vmax.f32 %v781, -4.0
      %v814 = vmax.f32 %v782, -4.0
      %v815 = vmax.f32 %v783, -4.0
      %v816 = vmax.f32 %v784, -4.0
      %v817 = vmax.f32 %v785, -4.0
      %v818 = vmax.f32 %v786, -4.0
      %v819 = vmax.f32 %v787, -4.0
      %v820 = vmax.f32 %v788, -4.0
      %v821 = vmin.f32 %v789, 4.0
      %v822 = vmin.f32 %v790, 4.0
      %v823 = vmin.f32 %v791, 4.0
      %v824 = vmin.f32 %v792, 4.0
      %v825 = vmin.f32 %v793, 4.0
      %v826 = vmin.f32 %v794, 4.0
      %v827 = vmin.f32 %v795, 4.0
      %v828 = vmin.f32 %v796, 4.0
      %v829 = vmin.f32 %v797, 4.0
      %v830 = vmin.f32 %v798, 4.0
      %v831 = vmin.f32 %v799, 4.0
      %v832 = vmin.f32 %v800, 4.0
      %v833 = vmin.f32 %v801, 4.0
      %v834 = vmin.f32 %v802, 4.0
      %v835 = vmin.f32 %v803, 4.0
      %v836 = vmin.f32 %v804, 4.0
      %v837 = vmin.f32 %v805, 4.0
      %v838 = vmin.f32 %v806, 4.0
      %v839 = vmin.f32 %v807, 4.0
      %v840 = vmin.f32 %v808, 4.0
      %v841 = vmin.f32 %v809, 4.0
      %v842 = vmin.f32 %v810, 4.0
      %v843 = vmin.f32 %v811, 4.0
      %v844 = vmin.f32 %v812, 4.0
      %v845 = vmin.f32 %v813, 4.0
      %v846 = vmin.f32 %v814, 4.0
      %v847 = vmin.f32 %v815, 4.0
      %v848 = vmin.f32 %v816, 4.0
      %v849 = vmin.f32 %v817, 4.0
      %v850 = vmin.f32 %v818, 4.0
      %v851 = vmin.f32 %v819, 4.0
      %v852 = vmin.f32 %v820, 4.0
      %v853 = vmul.f32 %v821, %v821
      %v854 = vmul.f32 %v822, %v822
      %v855 = vmul.f32 %v823, %v823
      %v856 = vmul.f32 %v824, %v824
      %v857 = vmul.f32 %v825, %v825
      %v858 = vmul.f32 %v826, %v826
      %v859 = vmul.f32 %v827, %v827
      %v860 = vmul.f32 %v828, %v828
      %v861 = vmul.f32 %v829, %v829
      %v862 = vmul.f32 %v830, %v830
      %v863 = vmul.f32 %v831, %v831
      %v864 = vmul.f32 %v832, %v832
      %v865 = vmul.f32 %v833, %v833
      %v866 = vmul.f32 %v834, %v834
      %v867 = vmul.f32 %v835, %v835
      %v868 = vmul.f32 %v836, %v836
      %v869 = vmul.f32 %v837, %v837
      %v870 = vmul.f32 %v838, %v838
      %v871 = vmul.f32 %v839, %v839
      %v872 = vmul.f32 %v840, %v840
      %v873 = vmul.f32 %v841, %v841
      %v874 = vmul.f32 %v842, %v842
      %v875 = vmul.f32 %v843, %v843
      %v876 = vmul.f32 %v844, %v844
      %v877 = vmul.f32 %v845, %v845
      %v878 = vmul.f32 %v846, %v846
      %v879 = vmul.f32 %v847, %v847
      %v880 = vmul.f32 %v848, %v848
      %v881 = vmul.f32 %v849, %v849
      %v882 = vmul.f32 %v850, %v850
      %v883 = vmul.f32 %v851, %v851
      %v884 = vmul.f32 %v852, %v852
      %v885 = vmul.f32 %v853, 0.00022905065
      %v886 = vmul.f32 %v854, 0.00022905065
      %v887 = vmul.f32 %v855, 0.00022905065
      %v888 = vmul.f32 %v856, 0.00022905065
      %v889 = vmul.f32 %v857, 0.00022905065
      %v890 = vmul.f32 %v858, 0.00022905065
      %v891 = vmul.f32 %v859, 0.00022905065
      %v892 = vmul.f32 %v860, 0.00022905065
      %v893 = vmul.f32 %v861, 0.00022905065
      %v894 = vmul.f32 %v862, 0.00022905065
      %v895 = vmul.f32 %v863, 0.00022905065
      %v896 = vmul.f32 %v864, 0.00022905065
      %v897 = vmul.f32 %v865, 0.00022905065
      %v898 = vmul.f32 %v866, 0.00022905065
      %v899 = vmul.f32 %v867, 0.00022905065
      %v900 = vmul.f32 %v868, 0.00022905065
      %v901 = vmul.f32 %v869, 0.00022905065
      %v902 = vmul.f32 %v870, 0.00022905065
      %v903 = vmul.f32 %v871, 0.00022905065
      %v904 = vmul.f32 %v872, 0.00022905065
      %v905 = vmul.f32 %v873, 0.00022905065
      %v906 = vmul.f32 %v874, 0.00022905065
      %v907 = vmul.f32 %v875, 0.00022905065
      %v908 = vmul.f32 %v876, 0.00022905065
      %v909 = vmul.f32 %v877, 0.00022905065
      %v910 = vmul.f32 %v878, 0.00022905065
      %v911 = vmul.f32 %v879, 0.00022905065
      %v912 = vmul.f32 %v880, 0.00022905065
      %v913 = vmul.f32 %v881, 0.00022905065
      %v914 = vmul.f32 %v882, 0.00022905065
      %v915 = vmul.f32 %v883, 0.00022905065
      %v916 = vmul.f32 %v884, 0.00022905065
      %v917 = vadd.f32 %v885, 0.003408291
      %v918 = vadd.f32 %v886, 0.003408291
      %v919 = vadd.f32 %v887, 0.003408291
      %v920 = vadd.f32 %v888, 0.003408291
      %v921 = vadd.f32 %v889, 0.003408291
      %v922 = vadd.f32 %v890, 0.003408291
      %v923 = vadd.f32 %v891, 0.003408291
      %v924 = vadd.f32 %v892, 0.003408291
      %v925 = vadd.f32 %v893, 0.003408291
      %v926 = vadd.f32 %v894, 0.003408291
      %v927 = vadd.f32 %v895, 0.003408291
      %v928 = vadd.f32 %v896, 0.003408291
      %v929 = vadd.f32 %v897, 0.003408291
      %v930 = vadd.f32 %v898, 0.003408291
      %v931 = vadd.f32 %v899, 0.003408291
      %v932 = vadd.f32 %v900, 0.003408291
      %v933 = vadd.f32 %v901, 0.003408291
      %v934 = vadd.f32 %v902, 0.003408291
      %v935 = vadd.f32 %v903, 0.003408291
      %v936 = vadd.f32 %v904, 0.003408291
      %v937 = vadd.f32 %v905, 0.003408291
      %v938 = vadd.f32 %v906, 0.003408291
      %v939 = vadd.f32 %v907, 0.003408291
      %v940 = vadd.f32 %v908, 0.003408291
      %v941 = vadd.f32 %v909, 0.003408291
      %v942 = vadd.f32 %v910, 0.003408291
      %v943 = vadd.f32 %v911, 0.003408291
      %v944 = vadd.f32 %v912, 0.003408291
      %v945 = vadd.f32 %v913, 0.003408291
      %v946 = vadd.f32 %v914, 0.003408291
      %v947 = vadd.f32 %v915, 0.003408291
      %v948 = vadd.f32 %v916, 0.003408291
      %v949 = vmul.f32 %v917, %v853
      %v950 = vmul.f32 %v918, %v854
      %v951 = vmul.f32 %v919, %v855
      %v952 = vmul.f32 %v920, %v856
      %v953 = vmul.f32 %v921, %v857
      %v954 = vmul.f32 %v922, %v858
      %v955 = vmul.f32 %v923, %v859
      %v956 = vmul.f32 %v924, %v860
      %v957 = vmul.f32 %v925, %v861
      %v958 = vmul.f32 %v926, %v862
      %v959 = vmul.f32 %v927, %v863
      %v960 = vmul.f32 %v928, %v864
      %v961 = vmul.f32 %v929, %v865
      %v962 = vmul.f32 %v930, %v866
      %v963 = vmul.f32 %v931, %v867
      %v964 = vmul.f32 %v932, %v868
      %v965 = vmul.f32 %v933, %v869
      %v966 = vmul.f32 %v934, %v870
      %v967 = vmul.f32 %v935, %v871
      %v968 = vmul.f32 %v936, %v872
      %v969 = vmul.f32 %v937, %v873
      %v970 = vmul.f32 %v938, %v874
      %v971 = vmul.f32 %v939, %v875
      %v972 = vmul.f32 %v940, %v876
      %v973 = vmul.f32 %v941, %v877
      %v974 = vmul.f32 %v942, %v878
      %v975 = vmul.f32 %v943, %v879
      %v976 = vmul.f32 %v944, %v880
      %v977 = vmul.f32 %v945, %v881
      %v978 = vmul.f32 %v946, %v882
      %v979 = vmul.f32 %v947, %v883
      %v980 = vmul.f32 %v948, %v884
      %v981 = vadd.f32 %v949, 0.050955694
      %v982 = vadd.f32 %v950, 0.050955694
      %v983 = vadd.f32 %v951, 0.050955694
      %v984 = vadd.f32 %v952, 0.050955694
      %v985 = vadd.f32 %v953, 0.050955694
      %v986 = vadd.f32 %v954, 0.050955694
      %v987 = vadd.f32 %v955, 0.050955694
      %v988 = vadd.f32 %v956, 0.050955694
      %v989 = vadd.f32 %v957, 0.050955694
      %v990 = vadd.f32 %v958, 0.050955694
      %v991 = vadd.f32 %v959, 0.050955694
      %v992 = vadd.f32 %v960, 0.050955694
      %v993 = vadd.f32 %v961, 0.050955694
      %v994 = vadd.f32 %v962, 0.050955694
      %v995 = vadd.f32 %v963, 0.050955694
      %v996 = vadd.f32 %v964, 0.050955694
      %v997 = vadd.f32 %v965, 0.050955694
      %v998 = vadd.f32 %v966, 0.050955694
      %v999 = vadd.f32 %v967, 0.050955694
      %v1000 = vadd.f32 %v968, 0.050955694
      %v1001 = vadd.f32 %v969, 0.050955694
      %v1002 = vadd.f32 %v970, 0.050955694
      %v1003 = vadd.f32 %v971, 0.050955694
      %v1004 = vadd.f32 %v972, 0.050955694
      %v1005 = vadd.f32 %v973, 0.050955694
      %v1006 = vadd.f32 %v974, 0.050955694
      %v1007 = vadd.f32 %v975, 0.050955694
      %v1008 = vadd.f32 %v976, 0.050955694
      %v1009 = vadd.f32 %v977, 0.050955694
      %v1010 = vadd.f32 %v978, 0.050955694
      %v1011 = vadd.f32 %v979, 0.050955694
      %v1012 = vadd.f32 %v980, 0.050955694
      %v1013 = vmul.f32 %v981, %v853
      %v1014 = vmul.f32 %v982, %v854
      %v1015 = vmul.f32 %v983, %v855
      %v1016 = vmul.f32 %v984, %v856
      %v1017 = vmul.f32 %v985, %v857
      %v1018 = vmul.f32 %v986, %v858
      %v1019 = vmul.f32 %v987, %v859
      %v1020 = vmul.f32 %v988, %v860
      %v1021 = vmul.f32 %v989, %v861
      %v1022 = vmul.f32 %v990, %v862
      %v1023 = vmul.f32 %v991, %v863
      %v1024 = vmul.f32 %v992, %v864
      %v1025 = vmul.f32 %v993, %v865
      %v1026 = vmul.f32 %v994, %v866
      %v1027 = vmul.f32 %v995, %v867
      %v1028 = vmul.f32 %v996, %v868
      %v1029 = vmul.f32 %v997, %v869
      %v1030 = vmul.f32 %v998, %v870
      %v1031 = vmul.f32 %v999, %v871
      %v1032 = vmul.f32 %v1000, %v872
      %v1033 = vmul.f32 %v1001, %v873
      %v1034 = vmul.f32 %v1002, %v874
      %v1035 = vmul.f32 %v1003, %v875
      %v1036 = vmul.f32 %v1004, %v876
      %v1037 = vmul.f32 %v1005, %v877
      %v1038 = vmul.f32 %v1006, %v878
      %v1039 = vmul.f32 %v1007, %v879
      %v1040 = vmul.f32 %v1008, %v880
      %v1041 = vmul.f32 %v1009, %v881
      %v1042 = vmul.f32 %v1010, %v882
      %v1043 = vmul.f32 %v1011, %v883
      %v1044 = vmul.f32 %v1012, %v884
      %v1045 = vadd.f32 %v1013, 0.18520832
      %v1046 = vadd.f32 %v1014, 0.18520832
      %v1047 = vadd.f32 %v1015, 0.18520832
      %v1048 = vadd.f32 %v1016, 0.18520832
      %v1049 = vadd.f32 %v1017, 0.18520832
      %v1050 = vadd.f32 %v1018, 0.18520832
      %v1051 = vadd.f32 %v1019, 0.18520832
      %v1052 = vadd.f32 %v1020, 0.18520832
      %v1053 = vadd.f32 %v1021, 0.18520832
      %v1054 = vadd.f32 %v1022, 0.18520832
      %v1055 = vadd.f32 %v1023, 0.18520832
      %v1056 = vadd.f32 %v1024, 0.18520832
      %v1057 = vadd.f32 %v1025, 0.18520832
      %v1058 = vadd.f32 %v1026, 0.18520832
      %v1059 = vadd.f32 %v1027, 0.18520832
      %v1060 = vadd.f32 %v1028, 0.18520832
      %v1061 = vadd.f32 %v1029, 0.18520832
      %v1062 = vadd.f32 %v1030, 0.18520832
      %v1063 = vadd.f32 %v1031, 0.18520832
      %v1064 = vadd.f32 %v1032, 0.18520832
      %v1065 = vadd.f32 %v1033, 0.18520832
      %v1066 = vadd.f32 %v1034, 0.18520832
      %v1067 = vadd.f32 %v1035, 0.18520832
      %v1068 = vadd.f32 %v1036, 0.18520832
      %v1069 = vadd.f32 %v1037, 0.18520832
      %v1070 = vadd.f32 %v1038, 0.18520832
      %v1071 = vadd.f32 %v1039, 0.18520832
      %v1072 = vadd.f32 %v1040, 0.18520832
      %v1073 = vadd.f32 %v1041, 0.18520832
      %v1074 = vadd.f32 %v1042, 0.18520832
      %v1075 = vadd.f32 %v1043, 0.18520832
      %v1076 = vadd.f32 %v1044, 0.18520832
      %v1077 = vmul.f32 %v1045, %v853
      %v1078 = vmul.f32 %v1046, %v854
      %v1079 = vmul.f32 %v1047, %v855
      %v1080 = vmul.f32 %v1048, %v856
      %v1081 = vmul.f32 %v1049, %v857
      %v1082 = vmul.f32 %v1050, %v858
      %v1083 = vmul.f32 %v1051, %v859
      %v1084 = vmul.f32 %v1052, %v860
      %v1085 = vmul.f32 %v1053, %v861
      %v1086 = vmul.f32 %v1054, %v862
      %v1087 = vmul.f32 %v1055, %v863
      %v1088 = vmul.f32 %v1056, %v864
      %v1089 = vmul.f32 %v1057, %v865
      %v1090 = vmul.f32 %v1058, %v866
      %v1091 = vmul.f32 %v1059, %v867
      %v1092 = vmul.f32 %v1060, %v868
      %v1093 = vmul.f32 %v1061, %v869
      %v1094 = vmul.f32 %v1062, %v870
      %v1095 = vmul.f32 %v1063, %v871
      %v1096 = vmul.f32 %v1064, %v872
      %v1097 = vmul.f32 %v1065, %v873
      %v1098 = vmul.f32 %v1066, %v874
      %v1099 = vmul.f32 %v1067, %v875
      %v1100 = vmul.f32 %v1068, %v876
      %v1101 = vmul.f32 %v1069, %v877
      %v1102 = vmul.f32 %v1070, %v878
      %v1103 = vmul.f32 %v1071, %v879
      %v1104 = vmul.f32 %v1072, %v880
      %v1105 = vmul.f32 %v1073, %v881
      %v1106 = vmul.f32 %v1074, %v882
      %v1107 = vmul.f32 %v1075, %v883
      %v1108 = vmul.f32 %v1076, %v884
      %v1109 = vadd.f32 %v1077, 1.1283791
      %v1110 = vadd.f32 %v1078, 1.1283791
      %v1111 = vadd.f32 %v1079, 1.1283791
      %v1112 = vadd.f32 %v1080, 1.1283791
      %v1113 = vadd.f32 %v1081, 1.1283791
      %v1114 = vadd.f32 %v1082, 1.1283791
      %v1115 = vadd.f32 %v1083, 1.1283791
      %v1116 = vadd.f32 %v1084, 1.1283791
      %v1117 = vadd.f32 %v1085, 1.1283791
      %v1118 = vadd.f32 %v1086, 1.1283791
      %v1119 = vadd.f32 %v1087, 1.1283791
      %v1120 = vadd.f32 %v1088, 1.1283791
      %v1121 = vadd.f32 %v1089, 1.1283791
      %v1122 = vadd.f32 %v1090, 1.1283791
      %v1123 = vadd.f32 %v1091, 1.1283791
      %v1124 = vadd.f32 %v1092, 1.1283791
      %v1125 = vadd.f32 %v1093, 1.1283791
      %v1126 = vadd.f32 %v1094, 1.1283791
      %v1127 = vadd.f32 %v1095, 1.1283791
      %v1128 = vadd.f32 %v1096, 1.1283791
      %v1129 = vadd.f32 %v1097, 1.1283791
      %v1130 = vadd.f32 %v1098, 1.1283791
      %v1131 = vadd.f32 %v1099, 1.1283791
      %v1132 = vadd.f32 %v1100, 1.1283791
      %v1133 = vadd.f32 %v1101, 1.1283791
      %v1134 = vadd.f32 %v1102, 1.1283791
      %v1135 = vadd.f32 %v1103, 1.1283791
      %v1136 = vadd.f32 %v1104, 1.1283791
      %v1137 = vadd.f32 %v1105, 1.1283791
      %v1138 = vadd.f32 %v1106, 1.1283791
      %v1139 = vadd.f32 %v1107, 1.1283791
      %v1140 = vadd.f32 %v1108, 1.1283791
      %v1141 = vmul.f32 %v853, -1.1791603e-07
      %v1142 = vmul.f32 %v854, -1.1791603e-07
      %v1143 = vmul.f32 %v855, -1.1791603e-07
      %v1144 = vmul.f32 %v856, -1.1791603e-07
      %v1145 = vmul.f32 %v857, -1.1791603e-07
      %v1146 = vmul.f32 %v858, -1.1791603e-07
      %v1147 = vmul.f32 %v859, -1.1791603e-07
      %v1148 = vmul.f32 %v860, -1.1791603e-07
      %v1149 = vmul.f32 %v861, -1.1791603e-07
      %v1150 = vmul.f32 %v862, -1.1791603e-07
      %v1151 = vmul.f32 %v863, -1.1791603e-07
      %v1152 = vmul.f32 %v864, -1.1791603e-07
      %v1153 = vmul.f32 %v865, -1.1791603e-07
      %v1154 = vmul.f32 %v866, -1.1791603e-07
      %v1155 = vmul.f32 %v867, -1.1791603e-07
      %v1156 = vmul.f32 %v868, -1.1791603e-07
      %v1157 = vmul.f32 %v869, -1.1791603e-07
      %v1158 = vmul.f32 %v870, -1.1791603e-07
      %v1159 = vmul.f32 %v871, -1.1791603e-07
      %v1160 = vmul.f32 %v872, -1.1791603e-07
      %v1161 = vmul.f32 %v873, -1.1791603e-07
      %v1162 = vmul.f32 %v874, -1.1791603e-07
      %v1163 = vmul.f32 %v875, -1.1791603e-07
      %v1164 = vmul.f32 %v876, -1.1791603e-07
      %v1165 = vmul.f32 %v877, -1.1791603e-07
      %v1166 = vmul.f32 %v878, -1.1791603e-07
      %v1167 = vmul.f32 %v879, -1.1791603e-07
      %v1168 = vmul.f32 %v880, -1.1791603e-07
      %v1169 = vmul.f32 %v881, -1.1791603e-07
      %v1170 = vmul.f32 %v882, -1.1791603e-07
      %v1171 = vmul.f32 %v883, -1.1791603e-07
      %v1172 = vmul.f32 %v884, -1.1791603e-07
      %v1173 = vadd.f32 %v1141, 2.3547966e-05
      %v1174 = vadd.f32 %v1142, 2.3547966e-05
      %v1175 = vadd.f32 %v1143, 2.3547966e-05
      %v1176 = vadd.f32 %v1144, 2.3547966e-05
      %v1177 = vadd.f32 %v1145, 2.3547966e-05
      %v1178 = vadd.f32 %v1146, 2.3547966e-05
      %v1179 = vadd.f32 %v1147, 2.3547966e-05
      %v1180 = vadd.f32 %v1148, 2.3547966e-05
      %v1181 = vadd.f32 %v1149, 2.3547966e-05
      %v1182 = vadd.f32 %v1150, 2.3547966e-05
      %v1183 = vadd.f32 %v1151, 2.3547966e-05
      %v1184 = vadd.f32 %v1152, 2.3547966e-05
      %v1185 = vadd.f32 %v1153, 2.3547966e-05
      %v1186 = vadd.f32 %v1154, 2.3547966e-05
      %v1187 = vadd.f32 %v1155, 2.3547966e-05
      %v1188 = vadd.f32 %v1156, 2.3547966e-05
      %v1189 = vadd.f32 %v1157, 2.3547966e-05
      %v1190 = vadd.f32 %v1158, 2.3547966e-05
      %v1191 = vadd.f32 %v1159, 2.3547966e-05
      %v1192 = vadd.f32 %v1160, 2.3547966e-05
      %v1193 = vadd.f32 %v1161, 2.3547966e-05
      %v1194 = vadd.f32 %v1162, 2.3547966e-05
      %v1195 = vadd.f32 %v1163, 2.3547966e-05
      %v1196 = vadd.f32 %v1164, 2.3547966e-05
      %v1197 = vadd.f32 %v1165, 2.3547966e-05
      %v1198 = vadd.f32 %v1166, 2.3547966e-05
      %v1199 = vadd.f32 %v1167, 2.3547966e-05
      %v1200 = vadd.f32 %v1168, 2.3547966e-05
      %v1201 = vadd.f32 %v1169, 2.3547966e-05
      %v1202 = vadd.f32 %v1170, 2.3547966e-05
      %v1203 = vadd.f32 %v1171, 2.3547966e-05
      %v1204 = vadd.f32 %v1172, 2.3547966e-05
      %v1205 = vmul.f32 %v1173, %v853
      %v1206 = vmul.f32 %v1174, %v854
      %v1207 = vmul.f32 %v1175, %v855
      %v1208 = vmul.f32 %v1176, %v856
      %v1209 = vmul.f32 %v1177, %v857
      %v1210 = vmul.f32 %v1178, %v858
      %v1211 = vmul.f32 %v1179, %v859
      %v1212 = vmul.f32 %v1180, %v860
      %v1213 = vmul.f32 %v1181, %v861
      %v1214 = vmul.f32 %v1182, %v862
      %v1215 = vmul.f32 %v1183, %v863
      %v1216 = vmul.f32 %v1184, %v864
      %v1217 = vmul.f32 %v1185, %v865
      %v1218 = vmul.f32 %v1186, %v866
      %v1219 = vmul.f32 %v1187, %v867
      %v1220 = vmul.f32 %v1188, %v868
      %v1221 = vmul.f32 %v1189, %v869
      %v1222 = vmul.f32 %v1190, %v870
      %v1223 = vmul.f32 %v1191, %v871
      %v1224 = vmul.f32 %v1192, %v872
      %v1225 = vmul.f32 %v1193, %v873
      %v1226 = vmul.f32 %v1194, %v874
      %v1227 = vmul.f32 %v1195, %v875
      %v1228 = vmul.f32 %v1196, %v876
      %v1229 = vmul.f32 %v1197, %v877
      %v1230 = vmul.f32 %v1198, %v878
      %v1231 = vmul.f32 %v1199, %v879
      %v1232 = vmul.f32 %v1200, %v880
      %v1233 = vmul.f32 %v1201, %v881
      %v1234 = vmul.f32 %v1202, %v882
      %v1235 = vmul.f32 %v1203, %v883
      %v1236 = vmul.f32 %v1204, %v884
      %v1237 = vadd.f32 %v1205, 0.0010179626
      %v1238 = vadd.f32 %v1206, 0.0010179626
      %v1239 = vadd.f32 %v1207, 0.0010179626
      %v1240 = vadd.f32 %v1208, 0.0010179626
      %v1241 = vadd.f32 %v1209, 0.0010179626
      %v1242 = vadd.f32 %v1210, 0.0010179626
      %v1243 = vadd.f32 %v1211, 0.0010179626
      %v1244 = vadd.f32 %v1212, 0.0010179626
      %v1245 = vadd.f32 %v1213, 0.0010179626
      %v1246 = vadd.f32 %v1214, 0.0010179626
      %v1247 = vadd.f32 %v1215, 0.0010179626
      %v1248 = vadd.f32 %v1216, 0.0010179626
      %v1249 = vadd.f32 %v1217, 0.0010179626
      %v1250 = vadd.f32 %v1218, 0.0010179626
      %v1251 = vadd.f32 %v1219, 0.0010179626
      %v1252 = vadd.f32 %v1220, 0.0010179626
      %v1253 = vadd.f32 %v1221, 0.0010179626
      %v1254 = vadd.f32 %v1222, 0.0010179626
      %v1255 = vadd.f32 %v1223, 0.0010179626
      %v1256 = vadd.f32 %v1224, 0.0010179626
      %v1257 = vadd.f32 %v1225, 0.0010179626
      %v1258 = vadd.f32 %v1226, 0.0010179626
      %v1259 = vadd.f32 %v1227, 0.0010179626
      %v1260 = vadd.f32 %v1228, 0.0010179626
      %v1261 = vadd.f32 %v1229, 0.0010179626
      %v1262 = vadd.f32 %v1230, 0.0010179626
      %v1263 = vadd.f32 %v1231, 0.0010179626
      %v1264 = vadd.f32 %v1232, 0.0010179626
      %v1265 = vadd.f32 %v1233, 0.0010179626
      %v1266 = vadd.f32 %v1234, 0.0010179626
      %v1267 = vadd.f32 %v1235, 0.0010179626
      %v1268 = vadd.f32 %v1236, 0.0010179626
      %v1269 = vmul.f32 %v1237, %v853
      %v1270 = vmul.f32 %v1238, %v854
      %v1271 = vmul.f32 %v1239, %v855
      %v1272 = vmul.f32 %v1240, %v856
      %v1273 = vmul.f32 %v1241, %v857
      %v1274 = vmul.f32 %v1242, %v858
      %v1275 = vmul.f32 %v1243, %v859
      %v1276 = vmul.f32 %v1244, %v860
      %v1277 = vmul.f32 %v1245, %v861
      %v1278 = vmul.f32 %v1246, %v862
      %v1279 = vmul.f32 %v1247, %v863
      %v1280 = vmul.f32 %v1248, %v864
      %v1281 = vmul.f32 %v1249, %v865
      %v1282 = vmul.f32 %v1250, %v866
      %v1283 = vmul.f32 %v1251, %v867
      %v1284 = vmul.f32 %v1252, %v868
      %v1285 = vmul.f32 %v1253, %v869
      %v1286 = vmul.f32 %v1254, %v870
      %v1287 = vmul.f32 %v1255, %v871
      %v1288 = vmul.f32 %v1256, %v872
      %v1289 = vmul.f32 %v1257, %v873
      %v1290 = vmul.f32 %v1258, %v874
      %v1291 = vmul.f32 %v1259, %v875
      %v1292 = vmul.f32 %v1260, %v876
      %v1293 = vmul.f32 %v1261, %v877
      %v1294 = vmul.f32 %v1262, %v878
      %v1295 = vmul.f32 %v1263, %v879
      %v1296 = vmul.f32 %v1264, %v880
      %v1297 = vmul.f32 %v1265, %v881
      %v1298 = vmul.f32 %v1266, %v882
      %v1299 = vmul.f32 %v1267, %v883
      %v1300 = vmul.f32 %v1268, %v884
      %v1301 = vadd.f32 %v1269, 0.01407047
      %v1302 = vadd.f32 %v1270, 0.01407047
      %v1303 = vadd.f32 %v1271, 0.01407047
      %v1304 = vadd.f32 %v1272, 0.01407047
      %v1305 = vadd.f32 %v1273, 0.01407047
      %v1306 = vadd.f32 %v1274, 0.01407047
      %v1307 = vadd.f32 %v1275, 0.01407047
      %v1308 = vadd.f32 %v1276, 0.01407047
      %v1309 = vadd.f32 %v1277, 0.01407047
      %v1310 = vadd.f32 %v1278, 0.01407047
      %v1311 = vadd.f32 %v1279, 0.01407047
      %v1312 = vadd.f32 %v1280, 0.01407047
      %v1313 = vadd.f32 %v1281, 0.01407047
      %v1314 = vadd.f32 %v1282, 0.01407047
      %v1315 = vadd.f32 %v1283, 0.01407047
      %v1316 = vadd.f32 %v1284, 0.01407047
      %v1317 = vadd.f32 %v1285, 0.01407047
      %v1318 = vadd.f32 %v1286, 0.01407047
      %v1319 = vadd.f32 %v1287, 0.01407047
      %v1320 = vadd.f32 %v1288, 0.01407047
      %v1321 = vadd.f32 %v1289, 0.01407047
      %v1322 = vadd.f32 %v1290, 0.01407047
      %v1323 = vadd.f32 %v1291, 0.01407047
      %v1324 = vadd.f32 %v1292, 0.01407047
      %v1325 = vadd.f32 %v1293, 0.01407047
      %v1326 = vadd.f32 %v1294, 0.01407047
      %v1327 = vadd.f32 %v1295, 0.01407047
      %v1328 = vadd.f32 %v1296, 0.01407047
      %v1329 = vadd.f32 %v1297, 0.01407047
      %v1330 = vadd.f32 %v1298, 0.01407047
      %v1331 = vadd.f32 %v1299, 0.01407047
      %v1332 = vadd.f32 %v1300, 0.01407047
      %v1333 = vmul.f32 %v1301, %v853
      %v1334 = vmul.f32 %v1302, %v854
      %v1335 = vmul.f32 %v1303, %v855
      %v1336 = vmul.f32 %v1304, %v856
      %v1337 = vmul.f32 %v1305, %v857
      %v1338 = vmul.f32 %v1306, %v858
      %v1339 = vmul.f32 %v1307, %v859
      %v1340 = vmul.f32 %v1308, %v860
      %v1341 = vmul.f32 %v1309, %v861
      %v1342 = vmul.f32 %v1310, %v862
      %v1343 = vmul.f32 %v1311, %v863
      %v1344 = vmul.f32 %v1312, %v864
      %v1345 = vmul.f32 %v1313, %v865
      %v1346 = vmul.f32 %v1314, %v866
      %v1347 = vmul.f32 %v1315, %v867
      %v1348 = vmul.f32 %v1316, %v868
      %v1349 = vmul.f32 %v1317, %v869
      %v1350 = vmul.f32 %v1318, %v870
      %v1351 = vmul.f32 %v1319, %v871
      %v1352 = vmul.f32 %v1320, %v872
      %v1353 = vmul.f32 %v1321, %v873
      %v1354 = vmul.f32 %v1322, %v874
      %v1355 = vmul.f32 %v1323, %v875
      %v1356 = vmul.f32 %v1324, %v876
      %v1357 = vmul.f32 %v1325, %v877
      %v1358 = vmul.f32 %v1326, %v878
      %v1359 = vmul.f32 %v1327, %v879
      %v1360 = vmul.f32 %v1328, %v880
      %v1361 = vmul.f32 %v1329, %v881
      %v1362 = vmul.f32 %v1330, %v882
      %v1363 = vmul.f32 %v1331, %v883
      %v1364 = vmul.f32 %v1332, %v884
      %v1365 = vadd.f32 %v1333, 0.11098505
      %v1366 = vadd.f32 %v1334, 0.11098505
      %v1367 = vadd.f32 %v1335, 0.11098505
      %v1368 = vadd.f32 %v1336, 0.11098505
      %v1369 = vadd.f32 %v1337, 0.11098505
      %v1370 = vadd.f32 %v1338, 0.11098505
      %v1371 = vadd.f32 %v1339, 0.11098505
      %v1372 = vadd.f32 %v1340, 0.11098505
      %v1373 = vadd.f32 %v1341, 0.11098505
      %v1374 = vadd.f32 %v1342, 0.11098505
      %v1375 = vadd.f32 %v1343, 0.11098505
      %v1376 = vadd.f32 %v1344, 0.11098505
      %v1377 = vadd.f32 %v1345, 0.11098505
      %v1378 = vadd.f32 %v1346, 0.11098505
      %v1379 = vadd.f32 %v1347, 0.11098505
      %v1380 = vadd.f32 %v1348, 0.11098505
      %v1381 = vadd.f32 %v1349, 0.11098505
      %v1382 = vadd.f32 %v1350, 0.11098505
      %v1383 = vadd.f32 %v1351, 0.11098505
      %v1384 = vadd.f32 %v1352, 0.11098505
      %v1385 = vadd.f32 %v1353, 0.11098505
      %v1386 = vadd.f32 %v1354, 0.11098505
      %v1387 = vadd.f32 %v1355, 0.11098505
      %v1388 = vadd.f32 %v1356, 0.11098505
      %v1389 = vadd.f32 %v1357, 0.11098505
      %v1390 = vadd.f32 %v1358, 0.11098505
      %v1391 = vadd.f32 %v1359, 0.11098505
      %v1392 = vadd.f32 %v1360, 0.11098505
      %v1393 = vadd.f32 %v1361, 0.11098505
      %v1394 = vadd.f32 %v1362, 0.11098505
      %v1395 = vadd.f32 %v1363, 0.11098505
      %v1396 = vadd.f32 %v1364, 0.11098505
      %v1397 = vmul.f32 %v1365, %v853
      %v1398 = vmul.f32 %v1366, %v854
      %v1399 = vmul.f32 %v1367, %v855
      %v1400 = vmul.f32 %v1368, %v856
      %v1401 = vmul.f32 %v1369, %v857
      %v1402 = vmul.f32 %v1370, %v858
      %v1403 = vmul.f32 %v1371, %v859
      %v1404 = vmul.f32 %v1372, %v860
      %v1405 = vmul.f32 %v1373, %v861
      %v1406 = vmul.f32 %v1374, %v862
      %v1407 = vmul.f32 %v1375, %v863
      %v1408 = vmul.f32 %v1376, %v864
      %v1409 = vmul.f32 %v1377, %v865
      %v1410 = vmul.f32 %v1378, %v866
      %v1411 = vmul.f32 %v1379, %v867
      %v1412 = vmul.f32 %v1380, %v868
      %v1413 = vmul.f32 %v1381, %v869
      %v1414 = vmul.f32 %v1382, %v870
      %v1415 = vmul.f32 %v1383, %v871
      %v1416 = vmul.f32 %v1384, %v872
      %v1417 = vmul.f32 %v1385, %v873
      %v1418 = vmul.f32 %v1386, %v874
      %v1419 = vmul.f32 %v1387, %v875
      %v1420 = vmul.f32 %v1388, %v876
      %v1421 = vmul.f32 %v1389, %v877
      %v1422 = vmul.f32 %v1390, %v878
      %v1423 = vmul.f32 %v1391, %v879
      %v1424 = vmul.f32 %v1392, %v880
      %v1425 = vmul.f32 %v1393, %v881
      %v1426 = vmul.f32 %v1394, %v882
      %v1427 = vmul.f32 %v1395, %v883
      %v1428 = vmul.f32 %v1396, %v884
      %v1429 = vadd.f32 %v1397, 0.49746925
      %v1430 = vadd.f32 %v1398, 0.49746925
      %v1431 = vadd.f32 %v1399, 0.49746925
      %v1432 = vadd.f32 %v1400, 0.49746925
      %v1433 = vadd.f32 %v1401, 0.49746925
      %v1434 = vadd.f32 %v1402, 0.49746925
      %v1435 = vadd.f32 %v1403, 0.49746925
      %v1436 = vadd.f32 %v1404, 0.49746925
      %v1437 = vadd.f32 %v1405, 0.49746925
      %v1438 = vadd.f32 %v1406, 0.49746925
      %v1439 = vadd.f32 %v1407, 0.49746925
      %v1440 = vadd.f32 %v1408, 0.49746925
      %v1441 = vadd.f32 %v1409, 0.49746925
      %v1442 = vadd.f32 %v1410, 0.49746925
      %v1443 = vadd.f32 %v1411, 0.49746925
      %v1444 = vadd.f32 %v1412, 0.49746925
      %v1445 = vadd.f32 %v1413, 0.49746925
      %v1446 = vadd.f32 %v1414, 0.49746925
      %v1447 = vadd.f32 %v1415, 0.49746925
      %v1448 = vadd.f32 %v1416, 0.49746925
      %v1449 = vadd.f32 %v1417, 0.49746925
      %v1450 = vadd.f32 %v1418, 0.49746925
      %v1451 = vadd.f32 %v1419, 0.49746925
      %v1452 = vadd.f32 %v1420, 0.49746925
      %v1453 = vadd.f32 %v1421, 0.49746925
      %v1454 = vadd.f32 %v1422, 0.49746925
      %v1455 = vadd.f32 %v1423, 0.49746925
      %v1456 = vadd.f32 %v1424, 0.49746925
      %v1457 = vadd.f32 %v1425, 0.49746925
      %v1458 = vadd.f32 %v1426, 0.49746925
      %v1459 = vadd.f32 %v1427, 0.49746925
      %v1460 = vadd.f32 %v1428, 0.49746925
      %v1461 = vmul.f32 %v1429, %v853
      %v1462 = vmul.f32 %v1430, %v854
      %v1463 = vmul.f32 %v1431, %v855
      %v1464 = vmul.f32 %v1432, %v856
      %v1465 = vmul.f32 %v1433, %v857
      %v1466 = vmul.f32 %v1434, %v858
      %v1467 = vmul.f32 %v1435, %v859
      %v1468 = vmul.f32 %v1436, %v860
      %v1469 = vmul.f32 %v1437, %v861
      %v1470 = vmul.f32 %v1438, %v862
      %v1471 = vmul.f32 %v1439, %v863
      %v1472 = vmul.f32 %v1440, %v864
      %v1473 = vmul.f32 %v1441, %v865
      %v1474 = vmul.f32 %v1442, %v866
      %v1475 = vmul.f32 %v1443, %v867
      %v1476 = vmul.f32 %v1444, %v868
      %v1477 = vmul.f32 %v1445, %v869
      %v1478 = vmul.f32 %v1446, %v870
      %v1479 = vmul.f32 %v1447, %v871
      %v1480 = vmul.f32 %v1448, %v872
      %v1481 = vmul.f32 %v1449, %v873
      %v1482 = vmul.f32 %v1450, %v874
      %v1483 = vmul.f32 %v1451, %v875
      %v1484 = vmul.f32 %v1452, %v876
      %v1485 = vmul.f32 %v1453, %v877
      %v1486 = vmul.f32 %v1454, %v878
      %v1487 = vmul.f32 %v1455, %v879
      %v1488 = vmul.f32 %v1456, %v880
      %v1489 = vmul.f32 %v1457, %v881
      %v1490 = vmul.f32 %v1458, %v882
      %v1491 = vmul.f32 %v1459, %v883
      %v1492 = vmul.f32 %v1460, %v884
      %v1493 = vadd.f32 %v1461, 1.0
      %v1494 = vadd.f32 %v1462, 1.0
      %v1495 = vadd.f32 %v1463, 1.0
      %v1496 = vadd.f32 %v1464, 1.0
      %v1497 = vadd.f32 %v1465, 1.0
      %v1498 = vadd.f32 %v1466, 1.0
      %v1499 = vadd.f32 %v1467, 1.0
      %v1500 = vadd.f32 %v1468, 1.0
      %v1501 = vadd.f32 %v1469, 1.0
      %v1502 = vadd.f32 %v1470, 1.0
      %v1503 = vadd.f32 %v1471, 1.0
      %v1504 = vadd.f32 %v1472, 1.0
      %v1505 = vadd.f32 %v1473, 1.0
      %v1506 = vadd.f32 %v1474, 1.0
      %v1507 = vadd.f32 %v1475, 1.0
      %v1508 = vadd.f32 %v1476, 1.0
      %v1509 = vadd.f32 %v1477, 1.0
      %v1510 = vadd.f32 %v1478, 1.0
      %v1511 = vadd.f32 %v1479, 1.0
      %v1512 = vadd.f32 %v1480, 1.0
      %v1513 = vadd.f32 %v1481, 1.0
      %v1514 = vadd.f32 %v1482, 1.0
      %v1515 = vadd.f32 %v1483, 1.0
      %v1516 = vadd.f32 %v1484, 1.0
      %v1517 = vadd.f32 %v1485, 1.0
      %v1518 = vadd.f32 %v1486, 1.0
      %v1519 = vadd.f32 %v1487, 1.0
      %v1520 = vadd.f32 %v1488, 1.0
      %v1521 = vadd.f32 %v1489, 1.0
      %v1522 = vadd.f32 %v1490, 1.0
      %v1523 = vadd.f32 %v1491, 1.0
      %v1524 = vadd.f32 %v1492, 1.0
      %v1525 = vmul.f32 %v821, %v1109
      %v1526 = vmul.f32 %v822, %v1110
      %v1527 = vmul.f32 %v823, %v1111
      %v1528 = vmul.f32 %v824, %v1112
      %v1529 = vmul.f32 %v825, %v1113
      %v1530 = vmul.f32 %v826, %v1114
      %v1531 = vmul.f32 %v827, %v1115
      %v1532 = vmul.f32 %v828, %v1116
      %v1533 = vmul.f32 %v829, %v1117
      %v1534 = vmul.f32 %v830, %v1118
      %v1535 = vmul.f32 %v831, %v1119
      %v1536 = vmul.f32 %v832, %v1120
      %v1537 = vmul.f32 %v833, %v1121
      %v1538 = vmul.f32 %v834, %v1122
      %v1539 = vmul.f32 %v835, %v1123
      %v1540 = vmul.f32 %v836, %v1124
      %v1541 = vmul.f32 %v837, %v1125
      %v1542 = vmul.f32 %v838, %v1126
      %v1543 = vmul.f32 %v839, %v1127
      %v1544 = vmul.f32 %v840, %v1128
      %v1545 = vmul.f32 %v841, %v1129
      %v1546 = vmul.f32 %v842, %v1130
      %v1547 = vmul.f32 %v843, %v1131
      %v1548 = vmul.f32 %v844, %v1132
      %v1549 = vmul.f32 %v845, %v1133
      %v1550 = vmul.f32 %v846, %v1134
      %v1551 = vmul.f32 %v847, %v1135
      %v1552 = vmul.f32 %v848, %v1136
      %v1553 = vmul.f32 %v849, %v1137
      %v1554 = vmul.f32 %v850, %v1138
      %v1555 = vmul.f32 %v851, %v1139
      %v1556 = vmul.f32 %v852, %v1140
      %v1557 = vrcp.pop %v1493
      %v1558 = vmul.f32 %v1493, %v1557
      %v1559 = vsub.f32 1.0, %v1558
      %v1560 = vmul.f32 %v1557, %v1559
      %v1561 = vadd.f32 %v1557, %v1560
      %vm1562 = vweird.f32 %v1493
      %vm1563 = vweird.f32 %v1557
      %vm1564 = vmor %vm1562, %vm1563
      %v1565 = vsel %vm1564, %v1557, %v1561
      %v1566 = vand.u32 2147483647, %v1493
      %vm1567 = vcmp.eq.f32.partialorder %v1566, 8.507059e+37
      %v1568 = vand.u32 %v1493, 2147483648
      %v1569 = vor.u32 1.1754944e-38, %v1568
      %v1570 = vsel %vm1567, %v1569, %v1565
      %v1571 = vrcp.pop %v1494
      %v1572 = vmul.f32 %v1494, %v1571
      %v1573 = vsub.f32 1.0, %v1572
      %v1574 = vmul.f32 %v1571, %v1573
      %v1575 = vadd.f32 %v1571, %v1574
      %vm1576 = vweird.f32 %v1494
      %vm1577 = vweird.f32 %v1571
      %vm1578 = vmor %vm1576, %vm1577
      %v1579 = vsel %vm1578, %v1571, %v1575
      %v1580 = vand.u32 2147483647, %v1494
      %vm1581 = vcmp.eq.f32.partialorder %v1580, 8.507059e+37
      %v1582 = vand.u32 %v1494, 2147483648
      %v1583 = vor.u32 1.1754944e-38, %v1582
      %v1584 = vsel %vm1581, %v1583, %v1579
      %v1585 = vrcp.pop %v1495
      %v1586 = vmul.f32 %v1495, %v1585
      %v1587 = vsub.f32 1.0, %v1586
      %v1588 = vmul.f32 %v1585, %v1587
      %v1589 = vadd.f32 %v1585, %v1588
      %vm1590 = vweird.f32 %v1495
      %vm1591 = vweird.f32 %v1585
      %vm1592 = vmor %vm1590, %vm1591
      %v1593 = vsel %vm1592, %v1585, %v1589
      %v1594 = vand.u32 2147483647, %v1495
      %vm1595 = vcmp.eq.f32.partialorder %v1594, 8.507059e+37
      %v1596 = vand.u32 %v1495, 2147483648
      %v1597 = vor.u32 1.1754944e-38, %v1596
      %v1598 = vsel %vm1595, %v1597, %v1593
      %v1599 = vrcp.pop %v1496
      %v1600 = vmul.f32 %v1496, %v1599
      %v1601 = vsub.f32 1.0, %v1600
      %v1602 = vmul.f32 %v1599, %v1601
      %v1603 = vadd.f32 %v1599, %v1602
      %vm1604 = vweird.f32 %v1496
      %vm1605 = vweird.f32 %v1599
      %vm1606 = vmor %vm1604, %vm1605
      %v1607 = vsel %vm1606, %v1599, %v1603
      %v1608 = vand.u32 2147483647, %v1496
      %vm1609 = vcmp.eq.f32.partialorder %v1608, 8.507059e+37
      %v1610 = vand.u32 %v1496, 2147483648
      %v1611 = vor.u32 1.1754944e-38, %v1610
      %v1612 = vsel %vm1609, %v1611, %v1607
      %v1613 = vrcp.pop %v1497
      %v1614 = vmul.f32 %v1497, %v1613
      %v1615 = vsub.f32 1.0, %v1614
      %v1616 = vmul.f32 %v1613, %v1615
      %v1617 = vadd.f32 %v1613, %v1616
      %vm1618 = vweird.f32 %v1497
      %vm1619 = vweird.f32 %v1613
      %vm1620 = vmor %vm1618, %vm1619
      %v1621 = vsel %vm1620, %v1613, %v1617
      %v1622 = vand.u32 2147483647, %v1497
      %vm1623 = vcmp.eq.f32.partialorder %v1622, 8.507059e+37
      %v1624 = vand.u32 %v1497, 2147483648
      %v1625 = vor.u32 1.1754944e-38, %v1624
      %v1626 = vsel %vm1623, %v1625, %v1621
      %v1627 = vrcp.pop %v1498
      %v1628 = vmul.f32 %v1498, %v1627
      %v1629 = vsub.f32 1.0, %v1628
      %v1630 = vmul.f32 %v1627, %v1629
      %v1631 = vadd.f32 %v1627, %v1630
      %vm1632 = vweird.f32 %v1498
      %vm1633 = vweird.f32 %v1627
      %vm1634 = vmor %vm1632, %vm1633
      %v1635 = vsel %vm1634, %v1627, %v1631
      %v1636 = vand.u32 2147483647, %v1498
      %vm1637 = vcmp.eq.f32.partialorder %v1636, 8.507059e+37
      %v1638 = vand.u32 %v1498, 2147483648
      %v1639 = vor.u32 1.1754944e-38, %v1638
      %v1640 = vsel %vm1637, %v1639, %v1635
      %v1641 = vrcp.pop %v1499
      %v1642 = vmul.f32 %v1499, %v1641
      %v1643 = vsub.f32 1.0, %v1642
      %v1644 = vmul.f32 %v1641, %v1643
      %v1645 = vadd.f32 %v1641, %v1644
      %vm1646 = vweird.f32 %v1499
      %vm1647 = vweird.f32 %v1641
      %vm1648 = vmor %vm1646, %vm1647
      %v1649 = vsel %vm1648, %v1641, %v1645
      %v1650 = vand.u32 2147483647, %v1499
      %vm1651 = vcmp.eq.f32.partialorder %v1650, 8.507059e+37
      %v1652 = vand.u32 %v1499, 2147483648
      %v1653 = vor.u32 1.1754944e-38, %v1652
      %v1654 = vsel %vm1651, %v1653, %v1649
      %v1655 = vrcp.pop %v1500
      %v1656 = vmul.f32 %v1500, %v1655
      %v1657 = vsub.f32 1.0, %v1656
      %v1658 = vmul.f32 %v1655, %v1657
      %v1659 = vadd.f32 %v1655, %v1658
      %vm1660 = vweird.f32 %v1500
      %vm1661 = vweird.f32 %v1655
      %vm1662 = vmor %vm1660, %vm1661
      %v1663 = vsel %vm1662, %v1655, %v1659
      %v1664 = vand.u32 2147483647, %v1500
      %vm1665 = vcmp.eq.f32.partialorder %v1664, 8.507059e+37
      %v1666 = vand.u32 %v1500, 2147483648
      %v1667 = vor.u32 1.1754944e-38, %v1666
      %v1668 = vsel %vm1665, %v1667, %v1663
      %v1669 = vrcp.pop %v1501
      %v1670 = vmul.f32 %v1501, %v1669
      %v1671 = vsub.f32 1.0, %v1670
      %v1672 = vmul.f32 %v1669, %v1671
      %v1673 = vadd.f32 %v1669, %v1672
      %vm1674 = vweird.f32 %v1501
      %vm1675 = vweird.f32 %v1669
      %vm1676 = vmor %vm1674, %vm1675
      %v1677 = vsel %vm1676, %v1669, %v1673
      %v1678 = vand.u32 2147483647, %v1501
      %vm1679 = vcmp.eq.f32.partialorder %v1678, 8.507059e+37
      %v1680 = vand.u32 %v1501, 2147483648
      %v1681 = vor.u32 1.1754944e-38, %v1680
      %v1682 = vsel %vm1679, %v1681, %v1677
      %v1683 = vrcp.pop %v1502
      %v1684 = vmul.f32 %v1502, %v1683
      %v1685 = vsub.f32 1.0, %v1684
      %v1686 = vmul.f32 %v1683, %v1685
      %v1687 = vadd.f32 %v1683, %v1686
      %vm1688 = vweird.f32 %v1502
      %vm1689 = vweird.f32 %v1683
      %vm1690 = vmor %vm1688, %vm1689
      %v1691 = vsel %vm1690, %v1683, %v1687
      %v1692 = vand.u32 2147483647, %v1502
      %vm1693 = vcmp.eq.f32.partialorder %v1692, 8.507059e+37
      %v1694 = vand.u32 %v1502, 2147483648
      %v1695 = vor.u32 1.1754944e-38, %v1694
      %v1696 = vsel %vm1693, %v1695, %v1691
      %v1697 = vrcp.pop %v1503
      %v1698 = vmul.f32 %v1503, %v1697
      %v1699 = vsub.f32 1.0, %v1698
      %v1700 = vmul.f32 %v1697, %v1699
      %v1701 = vadd.f32 %v1697, %v1700
      %vm1702 = vweird.f32 %v1503
      %vm1703 = vweird.f32 %v1697
      %vm1704 = vmor %vm1702, %vm1703
      %v1705 = vsel %vm1704, %v1697, %v1701
      %v1706 = vand.u32 2147483647, %v1503
      %vm1707 = vcmp.eq.f32.partialorder %v1706, 8.507059e+37
      %v1708 = vand.u32 %v1503, 2147483648
      %v1709 = vor.u32 1.1754944e-38, %v1708
      %v1710 = vsel %vm1707, %v1709, %v1705
      %v1711 = vrcp.pop %v1504
      %v1712 = vmul.f32 %v1504, %v1711
      %v1713 = vsub.f32 1.0, %v1712
      %v1714 = vmul.f32 %v1711, %v1713
      %v1715 = vadd.f32 %v1711, %v1714
      %vm1716 = vweird.f32 %v1504
      %vm1717 = vweird.f32 %v1711
      %vm1718 = vmor %vm1716, %vm1717
      %v1719 = vsel %vm1718, %v1711, %v1715
      %v1720 = vand.u32 2147483647, %v1504
      %vm1721 = vcmp.eq.f32.partialorder %v1720, 8.507059e+37
      %v1722 = vand.u32 %v1504, 2147483648
      %v1723 = vor.u32 1.1754944e-38, %v1722
      %v1724 = vsel %vm1721, %v1723, %v1719
      %v1725 = vrcp.pop %v1505
      %v1726 = vmul.f32 %v1505, %v1725
      %v1727 = vsub.f32 1.0, %v1726
      %v1728 = vmul.f32 %v1725, %v1727
      %v1729 = vadd.f32 %v1725, %v1728
      %vm1730 = vweird.f32 %v1505
      %vm1731 = vweird.f32 %v1725
      %vm1732 = vmor %vm1730, %vm1731
      %v1733 = vsel %vm1732, %v1725, %v1729
      %v1734 = vand.u32 2147483647, %v1505
      %vm1735 = vcmp.eq.f32.partialorder %v1734, 8.507059e+37
      %v1736 = vand.u32 %v1505, 2147483648
      %v1737 = vor.u32 1.1754944e-38, %v1736
      %v1738 = vsel %vm1735, %v1737, %v1733
      %v1739 = vrcp.pop %v1506
      %v1740 = vmul.f32 %v1506, %v1739
      %v1741 = vsub.f32 1.0, %v1740
      %v1742 = vmul.f32 %v1739, %v1741
      %v1743 = vadd.f32 %v1739, %v1742
      %vm1744 = vweird.f32 %v1506
      %vm1745 = vweird.f32 %v1739
      %vm1746 = vmor %vm1744, %vm1745
      %v1747 = vsel %vm1746, %v1739, %v1743
      %v1748 = vand.u32 2147483647, %v1506
      %vm1749 = vcmp.eq.f32.partialorder %v1748, 8.507059e+37
      %v1750 = vand.u32 %v1506, 2147483648
      %v1751 = vor.u32 1.1754944e-38, %v1750
      %v1752 = vsel %vm1749, %v1751, %v1747
      %v1753 = vrcp.pop %v1507
      %v1754 = vmul.f32 %v1507, %v1753
      %v1755 = vsub.f32 1.0, %v1754
      %v1756 = vmul.f32 %v1753, %v1755
      %v1757 = vadd.f32 %v1753, %v1756
      %vm1758 = vweird.f32 %v1507
      %vm1759 = vweird.f32 %v1753
      %vm1760 = vmor %vm1758, %vm1759
      %v1761 = vsel %vm1760, %v1753, %v1757
      %v1762 = vand.u32 2147483647, %v1507
      %vm1763 = vcmp.eq.f32.partialorder %v1762, 8.507059e+37
      %v1764 = vand.u32 %v1507, 2147483648
      %v1765 = vor.u32 1.1754944e-38, %v1764
      %v1766 = vsel %vm1763, %v1765, %v1761
      %v1767 = vrcp.pop %v1508
      %v1768 = vmul.f32 %v1508, %v1767
      %v1769 = vsub.f32 1.0, %v1768
      %v1770 = vmul.f32 %v1767, %v1769
      %v1771 = vadd.f32 %v1767, %v1770
      %vm1772 = vweird.f32 %v1508
      %vm1773 = vweird.f32 %v1767
      %vm1774 = vmor %vm1772, %vm1773
      %v1775 = vsel %vm1774, %v1767, %v1771
      %v1776 = vand.u32 2147483647, %v1508
      %vm1777 = vcmp.eq.f32.partialorder %v1776, 8.507059e+37
      %v1778 = vand.u32 %v1508, 2147483648
      %v1779 = vor.u32 1.1754944e-38, %v1778
      %v1780 = vsel %vm1777, %v1779, %v1775
      %v1781 = vrcp.pop %v1509
      %v1782 = vmul.f32 %v1509, %v1781
      %v1783 = vsub.f32 1.0, %v1782
      %v1784 = vmul.f32 %v1781, %v1783
      %v1785 = vadd.f32 %v1781, %v1784
      %vm1786 = vweird.f32 %v1509
      %vm1787 = vweird.f32 %v1781
      %vm1788 = vmor %vm1786, %vm1787
      %v1789 = vsel %vm1788, %v1781, %v1785
      %v1790 = vand.u32 2147483647, %v1509
      %vm1791 = vcmp.eq.f32.partialorder %v1790, 8.507059e+37
      %v1792 = vand.u32 %v1509, 2147483648
      %v1793 = vor.u32 1.1754944e-38, %v1792
      %v1794 = vsel %vm1791, %v1793, %v1789
      %v1795 = vrcp.pop %v1510
      %v1796 = vmul.f32 %v1510, %v1795
      %v1797 = vsub.f32 1.0, %v1796
      %v1798 = vmul.f32 %v1795, %v1797
      %v1799 = vadd.f32 %v1795, %v1798
      %vm1800 = vweird.f32 %v1510
      %vm1801 = vweird.f32 %v1795
      %vm1802 = vmor %vm1800, %vm1801
      %v1803 = vsel %vm1802, %v1795, %v1799
      %v1804 = vand.u32 2147483647, %v1510
      %vm1805 = vcmp.eq.f32.partialorder %v1804, 8.507059e+37
      %v1806 = vand.u32 %v1510, 2147483648
      %v1807 = vor.u32 1.1754944e-38, %v1806
      %v1808 = vsel %vm1805, %v1807, %v1803
      %v1809 = vrcp.pop %v1511
      %v1810 = vmul.f32 %v1511, %v1809
      %v1811 = vsub.f32 1.0, %v1810
      %v1812 = vmul.f32 %v1809, %v1811
      %v1813 = vadd.f32 %v1809, %v1812
      %vm1814 = vweird.f32 %v1511
      %vm1815 = vweird.f32 %v1809
      %vm1816 = vmor %vm1814, %vm1815
      %v1817 = vsel %vm1816, %v1809, %v1813
      %v1818 = vand.u32 2147483647, %v1511
      %vm1819 = vcmp.eq.f32.partialorder %v1818, 8.507059e+37
      %v1820 = vand.u32 %v1511, 2147483648
      %v1821 = vor.u32 1.1754944e-38, %v1820
      %v1822 = vsel %vm1819, %v1821, %v1817
      %v1823 = vrcp.pop %v1512
      %v1824 = vmul.f32 %v1512, %v1823
      %v1825 = vsub.f32 1.0, %v1824
      %v1826 = vmul.f32 %v1823, %v1825
      %v1827 = vadd.f32 %v1823, %v1826
      %vm1828 = vweird.f32 %v1512
      %vm1829 = vweird.f32 %v1823
      %vm1830 = vmor %vm1828, %vm1829
      %v1831 = vsel %vm1830, %v1823, %v1827
      %v1832 = vand.u32 2147483647, %v1512
      %vm1833 = vcmp.eq.f32.partialorder %v1832, 8.507059e+37
      %v1834 = vand.u32 %v1512, 2147483648
      %v1835 = vor.u32 1.1754944e-38, %v1834
      %v1836 = vsel %vm1833, %v1835, %v1831
      %v1837 = vrcp.pop %v1513
      %v1838 = vmul.f32 %v1513, %v1837
      %v1839 = vsub.f32 1.0, %v1838
      %v1840 = vmul.f32 %v1837, %v1839
      %v1841 = vadd.f32 %v1837, %v1840
      %vm1842 = vweird.f32 %v1513
      %vm1843 = vweird.f32 %v1837
      %vm1844 = vmor %vm1842, %vm1843
      %v1845 = vsel %vm1844, %v1837, %v1841
      %v1846 = vand.u32 2147483647, %v1513
      %vm1847 = vcmp.eq.f32.partialorder %v1846, 8.507059e+37
      %v1848 = vand.u32 %v1513, 2147483648
      %v1849 = vor.u32 1.1754944e-38, %v1848
      %v1850 = vsel %vm1847, %v1849, %v1845
      %v1851 = vrcp.pop %v1514
      %v1852 = vmul.f32 %v1514, %v1851
      %v1853 = vsub.f32 1.0, %v1852
      %v1854 = vmul.f32 %v1851, %v1853
      %v1855 = vadd.f32 %v1851, %v1854
      %vm1856 = vweird.f32 %v1514
      %vm1857 = vweird.f32 %v1851
      %vm1858 = vmor %vm1856, %vm1857
      %v1859 = vsel %vm1858, %v1851, %v1855
      %v1860 = vand.u32 2147483647, %v1514
      %vm1861 = vcmp.eq.f32.partialorder %v1860, 8.507059e+37
      %v1862 = vand.u32 %v1514, 2147483648
      %v1863 = vor.u32 1.1754944e-38, %v1862
      %v1864 = vsel %vm1861, %v1863, %v1859
      %v1865 = vrcp.pop %v1515
      %v1866 = vmul.f32 %v1515, %v1865
      %v1867 = vsub.f32 1.0, %v1866
      %v1868 = vmul.f32 %v1865, %v1867
      %v1869 = vadd.f32 %v1865, %v1868
      %vm1870 = vweird.f32 %v1515
      %vm1871 = vweird.f32 %v1865
      %vm1872 = vmor %vm1870, %vm1871
      %v1873 = vsel %vm1872, %v1865, %v1869
      %v1874 = vand.u32 2147483647, %v1515
      %vm1875 = vcmp.eq.f32.partialorder %v1874, 8.507059e+37
      %v1876 = vand.u32 %v1515, 2147483648
      %v1877 = vor.u32 1.1754944e-38, %v1876
      %v1878 = vsel %vm1875, %v1877, %v1873
      %v1879 = vrcp.pop %v1516
      %v1880 = vmul.f32 %v1516, %v1879
      %v1881 = vsub.f32 1.0, %v1880
      %v1882 = vmul.f32 %v1879, %v1881
      %v1883 = vadd.f32 %v1879, %v1882
      %vm1884 = vweird.f32 %v1516
      %vm1885 = vweird.f32 %v1879
      %vm1886 = vmor %vm1884, %vm1885
      %v1887 = vsel %vm1886, %v1879, %v1883
      %v1888 = vand.u32 2147483647, %v1516
      %vm1889 = vcmp.eq.f32.partialorder %v1888, 8.507059e+37
      %v1890 = vand.u32 %v1516, 2147483648
      %v1891 = vor.u32 1.1754944e-38, %v1890
      %v1892 = vsel %vm1889, %v1891, %v1887
      %v1893 = vrcp.pop %v1517
      %v1894 = vmul.f32 %v1517, %v1893
      %v1895 = vsub.f32 1.0, %v1894
      %v1896 = vmul.f32 %v1893, %v1895
      %v1897 = vadd.f32 %v1893, %v1896
      %vm1898 = vweird.f32 %v1517
      %vm1899 = vweird.f32 %v1893
      %vm1900 = vmor %vm1898, %vm1899
      %v1901 = vsel %vm1900, %v1893, %v1897
      %v1902 = vand.u32 2147483647, %v1517
      %vm1903 = vcmp.eq.f32.partialorder %v1902, 8.507059e+37
      %v1904 = vand.u32 %v1517, 2147483648
      %v1905 = vor.u32 1.1754944e-38, %v1904
      %v1906 = vsel %vm1903, %v1905, %v1901
      %v1907 = vrcp.pop %v1518
      %v1908 = vmul.f32 %v1518, %v1907
      %v1909 = vsub.f32 1.0, %v1908
      %v1910 = vmul.f32 %v1907, %v1909
      %v1911 = vadd.f32 %v1907, %v1910
      %vm1912 = vweird.f32 %v1518
      %vm1913 = vweird.f32 %v1907
      %vm1914 = vmor %vm1912, %vm1913
      %v1915 = vsel %vm1914, %v1907, %v1911
      %v1916 = vand.u32 2147483647, %v1518
      %vm1917 = vcmp.eq.f32.partialorder %v1916, 8.507059e+37
      %v1918 = vand.u32 %v1518, 2147483648
      %v1919 = vor.u32 1.1754944e-38, %v1918
      %v1920 = vsel %vm1917, %v1919, %v1915
      %v1921 = vrcp.pop %v1519
      %v1922 = vmul.f32 %v1519, %v1921
      %v1923 = vsub.f32 1.0, %v1922
      %v1924 = vmul.f32 %v1921, %v1923
      %v1925 = vadd.f32 %v1921, %v1924
      %vm1926 = vweird.f32 %v1519
      %vm1927 = vweird.f32 %v1921
      %vm1928 = vmor %vm1926, %vm1927
      %v1929 = vsel %vm1928, %v1921, %v1925
      %v1930 = vand.u32 2147483647, %v1519
      %vm1931 = vcmp.eq.f32.partialorder %v1930, 8.507059e+37
      %v1932 = vand.u32 %v1519, 2147483648
      %v1933 = vor.u32 1.1754944e-38, %v1932
      %v1934 = vsel %vm1931, %v1933, %v1929
      %v1935 = vrcp.pop %v1520
      %v1936 = vmul.f32 %v1520, %v1935
      %v1937 = vsub.f32 1.0, %v1936
      %v1938 = vmul.f32 %v1935, %v1937
      %v1939 = vadd.f32 %v1935, %v1938
      %vm1940 = vweird.f32 %v1520
      %vm1941 = vweird.f32 %v1935
      %vm1942 = vmor %vm1940, %vm1941
      %v1943 = vsel %vm1942, %v1935, %v1939
      %v1944 = vand.u32 2147483647, %v1520
      %vm1945 = vcmp.eq.f32.partialorder %v1944, 8.507059e+37
      %v1946 = vand.u32 %v1520, 2147483648
      %v1947 = vor.u32 1.1754944e-38, %v1946
      %v1948 = vsel %vm1945, %v1947, %v1943
      %v1949 = vrcp.pop %v1521
      %v1950 = vmul.f32 %v1521, %v1949
      %v1951 = vsub.f32 1.0, %v1950
      %v1952 = vmul.f32 %v1949, %v1951
      %v1953 = vadd.f32 %v1949, %v1952
      %vm1954 = vweird.f32 %v1521
      %vm1955 = vweird.f32 %v1949
      %vm1956 = vmor %vm1954, %vm1955
      %v1957 = vsel %vm1956, %v1949, %v1953
      %v1958 = vand.u32 2147483647, %v1521
      %vm1959 = vcmp.eq.f32.partialorder %v1958, 8.507059e+37
      %v1960 = vand.u32 %v1521, 2147483648
      %v1961 = vor.u32 1.1754944e-38, %v1960
      %v1962 = vsel %vm1959, %v1961, %v1957
      %v1963 = vrcp.pop %v1522
      %v1964 = vmul.f32 %v1522, %v1963
      %v1965 = vsub.f32 1.0, %v1964
      %v1966 = vmul.f32 %v1963, %v1965
      %v1967 = vadd.f32 %v1963, %v1966
      %vm1968 = vweird.f32 %v1522
      %vm1969 = vweird.f32 %v1963
      %vm1970 = vmor %vm1968, %vm1969
      %v1971 = vsel %vm1970, %v1963, %v1967
      %v1972 = vand.u32 2147483647, %v1522
      %vm1973 = vcmp.eq.f32.partialorder %v1972, 8.507059e+37
      %v1974 = vand.u32 %v1522, 2147483648
      %v1975 = vor.u32 1.1754944e-38, %v1974
      %v1976 = vsel %vm1973, %v1975, %v1971
      %v1977 = vrcp.pop %v1523
      %v1978 = vmul.f32 %v1523, %v1977
      %v1979 = vsub.f32 1.0, %v1978
      %v1980 = vmul.f32 %v1977, %v1979
      %v1981 = vadd.f32 %v1977, %v1980
      %vm1982 = vweird.f32 %v1523
      %vm1983 = vweird.f32 %v1977
      %vm1984 = vmor %vm1982, %vm1983
      %v1985 = vsel %vm1984, %v1977, %v1981
      %v1986 = vand.u32 2147483647, %v1523
      %vm1987 = vcmp.eq.f32.partialorder %v1986, 8.507059e+37
      %v1988 = vand.u32 %v1523, 2147483648
      %v1989 = vor.u32 1.1754944e-38, %v1988
      %v1990 = vsel %vm1987, %v1989, %v1985
      %v1991 = vrcp.pop %v1524
      %v1992 = vmul.f32 %v1524, %v1991
      %v1993 = vsub.f32 1.0, %v1992
      %v1994 = vmul.f32 %v1991, %v1993
      %v1995 = vadd.f32 %v1991, %v1994
      %vm1996 = vweird.f32 %v1524
      %vm1997 = vweird.f32 %v1991
      %vm1998 = vmor %vm1996, %vm1997
      %v1999 = vsel %vm1998, %v1991, %v1995
      %v2000 = vand.u32 2147483647, %v1524
      %vm2001 = vcmp.eq.f32.partialorder %v2000, 8.507059e+37
      %v2002 = vand.u32 %v1524, 2147483648
      %v2003 = vor.u32 1.1754944e-38, %v2002
      %v2004 = vsel %vm2001, %v2003, %v1999
      %v2005 = vmul.f32 %v1525, %v1570
      %v2006 = vmul.f32 %v1526, %v1584
      %v2007 = vmul.f32 %v1527, %v1598
      %v2008 = vmul.f32 %v1528, %v1612
      %v2009 = vmul.f32 %v1529, %v1626
      %v2010 = vmul.f32 %v1530, %v1640
      %v2011 = vmul.f32 %v1531, %v1654
      %v2012 = vmul.f32 %v1532, %v1668
      %v2013 = vmul.f32 %v1533, %v1682
      %v2014 = vmul.f32 %v1534, %v1696
      %v2015 = vmul.f32 %v1535, %v1710
      %v2016 = vmul.f32 %v1536, %v1724
      %v2017 = vmul.f32 %v1537, %v1738
      %v2018 = vmul.f32 %v1538, %v1752
      %v2019 = vmul.f32 %v1539, %v1766
      %v2020 = vmul.f32 %v1540, %v1780
      %v2021 = vmul.f32 %v1541, %v1794
      %v2022 = vmul.f32 %v1542, %v1808
      %v2023 = vmul.f32 %v1543, %v1822
      %v2024 = vmul.f32 %v1544, %v1836
      %v2025 = vmul.f32 %v1545, %v1850
      %v2026 = vmul.f32 %v1546, %v1864
      %v2027 = vmul.f32 %v1547, %v1878
      %v2028 = vmul.f32 %v1548, %v1892
      %v2029 = vmul.f32 %v1549, %v1906
      %v2030 = vmul.f32 %v1550, %v1920
      %v2031 = vmul.f32 %v1551, %v1934
      %v2032 = vmul.f32 %v1552, %v1948
      %v2033 = vmul.f32 %v1553, %v1962
      %v2034 = vmul.f32 %v1554, %v1976
      %v2035 = vmul.f32 %v1555, %v1990
      %v2036 = vmul.f32 %v1556, %v2004
      %v2037 = vadd.f32 %v2005, 1.0
      %v2038 = vadd.f32 %v2006, 1.0
      %v2039 = vadd.f32 %v2007, 1.0
      %v2040 = vadd.f32 %v2008, 1.0
      %v2041 = vadd.f32 %v2009, 1.0
      %v2042 = vadd.f32 %v2010, 1.0
      %v2043 = vadd.f32 %v2011, 1.0
      %v2044 = vadd.f32 %v2012, 1.0
      %v2045 = vadd.f32 %v2013, 1.0
      %v2046 = vadd.f32 %v2014, 1.0
      %v2047 = vadd.f32 %v2015, 1.0
      %v2048 = vadd.f32 %v2016, 1.0
      %v2049 = vadd.f32 %v2017, 1.0
      %v2050 = vadd.f32 %v2018, 1.0
      %v2051 = vadd.f32 %v2019, 1.0
      %v2052 = vadd.f32 %v2020, 1.0
      %v2053 = vadd.f32 %v2021, 1.0
      %v2054 = vadd.f32 %v2022, 1.0
      %v2055 = vadd.f32 %v2023, 1.0
      %v2056 = vadd.f32 %v2024, 1.0
      %v2057 = vadd.f32 %v2025, 1.0
      %v2058 = vadd.f32 %v2026, 1.0
      %v2059 = vadd.f32 %v2027, 1.0
      %v2060 = vadd.f32 %v2028, 1.0
      %v2061 = vadd.f32 %v2029, 1.0
      %v2062 = vadd.f32 %v2030, 1.0
      %v2063 = vadd.f32 %v2031, 1.0
      %v2064 = vadd.f32 %v2032, 1.0
      %v2065 = vadd.f32 %v2033, 1.0
      %v2066 = vadd.f32 %v2034, 1.0
      %v2067 = vadd.f32 %v2035, 1.0
      %v2068 = vadd.f32 %v2036, 1.0
      %v2069 = vmul.f32 %v725, %v2037
      %v2070 = vmul.f32 %v726, %v2038
      %v2071 = vmul.f32 %v727, %v2039
      %v2072 = vmul.f32 %v728, %v2040
      %v2073 = vmul.f32 %v729, %v2041
      %v2074 = vmul.f32 %v730, %v2042
      %v2075 = vmul.f32 %v731, %v2043
      %v2076 = vmul.f32 %v732, %v2044
      %v2077 = vmul.f32 %v733, %v2045
      %v2078 = vmul.f32 %v734, %v2046
      %v2079 = vmul.f32 %v735, %v2047
      %v2080 = vmul.f32 %v736, %v2048
      %v2081 = vmul.f32 %v737, %v2049
      %v2082 = vmul.f32 %v738, %v2050
      %v2083 = vmul.f32 %v739, %v2051
      %v2084 = vmul.f32 %v740, %v2052
      %v2085 = vmul.f32 %v741, %v2053
      %v2086 = vmul.f32 %v742, %v2054
      %v2087 = vmul.f32 %v743, %v2055
      %v2088 = vmul.f32 %v744, %v2056
      %v2089 = vmul.f32 %v745, %v2057
      %v2090 = vmul.f32 %v746, %v2058
      %v2091 = vmul.f32 %v747, %v2059
      %v2092 = vmul.f32 %v748, %v2060
      %v2093 = vmul.f32 %v749, %v2061
      %v2094 = vmul.f32 %v750, %v2062
      %v2095 = vmul.f32 %v751, %v2063
      %v2096 = vmul.f32 %v752, %v2064
      %v2097 = vmul.f32 %v753, %v2065
      %v2098 = vmul.f32 %v754, %v2066
      %v2099 = vmul.f32 %v755, %v2067
      %v2100 = vmul.f32 %v756, %v2068
      %v2101 = vpack.c.bf16 %v2069, %v2069
      %v2102 = vpack.c.bf16 %v2070, %v2070
      %v2103 = vpack.c.bf16 %v2071, %v2071
      %v2104 = vpack.c.bf16 %v2072, %v2072
      %v2105 = vpack.c.bf16 %v2073, %v2073
      %v2106 = vpack.c.bf16 %v2074, %v2074
      %v2107 = vpack.c.bf16 %v2075, %v2075
      %v2108 = vpack.c.bf16 %v2076, %v2076
      %v2109 = vpack.c.bf16 %v2077, %v2077
      %v2110 = vpack.c.bf16 %v2078, %v2078
      %v2111 = vpack.c.bf16 %v2079, %v2079
      %v2112 = vpack.c.bf16 %v2080, %v2080
      %v2113 = vpack.c.bf16 %v2081, %v2081
      %v2114 = vpack.c.bf16 %v2082, %v2082
      %v2115 = vpack.c.bf16 %v2083, %v2083
      %v2116 = vpack.c.bf16 %v2084, %v2084
      %v2117 = vpack.c.bf16 %v2085, %v2085
      %v2118 = vpack.c.bf16 %v2086, %v2086
      %v2119 = vpack.c.bf16 %v2087, %v2087
      %v2120 = vpack.c.bf16 %v2088, %v2088
      %v2121 = vpack.c.bf16 %v2089, %v2089
      %v2122 = vpack.c.bf16 %v2090, %v2090
      %v2123 = vpack.c.bf16 %v2091, %v2091
      %v2124 = vpack.c.bf16 %v2092, %v2092
      %v2125 = vpack.c.bf16 %v2093, %v2093
      %v2126 = vpack.c.bf16 %v2094, %v2094
      %v2127 = vpack.c.bf16 %v2095, %v2095
      %v2128 = vpack.c.bf16 %v2096, %v2096
      %v2129 = vpack.c.bf16 %v2097, %v2097
      %v2130 = vpack.c.bf16 %v2098, %v2098
      %v2131 = vpack.c.bf16 %v2099, %v2099
      %v2132 = vpack.c.bf16 %v2100, %v2100
      %2133 = vst [vmem:[%s346] sm:$0xf] %v2101
      %2134 = vst [vmem:[%s346 + $0x4] sm:$0xf] %v2102
      %2135 = vst [vmem:[%s346 + $0x8] sm:$0xf] %v2103
      %2136 = vst [vmem:[%s346 + $0xc] sm:$0xf] %v2104
      %2137 = vst [vmem:[%s346 + $0x10] sm:$0xf] %v2105
      %2138 = vst [vmem:[%s346 + $0x14] sm:$0xf] %v2106
      %2139 = vst [vmem:[%s346 + $0x18] sm:$0xf] %v2107
      %2140 = vst [vmem:[%s346 + $0x1c] sm:$0xf] %v2108
      %2141 = vst [vmem:[%s346 + $0x20] sm:$0xf] %v2109
      %2142 = vst [vmem:[%s346 + $0x24] sm:$0xf] %v2110
      %2143 = vst [vmem:[%s346 + $0x28] sm:$0xf] %v2111
      %2144 = vst [vmem:[%s346 + $0x2c] sm:$0xf] %v2112
      %2145 = vst [vmem:[%s346 + $0x30] sm:$0xf] %v2113
      %2146 = vst [vmem:[%s346 + $0x34] sm:$0xf] %v2114
      %2147 = vst [vmem:[%s346 + $0x38] sm:$0xf] %v2115
      %2148 = vst [vmem:[%s346 + $0x3c] sm:$0xf] %v2116
      %2149 = vst [vmem:[%s346 + $0x40] sm:$0xf] %v2117
      %2150 = vst [vmem:[%s346 + $0x44] sm:$0xf] %v2118
      %2151 = vst [vmem:[%s346 + $0x48] sm:$0xf] %v2119
      %2152 = vst [vmem:[%s346 + $0x4c] sm:$0xf] %v2120
      %2153 = vst [vmem:[%s346 + $0x50] sm:$0xf] %v2121
      %2154 = vst [vmem:[%s346 + $0x54] sm:$0xf] %v2122
      %2155 = vst [vmem:[%s346 + $0x58] sm:$0xf] %v2123
      %2156 = vst [vmem:[%s346 + $0x5c] sm:$0xf] %v2124
      %2157 = vst [vmem:[%s346 + $0x60] sm:$0xf] %v2125
      %2158 = vst [vmem:[%s346 + $0x64] sm:$0xf] %v2126
      %2159 = vst [vmem:[%s346 + $0x68] sm:$0xf] %v2127
      %2160 = vst [vmem:[%s346 + $0x6c] sm:$0xf] %v2128
      %2161 = vst [vmem:[%s346 + $0x70] sm:$0xf] %v2129
      %2162 = vst [vmem:[%s346 + $0x74] sm:$0xf] %v2130
      %2163 = vst [vmem:[%s346 + $0x78] sm:$0xf] %v2131
      %2164 = vst [vmem:[%s346 + $0x7c] sm:$0xf] %v2132
      %v2165 = vadd.f32 %v2069, %v2070
      %v2166 = vadd.f32 %v2165, %v2071
      %v2167 = vadd.f32 %v2166, %v2072
      %v2168 = vadd.f32 %v2167, %v2073
      %v2169 = vadd.f32 %v2168, %v2074
      %v2170 = vadd.f32 %v2169, %v2075
      %v2171 = vadd.f32 %v2170, %v2076
      %v2172 = vadd.f32 %v2171, %v2077
      %v2173 = vadd.f32 %v2172, %v2078
      %v2174 = vadd.f32 %v2173, %v2079
      %v2175 = vadd.f32 %v2174, %v2080
      %v2176 = vadd.f32 %v2175, %v2081
      %v2177 = vadd.f32 %v2176, %v2082
      %v2178 = vadd.f32 %v2177, %v2083
      %v2179 = vadd.f32 %v2178, %v2084
      %v2180 = vadd.f32 %v2179, %v2085
      %v2181 = vadd.f32 %v2180, %v2086
      %v2182 = vadd.f32 %v2181, %v2087
      %v2183 = vadd.f32 %v2182, %v2088
      %v2184 = vadd.f32 %v2183, %v2089
      %v2185 = vadd.f32 %v2184, %v2090
      %v2186 = vadd.f32 %v2185, %v2091
      %v2187 = vadd.f32 %v2186, %v2092
      %v2188 = vadd.f32 %v2187, %v2093
      %v2189 = vadd.f32 %v2188, %v2094
      %v2190 = vadd.f32 %v2189, %v2095
      %v2191 = vadd.f32 %v2190, %v2096
      %v2192 = vadd.f32 %v2191, %v2097
      %v2193 = vadd.f32 %v2192, %v2098
      %v2194 = vadd.f32 %v2193, %v2099
      %v2195 = vadd.f32 %v2194, %v2100
      %v2196 = vrot.slane %v2195, 4
      %v2197 = vadd.f32 %v2195, %v2196
      %v2198 = vrot.slane %v2197, 2
      %v2199 = vadd.f32 %v2197, %v2198
      %v2200 = vrot.slane %v2199, 1
      %v2201 = vadd.f32 %v2199, %v2200
      %2202 = vst [vmem:[%s353] sm:$0x1] %v2201
      %v2203 = vmul.f32 %v2069, %v2069
      %v2204 = vmul.f32 %v2070, %v2070
      %v2205 = vmul.f32 %v2071, %v2071
      %v2206 = vmul.f32 %v2072, %v2072
      %v2207 = vmul.f32 %v2073, %v2073
      %v2208 = vmul.f32 %v2074, %v2074
      %v2209 = vmul.f32 %v2075, %v2075
      %v2210 = vmul.f32 %v2076, %v2076
      %v2211 = vmul.f32 %v2077, %v2077
      %v2212 = vmul.f32 %v2078, %v2078
      %v2213 = vmul.f32 %v2079, %v2079
      %v2214 = vmul.f32 %v2080, %v2080
      %v2215 = vmul.f32 %v2081, %v2081
      %v2216 = vmul.f32 %v2082, %v2082
      %v2217 = vmul.f32 %v2083, %v2083
      %v2218 = vmul.f32 %v2084, %v2084
      %v2219 = vmul.f32 %v2085, %v2085
      %v2220 = vmul.f32 %v2086, %v2086
      %v2221 = vmul.f32 %v2087, %v2087
      %v2222 = vmul.f32 %v2088, %v2088
      %v2223 = vmul.f32 %v2089, %v2089
      %v2224 = vmul.f32 %v2090, %v2090
      %v2225 = vmul.f32 %v2091, %v2091
      %v2226 = vmul.f32 %v2092, %v2092
      %v2227 = vmul.f32 %v2093, %v2093
      %v2228 = vmul.f32 %v2094, %v2094
      %v2229 = vmul.f32 %v2095, %v2095
      %v2230 = vmul.f32 %v2096, %v2096
      %v2231 = vmul.f32 %v2097, %v2097
      %v2232 = vmul.f32 %v2098, %v2098
      %v2233 = vmul.f32 %v2099, %v2099
      %v2234 = vmul.f32 %v2100, %v2100
      %v2235 = vadd.f32 %v2203, %v2204
      %v2236 = vadd.f32 %v2235, %v2205
      %v2237 = vadd.f32 %v2236, %v2206
      %v2238 = vadd.f32 %v2237, %v2207
      %v2239 = vadd.f32 %v2238, %v2208
      %v2240 = vadd.f32 %v2239, %v2209
      %v2241 = vadd.f32 %v2240, %v2210
      %v2242 = vadd.f32 %v2241, %v2211
      %v2243 = vadd.f32 %v2242, %v2212
      %v2244 = vadd.f32 %v2243, %v2213
      %v2245 = vadd.f32 %v2244, %v2214
      %v2246 = vadd.f32 %v2245, %v2215
      %v2247 = vadd.f32 %v2246, %v2216
      %v2248 = vadd.f32 %v2247, %v2217
      %v2249 = vadd.f32 %v2248, %v2218
      %v2250 = vadd.f32 %v2249, %v2219
      %v2251 = vadd.f32 %v2250, %v2220
      %v2252 = vadd.f32 %v2251, %v2221
      %v2253 = vadd.f32 %v2252, %v2222
      %v2254 = vadd.f32 %v2253, %v2223
      %v2255 = vadd.f32 %v2254, %v2224
      %v2256 = vadd.f32 %v2255, %v2225
      %v2257 = vadd.f32 %v2256, %v2226
      %v2258 = vadd.f32 %v2257, %v2227
      %v2259 = vadd.f32 %v2258, %v2228
      %v2260 = vadd.f32 %v2259, %v2229
      %v2261 = vadd.f32 %v2260, %v2230
      %v2262 = vadd.f32 %v2261, %v2231
      %v2263 = vadd.f32 %v2262, %v2232
      %v2264 = vadd.f32 %v2263, %v2233
      %v2265 = vadd.f32 %v2264, %v2234
      %v2266 = vrot.slane %v2265, 4
      %v2267 = vadd.f32 %v2265, %v2266
      %v2268 = vrot.slane %v2267, 2
      %v2269 = vadd.f32 %v2267, %v2268
      %v2270 = vrot.slane %v2269, 1
      %v2271 = vadd.f32 %v2269, %v2270
      %2272 = vst [vmem:[%s359] sm:$0x1] %v2271
      %s2273 = smul.u32 32, %s23
      %p2274 = scmp.lt.s32.totalorder %s22, 1
      %s2275 = scalar_select %p2274, %s22, 1
      %p2276 = scmp.lt.s32.totalorder %s2273, 31
      %s2277 = scalar_select %p2276, %s2273, 31
      %s2278 = smul.addr %s2275, 32
      %s2279 = sadd.s32 %s2277, %s2278
      %s2280 = smul.addr %s2279, 4
      %s2281 = scalar_lea.vmem %s4, %s2280
      %p2282 = scmp.lt.s32.totalorder %s22, 1
      %s2283 = scalar_select %p2282, %s22, 1
      %p2284 = scmp.lt.s32.totalorder %s23, 0
      %s2285 = scalar_select %p2284, %s23, 0
      %s2286 = sadd.s32 %s2285, %s2283
      %s2287 = scalar_lea.vmem %s5, %s2286
      %p2288 = scmp.lt.s32.totalorder %s22, 1
      %s2289 = scalar_select %p2288, %s22, 1
      %p2290 = scmp.lt.s32.totalorder %s23, 0
      %s2291 = scalar_select %p2290, %s23, 0
      %s2292 = sadd.s32 %s2291, %s2289
      %s2293 = scalar_lea.vmem %s6, %s2292
      // Predicated region
      $region37: #{convmixer_block.3} parent=35 // pred_check
        %p2294 = pneg %p148
      $region38: #{convmixer_block.3} parent=35 // pred_check_branch
        %2296 = sbr.rel (%p2294) target = $region40
      $region39: #{convmixer_block.3} parent=35 // pred_region
        %s2297 = smul.u32 32, %s23
      $region40: #{convmixer_block.3} parent=35 // pred_fallthru
        _
      // Predicated region
      $region41: #{convmixer_block.3} parent=35 // pred_check
        %p2298 = pneg %p176
      $region42: #{convmixer_block.3} parent=35 // pred_check_branch
        %2300 = sbr.rel (%p2298) target = $region44
      $region43: #{convmixer_block.3} parent=35 // pred_region
        _
      $region44: #{convmixer_block.3} parent=35 // pred_fallthru
        _
      // Predicated region
      $region45: #{convmixer_block.3} parent=35 // pred_check
        %p2301 = pneg %p204
      $region46: #{convmixer_block.3} parent=35 // pred_check_branch
        %2303 = sbr.rel (%p2301) target = $region48
      $region47: #{convmixer_block.3} parent=35 // pred_region
        _
      $region48: #{convmixer_block.3} parent=35 // pred_fallthru
        _
    $region36: #{convmixer_block.3} parent=5 // pred_fallthru
      _
    %p2304 = scmp.le.s32.totalorder 2, %s13
    // Predicated region
    $region49: #{convmixer_block.3} parent=5 // pred_check
      %p2305 = pneg %p2304
    $region50: #{convmixer_block.3} parent=5 // pred_check_branch
      %2307 = sbr.rel (%p2305) target = $region52
    $region51: #{convmixer_block.3} parent=5 // pred_region
      %s2308 = ssub.s32 %s13, 2
      // Predicated region
      $region53: #{convmixer_block.3} parent=51 // pred_check
        %p2309 = pneg %p154
      $region54: #{convmixer_block.3} parent=51 // pred_check_branch
        %2311 = sbr.rel (%p2309) target = $region56
      $region55: #{convmixer_block.3} parent=51 // pred_region
        %s2312 = smul.u32 32, %s25
        %p2313 = scmp.lt.s32.totalorder %s24, 1
        %s2314 = scalar_select %p2313, %s24, 1
        %p2315 = scmp.lt.s32.totalorder %s2312, 31
        %s2316 = scalar_select %p2315, %s2312, 31
        %s2317 = smul.addr %s2314, 32
        %s2318 = sadd.s32 %s2316, %s2317
        %s2319 = smul.addr %s2318, 4
        %s2320 = scalar_lea.vmem %s4, %s2319
      $region56: #{convmixer_block.3} parent=51 // pred_fallthru
        _
      // Predicated region
      $region57: #{convmixer_block.3} parent=51 // pred_check
        %p2321 = pneg %p182
      $region58: #{convmixer_block.3} parent=51 // pred_check_branch
        %2323 = sbr.rel (%p2321) target = $region60
      $region59: #{convmixer_block.3} parent=51 // pred_region
        %p2324 = scmp.lt.s32.totalorder %s24, 1
        %s2325 = scalar_select %p2324, %s24, 1
        %p2326 = scmp.lt.s32.totalorder %s25, 0
        %s2327 = scalar_select %p2326, %s25, 0
        %s2328 = sadd.s32 %s2327, %s2325
        %s2329 = scalar_lea.vmem %s5, %s2328
      $region60: #{convmixer_block.3} parent=51 // pred_fallthru
        _
      // Predicated region
      $region61: #{convmixer_block.3} parent=51 // pred_check
        %p2330 = pneg %p210
      $region62: #{convmixer_block.3} parent=51 // pred_check_branch
        %2332 = sbr.rel (%p2330) target = $region64
      $region63: #{convmixer_block.3} parent=51 // pred_region
        %p2333 = scmp.lt.s32.totalorder %s24, 1
        %s2334 = scalar_select %p2333, %s24, 1
        %p2335 = scmp.lt.s32.totalorder %s25, 0
        %s2336 = scalar_select %p2335, %s25, 0
        %s2337 = sadd.s32 %s2336, %s2334
        %s2338 = scalar_lea.vmem %s6, %s2337
      $region64: #{convmixer_block.3} parent=51 // pred_fallthru
        _
    $region52: #{convmixer_block.3} parent=5 // pred_fallthru
      _
  $region6: #{convmixer_block.3} parent=0 // loop_footer
    %s17 = sadd.s32 1, %s13
  $region7: #{convmixer_block.3} parent=0 // loop_footer_branch
    %12 = sbr.rel target = $region3
  $region8: #{convmixer_block.3} parent=0 // loop_exit
    _

// kernel: convmixer_block.2
$region0: #{convmixer_block.2}
  #allocation0 [shape = 'u32[]', space=smem, size = 0x4, offset = 0x4, fixed_abs, tag = 'smem constant byte address 0x4 - core index']
  #allocation1 [shape = 'u32[72,128]{1,0:T(1,128)}', space=vmem, size = 0x9000, scoped, tag = 'internal scratch']
  #allocation2 [shape = 'f32[18,18,128]{2,1,0:T(8,128)}', space=vmem, size = 0x36000, scoped, tag = 'scratch operand']
  %s0 = inlined_call_operand.vmem [shape: f32[2,16,16,128], index: 0, kind: input, shape index: {}]
  %s1 = inlined_call_operand.vmem [shape: f32[10,128], index: 1, kind: input, shape index: {}]
  %s2 = inlined_call_operand.vmem [shape: bf16[2,16,16,128], index: 2, kind: output, shape index: {0}]
  %s3 = inlined_call_operand.vmem [shape: f32[2,1,128], index: 3, kind: output, shape index: {1}]
  %s4 = inlined_call_operand.vmem [shape: f32[2,1,128], index: 4, kind: output, shape index: {2}]
  %5 = xla_tuple %s2, %s3, %s4
  %s6 = sld [smem:[#allocation0]]
  $region57: #{convmixer_block.2} parent=0
    _
  %s8 = ssub.s32 1, %s6
  %s9 = scalar_select 0, %s8, %s6
  loop: start=0, step=1, limit=4
  $region2: #{convmixer_block.2} parent=0 // loop_pre_header
    _
  $region3: #{convmixer_block.2} parent=0 // loop_header
    %s11 = sphi 0, %s15
    %p12 = scmp.ge.s32.totalorder %s11, 4
    %s21 = sphi 0, %s23
    %s24 = sphi 0, %s21
    %s25 = sphi 0, %s24
    %s41 = sphi 0, %s25
    %s45 = sphi 0, %s45
    %s47 = sphi 0, %s45
    %s48 = sphi 0, %s47
    %s62 = sphi 0, %s48
    %s68 = sphi 0, %s70
    %s71 = sphi 0, %s68
    %s72 = sphi 0, %s71
    %s88 = sphi 0, %s72
    %s94 = sphi 0, %s96
    %s97 = sphi 0, %s94
    %s98 = sphi 0, %s97
    %s114 = sphi 0, %s98
    %s120 = sphi 0, %s122
    %s123 = sphi 0, %s120
    %s124 = sphi 0, %s123
    %s140 = sphi 0, %s124
  $region4: #{convmixer_block.2} parent=0 // loop_header_branch
    %14 = sbr.rel (%p12) target = $region8
  $region5: #{convmixer_block.2} parent=0 // loop_body
    %s16 = ssub.s32 %s11, 1
    %s17 = ssub.s32 %s11, 2
    %s18 = sadd.s32 %s11, 1
    %s19 = ssub.s32 %s11, %s18
    %p20 = scmp.eq.s32.totalorder %s19, 0
    %s22 = sadd.s32 %s21, 1
    %s23 = scalar_select %p20, %s21, %s22
    %p26 = pneg %p20
    %p27 = scmp.eq.s32.totalorder %s11, 1
    %p28 = por %p26, %p27
    %p29 = scmp.ne.s32.totalorder %s21, %s24
    %p30 = scmp.eq.s32.totalorder %s11, 0
    %p31 = por %p29, %p30
    %p32 = scmp.ne.s32.totalorder %s21, %s24
    %p33 = scmp.eq.s32.totalorder %s16, 1
    %p34 = por %p32, %p33
    %p35 = scmp.ne.s32.totalorder %s24, %s25
    %p36 = scmp.eq.s32.totalorder %s16, 0
    %p37 = por %p35, %p36
    %p38 = scmp.ne.s32.totalorder %s24, %s25
    %p39 = scmp.eq.s32.totalorder %s17, 1
    %p40 = por %p38, %p39
    %p42 = scmp.ne.s32.totalorder %s25, %s41
    %p43 = scmp.eq.s32.totalorder %s17, 0
    %p44 = por %p42, %p43
    %s46 = sadd.s32 %s45, 1
    %p49 = scmp.eq.s32.totalorder %s11, 1
    %p50 = scmp.ne.s32.totalorder %s45, %s47
    %p51 = scmp.eq.s32.totalorder %s11, 0
    %p52 = por %p50, %p51
    %p53 = scmp.ne.s32.totalorder %s45, %s47
    %p54 = scmp.eq.s32.totalorder %s16, 1
    %p55 = por %p53, %p54
    %p56 = scmp.ne.s32.totalorder %s47, %s48
    %p57 = scmp.eq.s32.totalorder %s16, 0
    %p58 = por %p56, %p57
    %p59 = scmp.ne.s32.totalorder %s47, %s48
    %p60 = scmp.eq.s32.totalorder %s17, 1
    %p61 = por %p59, %p60
    %p63 = scmp.ne.s32.totalorder %s48, %s62
    %p64 = scmp.eq.s32.totalorder %s17, 0
    %p65 = por %p63, %p64
    %s66 = ssub.s32 %s11, %s18
    %p67 = scmp.eq.s32.totalorder %s66, 0
    %s69 = sadd.s32 %s68, 1
    %s70 = scalar_select %p67, %s68, %s69
    %p73 = pneg %p67
    %p74 = scmp.eq.s32.totalorder %s11, 1
    %p75 = por %p73, %p74
    %p76 = scmp.ne.s32.totalorder %s68, %s71
    %p77 = scmp.eq.s32.totalorder %s11, 0
    %p78 = por %p76, %p77
    %p79 = scmp.ne.s32.totalorder %s68, %s71
    %p80 = scmp.eq.s32.totalorder %s16, 1
    %p81 = por %p79, %p80
    %p82 = scmp.ne.s32.totalorder %s71, %s72
    %p83 = scmp.eq.s32.totalorder %s16, 0
    %p84 = por %p82, %p83
    %p85 = scmp.ne.s32.totalorder %s71, %s72
    %p86 = scmp.eq.s32.totalorder %s17, 1
    %p87 = por %p85, %p86
    %p89 = scmp.ne.s32.totalorder %s72, %s88
    %p90 = scmp.eq.s32.totalorder %s17, 0
    %p91 = por %p89, %p90
    %s92 = ssub.s32 %s11, %s18
    %p93 = scmp.eq.s32.totalorder %s92, 0
    %s95 = sadd.s32 %s94, 1
    %s96 = scalar_select %p93, %s94, %s95
    %p99 = pneg %p93
    %p100 = scmp.eq.s32.totalorder %s11, 1
    %p101 = por %p99, %p100
    %p102 = scmp.ne.s32.totalorder %s94, %s97
    %p103 = scmp.eq.s32.totalorder %s11, 0
    %p104 = por %p102, %p103
    %p105 = scmp.ne.s32.totalorder %s94, %s97
    %p106 = scmp.eq.s32.totalorder %s16, 1
    %p107 = por %p105, %p106
    %p108 = scmp.ne.s32.totalorder %s97, %s98
    %p109 = scmp.eq.s32.totalorder %s16, 0
    %p110 = por %p108, %p109
    %p111 = scmp.ne.s32.totalorder %s97, %s98
    %p112 = scmp.eq.s32.totalorder %s17, 1
    %p113 = por %p111, %p112
    %p115 = scmp.ne.s32.totalorder %s98, %s114
    %p116 = scmp.eq.s32.totalorder %s17, 0
    %p117 = por %p115, %p116
    %s118 = ssub.s32 %s11, %s18
    %p119 = scmp.eq.s32.totalorder %s118, 0
    %s121 = sadd.s32 %s120, 1
    %s122 = scalar_select %p119, %s120, %s121
    %p125 = pneg %p119
    %p126 = scmp.eq.s32.totalorder %s11, 1
    %p127 = por %p125, %p126
    %p128 = scmp.ne.s32.totalorder %s120, %s123
    %p129 = scmp.eq.s32.totalorder %s11, 0
    %p130 = por %p128, %p129
    %p131 = scmp.ne.s32.totalorder %s120, %s123
    %p132 = scmp.eq.s32.totalorder %s16, 1
    %p133 = por %p131, %p132
    %p134 = scmp.ne.s32.totalorder %s123, %s124
    %p135 = scmp.eq.s32.totalorder %s16, 0
    %p136 = por %p134, %p135
    %p137 = scmp.ne.s32.totalorder %s123, %s124
    %p138 = scmp.eq.s32.totalorder %s17, 1
    %p139 = por %p137, %p138
    %p141 = scmp.ne.s32.totalorder %s124, %s140
    %p142 = scmp.eq.s32.totalorder %s17, 0
    %p143 = por %p141, %p142
    %p144 = scmp.le.s32.totalorder 1, %s11
    %p145 = scmp.lt.s32.totalorder %s11, 3
    %p146 = pnand %p144, %p145
    %p147 = pneg %p146
    // Predicated region
    $region9: #{convmixer_block.2} parent=5 // pred_check
      _
    $region10: #{convmixer_block.2} parent=5 // pred_check_branch
      %149 = sbr.rel (%p146) target = $region12
    $region11: #{convmixer_block.2} parent=5 // pred_region
      %s150 = ssub.s32 %s11, 1
      // Predicated region
      $region13: #{convmixer_block.2} parent=11 // pred_check
        %p151 = pneg %p58
      $region14: #{convmixer_block.2} parent=11 // pred_check_branch
        %153 = sbr.rel (%p151) target = $region16
      $region15: #{convmixer_block.2} parent=11 // pred_region
        _
      $region16: #{convmixer_block.2} parent=11 // pred_fallthru
        _
    $region12: #{convmixer_block.2} parent=5 // pred_fallthru
      _
    %p154 = scmp.lt.s32.totalorder %s11, 2
    // Predicated region
    $region17: #{convmixer_block.2} parent=5 // pred_check
      %p155 = pneg %p154
    $region18: #{convmixer_block.2} parent=5 // pred_check_branch
      %157 = sbr.rel (%p155) target = $region20
    $region19: #{convmixer_block.2} parent=5 // pred_region
      // Predicated region
      $region21: #{convmixer_block.2} parent=19 // pred_check
        %p158 = pneg %p31
      $region22: #{convmixer_block.2} parent=19 // pred_check_branch
        %160 = sbr.rel (%p158) target = $region24
      $region23: #{convmixer_block.2} parent=19 // pred_region
        %p161 = scmp.lt.s32.totalorder %s11, 1
        %s162 = scalar_select %p161, %s11, 1
        %s163 = smul.addr %s162, 32
        %s164 = smul.addr %s163, 8
        %s165 = scalar_lea.vmem %s0, %s164
      $region24: #{convmixer_block.2} parent=19 // pred_fallthru
        _
    $region20: #{convmixer_block.2} parent=5 // pred_fallthru
      _
    %p166 = scmp.le.s32.totalorder 1, %s11
    %p167 = scmp.lt.s32.totalorder %s11, 3
    %p168 = pnand %p166, %p167
    %p169 = pneg %p168
    // Predicated region
    $region25: #{convmixer_block.2} parent=5 // pred_check
      _
    $region26: #{convmixer_block.2} parent=5 // pred_check_branch
      %171 = sbr.rel (%p168) target = $region28
    $region27: #{convmixer_block.2} parent=5 // pred_region
      %s172 = ssub.s32 %s11, 1
      %p173 = scmp.lt.s32.totalorder %s16, 1
      %s174 = scalar_select %p173, %s16, 1
      %s175 = smul.addr %s174, 32
      %s176 = smul.addr %s175, 8
      %s177 = scalar_lea.vmem %s0, %s176
      %p178 = pneg %p37
      %p179 = pneg %p34
      %p180 = pneg %p58
      %p181 = pneg %p55
      %p182 = pneg %p84
      %p183 = pneg %p81
      %p184 = scmp.lt.s32.totalorder %s16, 1
      %s185 = scalar_select %p184, %s16, 1
      %s186 = smul.addr %s185, 32
      %s187 = smul.addr %s186, 4
      %s188 = scalar_lea.vmem %s2, %s187
      %p189 = pneg %p110
      %p190 = pneg %p107
      %p191 = scmp.lt.s32.totalorder %s16, 1
      %s192 = scalar_select %p191, %s16, 1
      %s193 = scalar_lea.vmem %s3, %s192
      %p194 = pneg %p136
      %p195 = pneg %p133
      %p196 = scmp.lt.s32.totalorder %s16, 1
      %s197 = scalar_select %p196, %s16, 1
      %s198 = scalar_lea.vmem %s4, %s197
      %p199 = scmp.lt.s32.totalorder %s16, 1
      %s200 = scalar_select %p199, %s16, 1
      %s201 = smul.addr %s200, 32
      %s202 = smul.addr %s201, 8
      %s203 = scalar_lea.vmem %s0, %s202
      %p204 = scmp.lt.s32.totalorder %s16, 1
      %s205 = scalar_select %p204, %s16, 1
      %s206 = smul.addr %s205, 32
      %s207 = smul.addr %s206, 4
      %s208 = scalar_lea.vmem %s2, %s207
      %p209 = scmp.lt.s32.totalorder %s16, 1
      %s210 = scalar_select %p209, %s16, 1
      %s211 = scalar_lea.vmem %s3, %s210
      %p212 = scmp.lt.s32.totalorder %s16, 1
      %s213 = scalar_select %p212, %s16, 1
      %s214 = scalar_lea.vmem %s4, %s213
      %215 = vst [vmem:[#allocation2] sm:$0xff] 0.0
      %216 = vst [vmem:[#allocation2 + $0x8] sm:$0xff] 0.0
      %217 = vst [vmem:[#allocation2 + $0x10] sm:$0x3] 0.0
      %s218 = scalar_lea.vmem [#allocation2], 24
      %219 = vst [vmem:[%s218] sm:$0x1] 0.0
      %220 = vst [vmem:[%s218 + $0x18] sm:$0x1] 0.0
      %221 = vst [vmem:[%s218 + $0x30] sm:$0x1] 0.0
      %222 = vst [vmem:[%s218 + $0x48] sm:$0x1] 0.0
      %223 = vst [vmem:[%s218 + $0x60] sm:$0x1] 0.0
      %224 = vst [vmem:[%s218 + $0x78] sm:$0x1] 0.0
      %225 = vst [vmem:[%s218 + $0x90] sm:$0x1] 0.0
      %226 = vst [vmem:[%s218 + $0xa8] sm:$0x1] 0.0
      %227 = vst [vmem:[%s218 + $0xc0] sm:$0x1] 0.0
      %228 = vst [vmem:[%s218 + $0xd8] sm:$0x1] 0.0
      %229 = vst [vmem:[%s218 + $0xf0] sm:$0x1] 0.0
      %230 = vst [vmem:[%s218 + $0x108] sm:$0x1] 0.0
      %231 = vst [vmem:[%s218 + $0x120] sm:$0x1] 0.0
      %232 = vst [vmem:[%s218 + $0x138] sm:$0x1] 0.0
      %233 = vst [vmem:[%s218 + $0x150] sm:$0x1] 0.0
      %234 = vst [vmem:[%s218 + $0x168] sm:$0x1] 0.0
      %s235 = scalar_lea.vmem [#allocation2], 408
      %236 = vst [vmem:[%s235] sm:$0xff] 0.0
      %237 = vst [vmem:[%s235 + $0x8] sm:$0xff] 0.0
      %238 = vst [vmem:[%s235 + $0x10] sm:$0x3] 0.0
      %239 = vst [vmem:[%s218 + $0x11] sm:$0x1] 0.0
      %240 = vst [vmem:[%s218 + $0x29] sm:$0x1] 0.0
      %241 = vst [vmem:[%s218 + $0x41] sm:$0x1] 0.0
      %242 = vst [vmem:[%s218 + $0x59] sm:$0x1] 0.0
      %243 = vst [vmem:[%s218 + $0x71] sm:$0x1] 0.0
      %244 = vst [vmem:[%s218 + $0x89] sm:$0x1] 0.0
      %245 = vst [vmem:[%s218 + $0xa1] sm:$0x1] 0.0
      %246 = vst [vmem:[%s218 + $0xb9] sm:$0x1] 0.0
      %247 = vst [vmem:[%s218 + $0xd1] sm:$0x1] 0.0
      %248 = vst [vmem:[%s218 + $0xe9] sm:$0x1] 0.0
      %249 = vst [vmem:[%s218 + $0x101] sm:$0x1] 0.0
      %250 = vst [vmem:[%s218 + $0x119] sm:$0x1] 0.0
      %251 = vst [vmem:[%s218 + $0x131] sm:$0x1] 0.0
      %252 = vst [vmem:[%s218 + $0x149] sm:$0x1] 0.0
      %253 = vst [vmem:[%s218 + $0x161] sm:$0x1] 0.0
      %254 = vst [vmem:[%s218 + $0x179] sm:$0x1] 0.0
      %v255 = vld [vmem:[%s203] sm:$0xff]
      %v256 = vld [vmem:[%s203 + $0x8] sm:$0xff]
      %v257 = vld [vmem:[%s203 + $0x10] sm:$0xff]
      %v258 = vld [vmem:[%s203 + $0x18] sm:$0xff]
      %v259 = vld [vmem:[%s203 + $0x20] sm:$0xff]
      %v260 = vld [vmem:[%s203 + $0x28] sm:$0xff]
      %v261 = vld [vmem:[%s203 + $0x30] sm:$0xff]
      %v262 = vld [vmem:[%s203 + $0x38] sm:$0xff]
      %v263 = vld [vmem:[%s203 + $0x40] sm:$0xff]
      %v264 = vld [vmem:[%s203 + $0x48] sm:$0xff]
      %v265 = vld [vmem:[%s203 + $0x50] sm:$0xff]
      %v266 = vld [vmem:[%s203 + $0x58] sm:$0xff]
      %v267 = vld [vmem:[%s203 + $0x60] sm:$0xff]
      %v268 = vld [vmem:[%s203 + $0x68] sm:$0xff]
      %v269 = vld [vmem:[%s203 + $0x70] sm:$0xff]
      %v270 = vld [vmem:[%s203 + $0x78] sm:$0xff]
      %v271 = vld [vmem:[%s203 + $0x80] sm:$0xff]
      %v272 = vld [vmem:[%s203 + $0x88] sm:$0xff]
      %v273 = vld [vmem:[%s203 + $0x90] sm:$0xff]
      %v274 = vld [vmem:[%s203 + $0x98] sm:$0xff]
      %v275 = vld [vmem:[%s203 + $0xa0] sm:$0xff]
      %v276 = vld [vmem:[%s203 + $0xa8] sm:$0xff]
      %v277 = vld [vmem:[%s203 + $0xb0] sm:$0xff]
      %v278 = vld [vmem:[%s203 + $0xb8] sm:$0xff]
      %v279 = vld [vmem:[%s203 + $0xc0] sm:$0xff]
      %v280 = vld [vmem:[%s203 + $0xc8] sm:$0xff]
      %v281 = vld [vmem:[%s203 + $0xd0] sm:$0xff]
      %v282 = vld [vmem:[%s203 + $0xd8] sm:$0xff]
      %v283 = vld [vmem:[%s203 + $0xe0] sm:$0xff]
      %v284 = vld [vmem:[%s203 + $0xe8] sm:$0xff]
      %v285 = vld [vmem:[%s203 + $0xf0] sm:$0xff]
      %v286 = vld [vmem:[%s203 + $0xf8] sm:$0xff]
      %287 = vst [vmem:[%s218 + $0x1] sm:$0xff] %v255
      %288 = vst [vmem:[%s218 + $0x9] sm:$0xff] %v256
      %289 = vst [vmem:[%s218 + $0x19] sm:$0xff] %v257
      %290 = vst [vmem:[%s218 + $0x21] sm:$0xff] %v258
      %291 = vst [vmem:[%s218 + $0x31] sm:$0xff] %v259
      %292 = vst [vmem:[%s218 + $0x39] sm:$0xff] %v260
      %293 = vst [vmem:[%s218 + $0x49] sm:$0xff] %v261
      %294 = vst [vmem:[%s218 + $0x51] sm:$0xff] %v262
      %295 = vst [vmem:[%s218 + $0x61] sm:$0xff] %v263
      %296 = vst [vmem:[%s218 + $0x69] sm:$0xff] %v264
      %297 = vst [vmem:[%s218 + $0x79] sm:$0xff] %v265
      %298 = vst [vmem:[%s218 + $0x81] sm:$0xff] %v266
      %299 = vst [vmem:[%s218 + $0x91] sm:$0xff] %v267
      %300 = vst [vmem:[%s218 + $0x99] sm:$0xff] %v268
      %301 = vst [vmem:[%s218 + $0xa9] sm:$0xff] %v269
      %302 = vst [vmem:[%s218 + $0xb1] sm:$0xff] %v270
      %303 = vst [vmem:[%s218 + $0xc1] sm:$0xff] %v271
      %304 = vst [vmem:[%s218 + $0xc9] sm:$0xff] %v272
      %305 = vst [vmem:[%s218 + $0xd9] sm:$0xff] %v273
      %306 = vst [vmem:[%s218 + $0xe1] sm:$0xff] %v274
      %307 = vst [vmem:[%s218 + $0xf1] sm:$0xff] %v275
      %308 = vst [vmem:[%s218 + $0xf9] sm:$0xff] %v276
      %309 = vst [vmem:[%s218 + $0x109] sm:$0xff] %v277
      %310 = vst [vmem:[%s218 + $0x111] sm:$0xff] %v278
      %311 = vst [vmem:[%s218 + $0x121] sm:$0xff] %v279
      %312 = vst [vmem:[%s218 + $0x129] sm:$0xff] %v280
      %313 = vst [vmem:[%s218 + $0x139] sm:$0xff] %v281
      %314 = vst [vmem:[%s218 + $0x141] sm:$0xff] %v282
      %315 = vst [vmem:[%s218 + $0x151] sm:$0xff] %v283
      %316 = vst [vmem:[%s218 + $0x159] sm:$0xff] %v284
      %317 = vst [vmem:[%s218 + $0x169] sm:$0xff] %v285
      %318 = vst [vmem:[%s218 + $0x171] sm:$0xff] %v286
      %v319 = vld [vmem:[%s1] sm:$0xff]
      %v320 = vld [vmem:[%s1 + $0x8] sm:$0x3]
      %v321 = vld [vmem:[#allocation2] sm:$0xff]
      %v322 = vld [vmem:[#allocation2 + $0x8] sm:$0xff]
      %v323 = vld [vmem:[#allocation2 + $0x18] sm:$0xff]
      %v324 = vld [vmem:[#allocation2 + $0x20] sm:$0xff]
      %v325 = vld [vmem:[#allocation2 + $0x30] sm:$0xff]
      %v326 = vld [vmem:[#allocation2 + $0x38] sm:$0xff]
      %v327 = vld [vmem:[#allocation2 + $0x48] sm:$0xff]
      %v328 = vld [vmem:[#allocation2 + $0x50] sm:$0xff]
      %v329 = vld [vmem:[#allocation2 + $0x60] sm:$0xff]
      %v330 = vld [vmem:[#allocation2 + $0x68] sm:$0xff]
      %v331 = vld [vmem:[#allocation2 + $0x78] sm:$0xff]
      %v332 = vld [vmem:[#allocation2 + $0x80] sm:$0xff]
      %v333 = vld [vmem:[#allocation2 + $0x90] sm:$0xff]
      %v334 = vld [vmem:[#allocation2 + $0x98] sm:$0xff]
      %v335 = vld [vmem:[#allocation2 + $0xa8] sm:$0xff]
      %v336 = vld [vmem:[#allocation2 + $0xb0] sm:$0xff]
      %v337 = vld [vmem:[#allocation2 + $0xc0] sm:$0xff]
      %v338 = vld [vmem:[#allocation2 + $0xc8] sm:$0xff]
      %v339 = vld [vmem:[#allocation2 + $0xd8] sm:$0xff]
      %v340 = vld [vmem:[#allocation2 + $0xe0] sm:$0xff]
      %v341 = vld [vmem:[#allocation2 + $0xf0] sm:$0xff]
      %v342 = vld [vmem:[#allocation2 + $0xf8] sm:$0xff]
      %v343 = vld [vmem:[#allocation2 + $0x108] sm:$0xff]
      %v344 = vld [vmem:[#allocation2 + $0x110] sm:$0xff]
      %v345 = vld [vmem:[#allocation2 + $0x120] sm:$0xff]
      %v346 = vld [vmem:[#allocation2 + $0x128] sm:$0xff]
      %v347 = vld [vmem:[#allocation2 + $0x138] sm:$0xff]
      %v348 = vld [vmem:[#allocation2 + $0x140] sm:$0xff]
      %v349 = vld [vmem:[#allocation2 + $0x150] sm:$0xff]
      %v350 = vld [vmem:[#allocation2 + $0x158] sm:$0xff]
      %v351 = vld [vmem:[#allocation2 + $0x168] sm:$0xff]
      %v352 = vld [vmem:[#allocation2 + $0x170] sm:$0xff]
      %v353 = vperm.slane %v319, 0
      %v354 = vmul.f32 %v321, %v353
      %v355 = vmul.f32 %v322, %v353
      %v356 = vmul.f32 %v323, %v353
      %v357 = vmul.f32 %v324, %v353
      %v358 = vmul.f32 %v325, %v353
      %v359 = vmul.f32 %v326, %v353
      %v360 = vmul.f32 %v327, %v353
      %v361 = vmul.f32 %v328, %v353
      %v362 = vmul.f32 %v329, %v353
      %v363 = vmul.f32 %v330, %v353
      %v364 = vmul.f32 %v331, %v353
      %v365 = vmul.f32 %v332, %v353
      %v366 = vmul.f32 %v333, %v353
      %v367 = vmul.f32 %v334, %v353
      %v368 = vmul.f32 %v335, %v353
      %v369 = vmul.f32 %v336, %v353
      %v370 = vmul.f32 %v337, %v353
      %v371 = vmul.f32 %v338, %v353
      %v372 = vmul.f32 %v339, %v353
      %v373 = vmul.f32 %v340, %v353
      %v374 = vmul.f32 %v341, %v353
      %v375 = vmul.f32 %v342, %v353
      %v376 = vmul.f32 %v343, %v353
      %v377 = vmul.f32 %v344, %v353
      %v378 = vmul.f32 %v345, %v353
      %v379 = vmul.f32 %v346, %v353
      %v380 = vmul.f32 %v347, %v353
      %v381 = vmul.f32 %v348, %v353
      %v382 = vmul.f32 %v349, %v353
      %v383 = vmul.f32 %v350, %v353
      %v384 = vmul.f32 %v351, %v353
      %v385 = vmul.f32 %v352, %v353
      %v386 = vld [vmem:[#allocation2 + $0x1] sm:$0xff]
      %v387 = vld [vmem:[#allocation2 + $0x9] sm:$0xff]
      %v388 = vld [vmem:[#allocation2 + $0x19] sm:$0xff]
      %v389 = vld [vmem:[#allocation2 + $0x21] sm:$0xff]
      %v390 = vld [vmem:[#allocation2 + $0x31] sm:$0xff]
      %v391 = vld [vmem:[#allocation2 + $0x39] sm:$0xff]
      %v392 = vld [vmem:[#allocation2 + $0x49] sm:$0xff]
      %v393 = vld [vmem:[#allocation2 + $0x51] sm:$0xff]
      %v394 = vld [vmem:[#allocation2 + $0x61] sm:$0xff]
      %v395 = vld [vmem:[#allocation2 + $0x69] sm:$0xff]
      %v396 = vld [vmem:[#allocation2 + $0x79] sm:$0xff]
      %v397 = vld [vmem:[#allocation2 + $0x81] sm:$0xff]
      %v398 = vld [vmem:[#allocation2 + $0x91] sm:$0xff]
      %v399 = vld [vmem:[#allocation2 + $0x99] sm:$0xff]
      %v400 = vld [vmem:[#allocation2 + $0xa9] sm:$0xff]
      %v401 = vld [vmem:[#allocation2 + $0xb1] sm:$0xff]
      %v402 = vld [vmem:[#allocation2 + $0xc1] sm:$0xff]
      %v403 = vld [vmem:[#allocation2 + $0xc9] sm:$0xff]
      %v404 = vld [vmem:[#allocation2 + $0xd9] sm:$0xff]
      %v405 = vld [vmem:[#allocation2 + $0xe1] sm:$0xff]
      %v406 = vld [vmem:[#allocation2 + $0xf1] sm:$0xff]
      %v407 = vld [vmem:[#allocation2 + $0xf9] sm:$0xff]
      %v408 = vld [vmem:[#allocation2 + $0x109] sm:$0xff]
      %v409 = vld [vmem:[#allocation2 + $0x111] sm:$0xff]
      %v410 = vld [vmem:[#allocation2 + $0x121] sm:$0xff]
      %v411 = vld [vmem:[#allocation2 + $0x129] sm:$0xff]
      %v412 = vld [vmem:[#allocation2 + $0x139] sm:$0xff]
      %v413 = vld [vmem:[#allocation2 + $0x141] sm:$0xff]
      %v414 = vld [vmem:[#allocation2 + $0x151] sm:$0xff]
      %v415 = vld [vmem:[#allocation2 + $0x159] sm:$0xff]
      %v416 = vld [vmem:[#allocation2 + $0x169] sm:$0xff]
      %v417 = vld [vmem:[#allocation2 + $0x171] sm:$0xff]
      %v418 = vperm.slane %v319, 1
      %v419 = vmul.f32 %v386, %v418
      %v420 = vmul.f32 %v387, %v418
      %v421 = vmul.f32 %v388, %v418
      %v422 = vmul.f32 %v389, %v418
      %v423 = vmul.f32 %v390, %v418
      %v424 = vmul.f32 %v391, %v418
      %v425 = vmul.f32 %v392, %v418
      %v426 = vmul.f32 %v393, %v418
      %v427 = vmul.f32 %v394, %v418
      %v428 = vmul.f32 %v395, %v418
      %v429 = vmul.f32 %v396, %v418
      %v430 = vmul.f32 %v397, %v418
      %v431 = vmul.f32 %v398, %v418
      %v432 = vmul.f32 %v399, %v418
      %v433 = vmul.f32 %v400, %v418
      %v434 = vmul.f32 %v401, %v418
      %v435 = vmul.f32 %v402, %v418
      %v436 = vmul.f32 %v403, %v418
      %v437 = vmul.f32 %v404, %v418
      %v438 = vmul.f32 %v405, %v418
      %v439 = vmul.f32 %v406, %v418
      %v440 = vmul.f32 %v407, %v418
      %v441 = vmul.f32 %v408, %v418
      %v442 = vmul.f32 %v409, %v418
      %v443 = vmul.f32 %v410, %v418
      %v444 = vmul.f32 %v411, %v418
      %v445 = vmul.f32 %v412, %v418
      %v446 = vmul.f32 %v413, %v418
      %v447 = vmul.f32 %v414, %v418
      %v448 = vmul.f32 %v415, %v418
      %v449 = vmul.f32 %v416, %v418
      %v450 = vmul.f32 %v417, %v418
      %v451 = vadd.f32 %v354, %v419
      %v452 = vadd.f32 %v355, %v420
      %v453 = vadd.f32 %v356, %v421
      %v454 = vadd.f32 %v357, %v422
      %v455 = vadd.f32 %v358, %v423
      %v456 = vadd.f32 %v359, %v424
      %v457 = vadd.f32 %v360, %v425
      %v458 = vadd.f32 %v361, %v426
      %v459 = vadd.f32 %v362, %v427
      %v460 = vadd.f32 %v363, %v428
      %v461 = vadd.f32 %v364, %v429
      %v462 = vadd.f32 %v365, %v430
      %v463 = vadd.f32 %v366, %v431
      %v464 = vadd.f32 %v367, %v432
      %v465 = vadd.f32 %v368, %v433
      %v466 = vadd.f32 %v369, %v434
      %v467 = vadd.f32 %v370, %v435
      %v468 = vadd.f32 %v371, %v436
      %v469 = vadd.f32 %v372, %v437
      %v470 = vadd.f32 %v373, %v438
      %v471 = vadd.f32 %v374, %v439
      %v472 = vadd.f32 %v375, %v440
      %v473 = vadd.f32 %v376, %v441
      %v474 = vadd.f32 %v377, %v442
      %v475 = vadd.f32 %v378, %v443
      %v476 = vadd.f32 %v379, %v444
      %v477 = vadd.f32 %v380, %v445
      %v478 = vadd.f32 %v381, %v446
      %v479 = vadd.f32 %v382, %v447
      %v480 = vadd.f32 %v383, %v448
      %v481 = vadd.f32 %v384, %v449
      %v482 = vadd.f32 %v385, %v450
      %v483 = vld [vmem:[#allocation2 + $0x2] sm:$0xff]
      %v484 = vld [vmem:[#allocation2 + $0xa] sm:$0xff]
      %v485 = vld [vmem:[#allocation2 + $0x1a] sm:$0xff]
      %v486 = vld [vmem:[#allocation2 + $0x22] sm:$0xff]
      %v487 = vld [vmem:[#allocation2 + $0x32] sm:$0xff]
      %v488 = vld [vmem:[#allocation2 + $0x3a] sm:$0xff]
      %v489 = vld [vmem:[#allocation2 + $0x4a] sm:$0xff]
      %v490 = vld [vmem:[#allocation2 + $0x52] sm:$0xff]
      %v491 = vld [vmem:[#allocation2 + $0x62] sm:$0xff]
      %v492 = vld [vmem:[#allocation2 + $0x6a] sm:$0xff]
      %v493 = vld [vmem:[#allocation2 + $0x7a] sm:$0xff]
      %v494 = vld [vmem:[#allocation2 + $0x82] sm:$0xff]
      %v495 = vld [vmem:[#allocation2 + $0x92] sm:$0xff]
      %v496 = vld [vmem:[#allocation2 + $0x9a] sm:$0xff]
      %v497 = vld [vmem:[#allocation2 + $0xaa] sm:$0xff]
      %v498 = vld [vmem:[#allocation2 + $0xb2] sm:$0xff]
      %v499 = vld [vmem:[#allocation2 + $0xc2] sm:$0xff]
      %v500 = vld [vmem:[#allocation2 + $0xca] sm:$0xff]
      %v501 = vld [vmem:[#allocation2 + $0xda] sm:$0xff]
      %v502 = vld [vmem:[#allocation2 + $0xe2] sm:$0xff]
      %v503 = vld [vmem:[#allocation2 + $0xf2] sm:$0xff]
      %v504 = vld [vmem:[#allocation2 + $0xfa] sm:$0xff]
      %v505 = vld [vmem:[#allocation2 + $0x10a] sm:$0xff]
      %v506 = vld [vmem:[#allocation2 + $0x112] sm:$0xff]
      %v507 = vld [vmem:[#allocation2 + $0x122] sm:$0xff]
      %v508 = vld [vmem:[#allocation2 + $0x12a] sm:$0xff]
      %v509 = vld [vmem:[#allocation2 + $0x13a] sm:$0xff]
      %v510 = vld [vmem:[#allocation2 + $0x142] sm:$0xff]
      %v511 = vld [vmem:[#allocation2 + $0x152] sm:$0xff]
      %v512 = vld [vmem:[#allocation2 + $0x15a] sm:$0xff]
      %v513 = vld [vmem:[#allocation2 + $0x16a] sm:$0xff]
      %v514 = vld [vmem:[#allocation2 + $0x172] sm:$0xff]
      %v515 = vperm.slane %v319, 2
      %v516 = vmul.f32 %v483, %v515
      %v517 = vmul.f32 %v484, %v515
      %v518 = vmul.f32 %v485, %v515
      %v519 = vmul.f32 %v486, %v515
      %v520 = vmul.f32 %v487, %v515
      %v521 = vmul.f32 %v488, %v515
      %v522 = vmul.f32 %v489, %v515
      %v523 = vmul.f32 %v490, %v515
      %v524 = vmul.f32 %v491, %v515
      %v525 = vmul.f32 %v492, %v515
      %v526 = vmul.f32 %v493, %v515
      %v527 = vmul.f32 %v494, %v515
      %v528 = vmul.f32 %v495, %v515
      %v529 = vmul.f32 %v496, %v515
      %v530 = vmul.f32 %v497, %v515
      %v531 = vmul.f32 %v498, %v515
      %v532 = vmul.f32 %v499, %v515
      %v533 = vmul.f32 %v500, %v515
      %v534 = vmul.f32 %v501, %v515
      %v535 = vmul.f32 %v502, %v515
      %v536 = vmul.f32 %v503, %v515
      %v537 = vmul.f32 %v504, %v515
      %v538 = vmul.f32 %v505, %v515
      %v539 = vmul.f32 %v506, %v515
      %v540 = vmul.f32 %v507, %v515
      %v541 = vmul.f32 %v508, %v515
      %v542 = vmul.f32 %v509, %v515
      %v543 = vmul.f32 %v510, %v515
      %v544 = vmul.f32 %v511, %v515
      %v545 = vmul.f32 %v512, %v515
      %v546 = vmul.f32 %v513, %v515
      %v547 = vmul.f32 %v514, %v515
      %v548 = vadd.f32 %v451, %v516
      %v549 = vadd.f32 %v452, %v517
      %v550 = vadd.f32 %v453, %v518
      %v551 = vadd.f32 %v454, %v519
      %v552 = vadd.f32 %v455, %v520
      %v553 = vadd.f32 %v456, %v521
      %v554 = vadd.f32 %v457, %v522
      %v555 = vadd.f32 %v458, %v523
      %v556 = vadd.f32 %v459, %v524
      %v557 = vadd.f32 %v460, %v525
      %v558 = vadd.f32 %v461, %v526
      %v559 = vadd.f32 %v462, %v527
      %v560 = vadd.f32 %v463, %v528
      %v561 = vadd.f32 %v464, %v529
      %v562 = vadd.f32 %v465, %v530
      %v563 = vadd.f32 %v466, %v531
      %v564 = vadd.f32 %v467, %v532
      %v565 = vadd.f32 %v468, %v533
      %v566 = vadd.f32 %v469, %v534
      %v567 = vadd.f32 %v470, %v535
      %v568 = vadd.f32 %v471, %v536
      %v569 = vadd.f32 %v472, %v537
      %v570 = vadd.f32 %v473, %v538
      %v571 = vadd.f32 %v474, %v539
      %v572 = vadd.f32 %v475, %v540
      %v573 = vadd.f32 %v476, %v541
      %v574 = vadd.f32 %v477, %v542
      %v575 = vadd.f32 %v478, %v543
      %v576 = vadd.f32 %v479, %v544
      %v577 = vadd.f32 %v480, %v545
      %v578 = vadd.f32 %v481, %v546
      %v579 = vadd.f32 %v482, %v547
      %v580 = vld [vmem:[%s218] sm:$0xff]
      %v581 = vld [vmem:[%s218 + $0x8] sm:$0xff]
      %v582 = vld [vmem:[%s218 + $0x18] sm:$0xff]
      %v583 = vld [vmem:[%s218 + $0x20] sm:$0xff]
      %v584 = vld [vmem:[%s218 + $0x30] sm:$0xff]
      %v585 = vld [vmem:[%s218 + $0x38] sm:$0xff]
      %v586 = vld [vmem:[%s218 + $0x48] sm:$0xff]
      %v587 = vld [vmem:[%s218 + $0x50] sm:$0xff]
      %v588 = vld [vmem:[%s218 + $0x60] sm:$0xff]
      %v589 = vld [vmem:[%s218 + $0x68] sm:$0xff]
      %v590 = vld [vmem:[%s218 + $0x78] sm:$0xff]
      %v591 = vld [vmem:[%s218 + $0x80] sm:$0xff]
      %v592 = vld [vmem:[%s218 + $0x90] sm:$0xff]
      %v593 = vld [vmem:[%s218 + $0x98] sm:$0xff]
      %v594 = vld [vmem:[%s218 + $0xa8] sm:$0xff]
      %v595 = vld [vmem:[%s218 + $0xb0] sm:$0xff]
      %v596 = vld [vmem:[%s218 + $0xc0] sm:$0xff]
      %v597 = vld [vmem:[%s218 + $0xc8] sm:$0xff]
      %v598 = vld [vmem:[%s218 + $0xd8] sm:$0xff]
      %v599 = vld [vmem:[%s218 + $0xe0] sm:$0xff]
      %v600 = vld [vmem:[%s218 + $0xf0] sm:$0xff]
      %v601 = vld [vmem:[%s218 + $0xf8] sm:$0xff]
      %v602 = vld [vmem:[%s218 + $0x108] sm:$0xff]
      %v603 = vld [vmem:[%s218 + $0x110] sm:$0xff]
      %v604 = vld [vmem:[%s218 + $0x120] sm:$0xff]
      %v605 = vld [vmem:[%s218 + $0x128] sm:$0xff]
      %v606 = vld [vmem:[%s218 + $0x138] sm:$0xff]
      %v607 = vld [vmem:[%s218 + $0x140] sm:$0xff]
      %v608 = vld [vmem:[%s218 + $0x150] sm:$0xff]
      %v609 = vld [vmem:[%s218 + $0x158] sm:$0xff]
      %v610 = vld [vmem:[%s218 + $0x168] sm:$0xff]
      %v611 = vld [vmem:[%s218 + $0x170] sm:$0xff]
      %v612 = vperm.slane %v319, 3
      %v613 = vmul.f32 %v580, %v612
      %v614 = vmul.f32 %v581, %v612
      %v615 = vmul.f32 %v582, %v612
      %v616 = vmul.f32 %v583, %v612
      %v617 = vmul.f32 %v584, %v612
      %v618 = vmul.f32 %v585, %v612
      %v619 = vmul.f32 %v586, %v612
      %v620 = vmul.f32 %v587, %v612
      %v621 = vmul.f32 %v588, %v612
      %v622 = vmul.f32 %v589, %v612
      %v623 = vmul.f32 %v590, %v612
      %v624 = vmul.f32 %v591, %v612
      %v625 = vmul.f32 %v592, %v612
      %v626 = vmul.f32 %v593, %v612
      %v627 = vmul.f32 %v594, %v612
      %v628 = vmul.f32 %v595, %v612
      %v629 = vmul.f32 %v596, %v612
      %v630 = vmul.f32 %v597, %v612
      %v631 = vmul.f32 %v598, %v612
      %v632 = vmul.f32 %v599, %v612
      %v633 = vmul.f32 %v600, %v612
      %v634 = vmul.f32 %v601, %v612
      %v635 = vmul.f32 %v602, %v612
      %v636 = vmul.f32 %v603, %v612
      %v637 = vmul.f32 %v604, %v612
      %v638 = vmul.f32 %v605, %v612
      %v639 = vmul.f32 %v606, %v612
      %v640 = vmul.f32 %v607, %v612
      %v641 = vmul.f32 %v608, %v612
      %v642 = vmul.f32 %v609, %v612
      %v643 = vmul.f32 %v610, %v612
      %v644 = vmul.f32 %v611, %v612
      %v645 = vld [vmem:[%s218 + $0x1] sm:$0xff]
      %v646 = vld [vmem:[%s218 + $0x9] sm:$0xff]
      %v647 = vld [vmem:[%s218 + $0x19] sm:$0xff]
      %v648 = vld [vmem:[%s218 + $0x21] sm:$0xff]
      %v649 = vld [vmem:[%s218 + $0x31] sm:$0xff]
      %v650 = vld [vmem:[%s218 + $0x39] sm:$0xff]
      %v651 = vld [vmem:[%s218 + $0x49] sm:$0xff]
      %v652 = vld [vmem:[%s218 + $0x51] sm:$0xff]
      %v653 = vld [vmem:[%s218 + $0x61] sm:$0xff]
      %v654 = vld [vmem:[%s218 + $0x69] sm:$0xff]
      %v655 = vld [vmem:[%s218 + $0x79] sm:$0xff]
      %v656 = vld [vmem:[%s218 + $0x81] sm:$0xff]
      %v657 = vld [vmem:[%s218 + $0x91] sm:$0xff]
      %v658 = vld [vmem:[%s218 + $0x99] sm:$0xff]
      %v659 = vld [vmem:[%s218 + $0xa9] sm:$0xff]
      %v660 = vld [vmem:[%s218 + $0xb1] sm:$0xff]
      %v661 = vld [vmem:[%s218 + $0xc1] sm:$0xff]
      %v662 = vld [vmem:[%s218 + $0xc9] sm:$0xff]
      %v663 = vld [vmem:[%s218 + $0xd9] sm:$0xff]
      %v664 = vld [vmem:[%s218 + $0xe1] sm:$0xff]
      %v665 = vld [vmem:[%s218 + $0xf1] sm:$0xff]
      %v666 = vld [vmem:[%s218 + $0xf9] sm:$0xff]
      %v667 = vld [vmem:[%s218 + $0x109] sm:$0xff]
      %v668 = vld [vmem:[%s218 + $0x111] sm:$0xff]
      %v669 = vld [vmem:[%s218 + $0x121] sm:$0xff]
      %v670 = vld [vmem:[%s218 + $0x129] sm:$0xff]
      %v671 = vld [vmem:[%s218 + $0x139] sm:$0xff]
      %v672 = vld [vmem:[%s218 + $0x141] sm:$0xff]
      %v673 = vld [vmem:[%s218 + $0x151] sm:$0xff]
      %v674 = vld [vmem:[%s218 + $0x159] sm:$0xff]
      %v675 = vld [vmem:[%s218 + $0x169] sm:$0xff]
      %v676 = vld [vmem:[%s218 + $0x171] sm:$0xff]
      %v677 = vperm.slane %v319, 4
      %v678 = vmul.f32 %v645, %v677
      %v679 = vmul.f32 %v646, %v677
      %v680 = vmul.f32 %v647, %v677
      %v681 = vmul.f32 %v648, %v677
      %v682 = vmul.f32 %v649, %v677
      %v683 = vmul.f32 %v650, %v677
      %v684 = vmul.f32 %v651, %v677
      %v685 = vmul.f32 %v652, %v677
      %v686 = vmul.f32 %v653, %v677
      %v687 = vmul.f32 %v654, %v677
      %v688 = vmul.f32 %v655, %v677
      %v689 = vmul.f32 %v656, %v677
      %v690 = vmul.f32 %v657, %v677
      %v691 = vmul.f32 %v658, %v677
      %v692 = vmul.f32 %v659, %v677
      %v693 = vmul.f32 %v660, %v677
      %v694 = vmul.f32 %v661, %v677
      %v695 = vmul.f32 %v662, %v677
      %v696 = vmul.f32 %v663, %v677
      %v697 = vmul.f32 %v664, %v677
      %v698 = vmul.f32 %v665, %v677
      %v699 = vmul.f32 %v666, %v677
      %v700 = vmul.f32 %v667, %v677
      %v701 = vmul.f32 %v668, %v677
      %v702 = vmul.f32 %v669, %v677
      %v703 = vmul.f32 %v670, %v677
      %v704 = vmul.f32 %v671, %v677
      %v705 = vmul.f32 %v672, %v677
      %v706 = vmul.f32 %v673, %v677
      %v707 = vmul.f32 %v674, %v677
      %v708 = vmul.f32 %v675, %v677
      %v709 = vmul.f32 %v676, %v677
      %v710 = vadd.f32 %v613, %v678
      %v711 = vadd.f32 %v614, %v679
      %v712 = vadd.f32 %v615, %v680
      %v713 = vadd.f32 %v616, %v681
      %v714 = vadd.f32 %v617, %v682
      %v715 = vadd.f32 %v618, %v683
      %v716 = vadd.f32 %v619, %v684
      %v717 = vadd.f32 %v620, %v685
      %v718 = vadd.f32 %v621, %v686
      %v719 = vadd.f32 %v622, %v687
      %v720 = vadd.f32 %v623, %v688
      %v721 = vadd.f32 %v624, %v689
      %v722 = vadd.f32 %v625, %v690
      %v723 = vadd.f32 %v626, %v691
      %v724 = vadd.f32 %v627, %v692
      %v725 = vadd.f32 %v628, %v693
      %v726 = vadd.f32 %v629, %v694
      %v727 = vadd.f32 %v630, %v695
      %v728 = vadd.f32 %v631, %v696
      %v729 = vadd.f32 %v632, %v697
      %v730 = vadd.f32 %v633, %v698
      %v731 = vadd.f32 %v634, %v699
      %v732 = vadd.f32 %v635, %v700
      %v733 = vadd.f32 %v636, %v701
      %v734 = vadd.f32 %v637, %v702
      %v735 = vadd.f32 %v638, %v703
      %v736 = vadd.f32 %v639, %v704
      %v737 = vadd.f32 %v640, %v705
      %v738 = vadd.f32 %v641, %v706
      %v739 = vadd.f32 %v642, %v707
      %v740 = vadd.f32 %v643, %v708
      %v741 = vadd.f32 %v644, %v709
      %v742 = vld [vmem:[%s218 + $0x2] sm:$0xff]
      %v743 = vld [vmem:[%s218 + $0xa] sm:$0xff]
      %v744 = vld [vmem:[%s218 + $0x1a] sm:$0xff]
      %v745 = vld [vmem:[%s218 + $0x22] sm:$0xff]
      %v746 = vld [vmem:[%s218 + $0x32] sm:$0xff]
      %v747 = vld [vmem:[%s218 + $0x3a] sm:$0xff]
      %v748 = vld [vmem:[%s218 + $0x4a] sm:$0xff]
      %v749 = vld [vmem:[%s218 + $0x52] sm:$0xff]
      %v750 = vld [vmem:[%s218 + $0x62] sm:$0xff]
      %v751 = vld [vmem:[%s218 + $0x6a] sm:$0xff]
      %v752 = vld [vmem:[%s218 + $0x7a] sm:$0xff]
      %v753 = vld [vmem:[%s218 + $0x82] sm:$0xff]
      %v754 = vld [vmem:[%s218 + $0x92] sm:$0xff]
      %v755 = vld [vmem:[%s218 + $0x9a] sm:$0xff]
      %v756 = vld [vmem:[%s218 + $0xaa] sm:$0xff]
      %v757 = vld [vmem:[%s218 + $0xb2] sm:$0xff]
      %v758 = vld [vmem:[%s218 + $0xc2] sm:$0xff]
      %v759 = vld [vmem:[%s218 + $0xca] sm:$0xff]
      %v760 = vld [vmem:[%s218 + $0xda] sm:$0xff]
      %v761 = vld [vmem:[%s218 + $0xe2] sm:$0xff]
      %v762 = vld [vmem:[%s218 + $0xf2] sm:$0xff]
      %v763 = vld [vmem:[%s218 + $0xfa] sm:$0xff]
      %v764 = vld [vmem:[%s218 + $0x10a] sm:$0xff]
      %v765 = vld [vmem:[%s218 + $0x112] sm:$0xff]
      %v766 = vld [vmem:[%s218 + $0x122] sm:$0xff]
      %v767 = vld [vmem:[%s218 + $0x12a] sm:$0xff]
      %v768 = vld [vmem:[%s218 + $0x13a] sm:$0xff]
      %v769 = vld [vmem:[%s218 + $0x142] sm:$0xff]
      %v770 = vld [vmem:[%s218 + $0x152] sm:$0xff]
      %v771 = vld [vmem:[%s218 + $0x15a] sm:$0xff]
      %v772 = vld [vmem:[%s218 + $0x16a] sm:$0xff]
      %v773 = vld [vmem:[%s218 + $0x172] sm:$0xff]
      %v774 = vperm.slane %v319, 5
      %v775 = vmul.f32 %v742, %v774
      %v776 = vmul.f32 %v743, %v774
      %v777 = vmul.f32 %v744, %v774
      %v778 = vmul.f32 %v745, %v774
      %v779 = vmul.f32 %v746, %v774
      %v780 = vmul.f32 %v747, %v774
      %v781 = vmul.f32 %v748, %v774
      %v782 = vmul.f32 %v749, %v774
      %v783 = vmul.f32 %v750, %v774
      %v784 = vmul.f32 %v751, %v774
      %v785 = vmul.f32 %v752, %v774
      %v786 = vmul.f32 %v753, %v774
      %v787 = vmul.f32 %v754, %v774
      %v788 = vmul.f32 %v755, %v774
      %v789 = vmul.f32 %v756, %v774
      %v790 = vmul.f32 %v757, %v774
      %v791 = vmul.f32 %v758, %v774
      %v792 = vmul.f32 %v759, %v774
      %v793 = vmul.f32 %v760, %v774
      %v794 = vmul.f32 %v761, %v774
      %v795 = vmul.f32 %v762, %v774
      %v796 = vmul.f32 %v763, %v774
      %v797 = vmul.f32 %v764, %v774
      %v798 = vmul.f32 %v765, %v774
      %v799 = vmul.f32 %v766, %v774
      %v800 = vmul.f32 %v767, %v774
      %v801 = vmul.f32 %v768, %v774
      %v802 = vmul.f32 %v769, %v774
      %v803 = vmul.f32 %v770, %v774
      %v804 = vmul.f32 %v771, %v774
      %v805 = vmul.f32 %v772, %v774
      %v806 = vmul.f32 %v773, %v774
      %v807 = vadd.f32 %v710, %v775
      %v808 = vadd.f32 %v711, %v776
      %v809 = vadd.f32 %v712, %v777
      %v810 = vadd.f32 %v713, %v778
      %v811 = vadd.f32 %v714, %v779
      %v812 = vadd.f32 %v715, %v780
      %v813 = vadd.f32 %v716, %v781
      %v814 = vadd.f32 %v717, %v782
      %v815 = vadd.f32 %v718, %v783
      %v816 = vadd.f32 %v719, %v784
      %v817 = vadd.f32 %v720, %v785
      %v818 = vadd.f32 %v721, %v786
      %v819 = vadd.f32 %v722, %v787
      %v820 = vadd.f32 %v723, %v788
      %v821 = vadd.f32 %v724, %v789
      %v822 = vadd.f32 %v725, %v790
      %v823 = vadd.f32 %v726, %v791
      %v824 = vadd.f32 %v727, %v792
      %v825 = vadd.f32 %v728, %v793
      %v826 = vadd.f32 %v729, %v794
      %v827 = vadd.f32 %v730, %v795
      %v828 = vadd.f32 %v731, %v796
      %v829 = vadd.f32 %v732, %v797
      %v830 = vadd.f32 %v733, %v798
      %v831 = vadd.f32 %v734, %v799
      %v832 = vadd.f32 %v735, %v800
      %v833 = vadd.f32 %v736, %v801
      %v834 = vadd.f32 %v737, %v802
      %v835 = vadd.f32 %v738, %v803
      %v836 = vadd.f32 %v739, %v804
      %v837 = vadd.f32 %v740, %v805
      %v838 = vadd.f32 %v741, %v806
      %v839 = vadd.f32 %v548, %v807
      %v840 = vadd.f32 %v549, %v808
      %v841 = vadd.f32 %v550, %v809
      %v842 = vadd.f32 %v551, %v810
      %v843 = vadd.f32 %v552, %v811
      %v844 = vadd.f32 %v553, %v812
      %v845 = vadd.f32 %v554, %v813
      %v846 = vadd.f32 %v555, %v814
      %v847 = vadd.f32 %v556, %v815
      %v848 = vadd.f32 %v557, %v816
      %v849 = vadd.f32 %v558, %v817
      %v850 = vadd.f32 %v559, %v818
      %v851 = vadd.f32 %v560, %v819
      %v852 = vadd.f32 %v561, %v820
      %v853 = vadd.f32 %v562, %v821
      %v854 = vadd.f32 %v563, %v822
      %v855 = vadd.f32 %v564, %v823
      %v856 = vadd.f32 %v565, %v824
      %v857 = vadd.f32 %v566, %v825
      %v858 = vadd.f32 %v567, %v826
      %v859 = vadd.f32 %v568, %v827
      %v860 = vadd.f32 %v569, %v828
      %v861 = vadd.f32 %v570, %v829
      %v862 = vadd.f32 %v571, %v830
      %v863 = vadd.f32 %v572, %v831
      %v864 = vadd.f32 %v573, %v832
      %v865 = vadd.f32 %v574, %v833
      %v866 = vadd.f32 %v575, %v834
      %v867 = vadd.f32 %v576, %v835
      %v868 = vadd.f32 %v577, %v836
      %v869 = vadd.f32 %v578, %v837
      %v870 = vadd.f32 %v579, %v838
      %s871 = scalar_lea.vmem [#allocation2], 48
      %v872 = vld [vmem:[%s871] sm:$0xff]
      %v873 = vld [vmem:[%s871 + $0x8] sm:$0xff]
      %v874 = vld [vmem:[%s871 + $0x18] sm:$0xff]
      %v875 = vld [vmem:[%s871 + $0x20] sm:$0xff]
      %v876 = vld [vmem:[%s871 + $0x30] sm:$0xff]
      %v877 = vld [vmem:[%s871 + $0x38] sm:$0xff]
      %v878 = vld [vmem:[%s871 + $0x48] sm:$0xff]
      %v879 = vld [vmem:[%s871 + $0x50] sm:$0xff]
      %v880 = vld [vmem:[%s871 + $0x60] sm:$0xff]
      %v881 = vld [vmem:[%s871 + $0x68] sm:$0xff]
      %v882 = vld [vmem:[%s871 + $0x78] sm:$0xff]
      %v883 = vld [vmem:[%s871 + $0x80] sm:$0xff]
      %v884 = vld [vmem:[%s871 + $0x90] sm:$0xff]
      %v885 = vld [vmem:[%s871 + $0x98] sm:$0xff]
      %v886 = vld [vmem:[%s871 + $0xa8] sm:$0xff]
      %v887 = vld [vmem:[%s871 + $0xb0] sm:$0xff]
      %v888 = vld [vmem:[%s871 + $0xc0] sm:$0xff]
      %v889 = vld [vmem:[%s871 + $0xc8] sm:$0xff]
      %v890 = vld [vmem:[%s871 + $0xd8] sm:$0xff]
      %v891 = vld [vmem:[%s871 + $0xe0] sm:$0xff]
      %v892 = vld [vmem:[%s871 + $0xf0] sm:$0xff]
      %v893 = vld [vmem:[%s871 + $0xf8] sm:$0xff]
      %v894 = vld [vmem:[%s871 + $0x108] sm:$0xff]
      %v895 = vld [vmem:[%s871 + $0x110] sm:$0xff]
      %v896 = vld [vmem:[%s871 + $0x120] sm:$0xff]
      %v897 = vld [vmem:[%s871 + $0x128] sm:$0xff]
      %v898 = vld [vmem:[%s871 + $0x138] sm:$0xff]
      %v899 = vld [vmem:[%s871 + $0x140] sm:$0xff]
      %v900 = vld [vmem:[%s871 + $0x150] sm:$0xff]
      %v901 = vld [vmem:[%s871 + $0x158] sm:$0xff]
      %v902 = vld [vmem:[%s871 + $0x168] sm:$0xff]
      %v903 = vld [vmem:[%s871 + $0x170] sm:$0xff]
      %v904 = vperm.slane %v319, 6
      %v905 = vmul.f32 %v872, %v904
      %v906 = vmul.f32 %v873, %v904
      %v907 = vmul.f32 %v874, %v904
      %v908 = vmul.f32 %v875, %v904
      %v909 = vmul.f32 %v876, %v904
      %v910 = vmul.f32 %v877, %v904
      %v911 = vmul.f32 %v878, %v904
      %v912 = vmul.f32 %v879, %v904
      %v913 = vmul.f32 %v880, %v904
      %v914 = vmul.f32 %v881, %v904
      %v915 = vmul.f32 %v882, %v904
      %v916 = vmul.f32 %v883, %v904
      %v917 = vmul.f32 %v884, %v904
      %v918 = vmul.f32 %v885, %v904
      %v919 = vmul.f32 %v886, %v904
      %v920 = vmul.f32 %v887, %v904
      %v921 = vmul.f32 %v888, %v904
      %v922 = vmul.f32 %v889, %v904
      %v923 = vmul.f32 %v890, %v904
      %v924 = vmul.f32 %v891, %v904
      %v925 = vmul.f32 %v892, %v904
      %v926 = vmul.f32 %v893, %v904
      %v927 = vmul.f32 %v894, %v904
      %v928 = vmul.f32 %v895, %v904
      %v929 = vmul.f32 %v896, %v904
      %v930 = vmul.f32 %v897, %v904
      %v931 = vmul.f32 %v898, %v904
      %v932 = vmul.f32 %v899, %v904
      %v933 = vmul.f32 %v900, %v904
      %v934 = vmul.f32 %v901, %v904
      %v935 = vmul.f32 %v902, %v904
      %v936 = vmul.f32 %v903, %v904
      %v937 = vld [vmem:[%s871 + $0x1] sm:$0xff]
      %v938 = vld [vmem:[%s871 + $0x9] sm:$0xff]
      %v939 = vld [vmem:[%s871 + $0x19] sm:$0xff]
      %v940 = vld [vmem:[%s871 + $0x21] sm:$0xff]
      %v941 = vld [vmem:[%s871 + $0x31] sm:$0xff]
      %v942 = vld [vmem:[%s871 + $0x39] sm:$0xff]
      %v943 = vld [vmem:[%s871 + $0x49] sm:$0xff]
      %v944 = vld [vmem:[%s871 + $0x51] sm:$0xff]
      %v945 = vld [vmem:[%s871 + $0x61] sm:$0xff]
      %v946 = vld [vmem:[%s871 + $0x69] sm:$0xff]
      %v947 = vld [vmem:[%s871 + $0x79] sm:$0xff]
      %v948 = vld [vmem:[%s871 + $0x81] sm:$0xff]
      %v949 = vld [vmem:[%s871 + $0x91] sm:$0xff]
      %v950 = vld [vmem:[%s871 + $0x99] sm:$0xff]
      %v951 = vld [vmem:[%s871 + $0xa9] sm:$0xff]
      %v952 = vld [vmem:[%s871 + $0xb1] sm:$0xff]
      %v953 = vld [vmem:[%s871 + $0xc1] sm:$0xff]
      %v954 = vld [vmem:[%s871 + $0xc9] sm:$0xff]
      %v955 = vld [vmem:[%s871 + $0xd9] sm:$0xff]
      %v956 = vld [vmem:[%s871 + $0xe1] sm:$0xff]
      %v957 = vld [vmem:[%s871 + $0xf1] sm:$0xff]
      %v958 = vld [vmem:[%s871 + $0xf9] sm:$0xff]
      %v959 = vld [vmem:[%s871 + $0x109] sm:$0xff]
      %v960 = vld [vmem:[%s871 + $0x111] sm:$0xff]
      %v961 = vld [vmem:[%s871 + $0x121] sm:$0xff]
      %v962 = vld [vmem:[%s871 + $0x129] sm:$0xff]
      %v963 = vld [vmem:[%s871 + $0x139] sm:$0xff]
      %v964 = vld [vmem:[%s871 + $0x141] sm:$0xff]
      %v965 = vld [vmem:[%s871 + $0x151] sm:$0xff]
      %v966 = vld [vmem:[%s871 + $0x159] sm:$0xff]
      %v967 = vld [vmem:[%s871 + $0x169] sm:$0xff]
      %v968 = vld [vmem:[%s871 + $0x171] sm:$0xff]
      %v969 = vperm.slane %v319, 7
      %v970 = vmul.f32 %v937, %v969
      %v971 = vmul.f32 %v938, %v969
      %v972 = vmul.f32 %v939, %v969
      %v973 = vmul.f32 %v940, %v969
      %v974 = vmul.f32 %v941, %v969
      %v975 = vmul.f32 %v942, %v969
      %v976 = vmul.f32 %v943, %v969
      %v977 = vmul.f32 %v944, %v969
      %v978 = vmul.f32 %v945, %v969
      %v979 = vmul.f32 %v946, %v969
      %v980 = vmul.f32 %v947, %v969
      %v981 = vmul.f32 %v948, %v969
      %v982 = vmul.f32 %v949, %v969
      %v983 = vmul.f32 %v950, %v969
      %v984 = vmul.f32 %v951, %v969
      %v985 = vmul.f32 %v952, %v969
      %v986 = vmul.f32 %v953, %v969
      %v987 = vmul.f32 %v954, %v969
      %v988 = vmul.f32 %v955, %v969
      %v989 = vmul.f32 %v956, %v969
      %v990 = vmul.f32 %v957, %v969
      %v991 = vmul.f32 %v958, %v969
      %v992 = vmul.f32 %v959, %v969
      %v993 = vmul.f32 %v960, %v969
      %v994 = vmul.f32 %v961, %v969
      %v995 = vmul.f32 %v962, %v969
      %v996 = vmul.f32 %v963, %v969
      %v997 = vmul.f32 %v964, %v969
      %v998 = vmul.f32 %v965, %v969
      %v999 = vmul.f32 %v966, %v969
      %v1000 = vmul.f32 %v967, %v969
      %v1001 = vmul.f32 %v968, %v969
      %v1002 = vadd.f32 %v905, %v970
      %v1003 = vadd.f32 %v906, %v971
      %v1004 = vadd.f32 %v907, %v972
      %v1005 = vadd.f32 %v908, %v973
      %v1006 = vadd.f32 %v909, %v974
      %v1007 = vadd.f32 %v910, %v975
      %v1008 = vadd.f32 %v911, %v976
      %v1009 = vadd.f32 %v912, %v977
      %v1010 = vadd.f32 %v913, %v978
      %v1011 = vadd.f32 %v914, %v979
      %v1012 = vadd.f32 %v915, %v980
      %v1013 = vadd.f32 %v916, %v981
      %v1014 = vadd.f32 %v917, %v982
      %v1015 = vadd.f32 %v918, %v983
      %v1016 = vadd.f32 %v919, %v984
      %v1017 = vadd.f32 %v920, %v985
      %v1018 = vadd.f32 %v921, %v986
      %v1019 = vadd.f32 %v922, %v987
      %v1020 = vadd.f32 %v923, %v988
      %v1021 = vadd.f32 %v924, %v989
      %v1022 = vadd.f32 %v925, %v990
      %v1023 = vadd.f32 %v926, %v991
      %v1024 = vadd.f32 %v927, %v992
      %v1025 = vadd.f32 %v928, %v993
      %v1026 = vadd.f32 %v929, %v994
      %v1027 = vadd.f32 %v930, %v995
      %v1028 = vadd.f32 %v931, %v996
      %v1029 = vadd.f32 %v932, %v997
      %v1030 = vadd.f32 %v933, %v998
      %v1031 = vadd.f32 %v934, %v999
      %v1032 = vadd.f32 %v935, %v1000
      %v1033 = vadd.f32 %v936, %v1001
      %v1034 = vld [vmem:[%s871 + $0x2] sm:$0xff]
      %v1035 = vld [vmem:[%s871 + $0xa] sm:$0xff]
      %v1036 = vld [vmem:[%s871 + $0x1a] sm:$0xff]
      %v1037 = vld [vmem:[%s871 + $0x22] sm:$0xff]
      %v1038 = vld [vmem:[%s871 + $0x32] sm:$0xff]
      %v1039 = vld [vmem:[%s871 + $0x3a] sm:$0xff]
      %v1040 = vld [vmem:[%s871 + $0x4a] sm:$0xff]
      %v1041 = vld [vmem:[%s871 + $0x52] sm:$0xff]
      %v1042 = vld [vmem:[%s871 + $0x62] sm:$0xff]
      %v1043 = vld [vmem:[%s871 + $0x6a] sm:$0xff]
      %v1044 = vld [vmem:[%s871 + $0x7a] sm:$0xff]
      %v1045 = vld [vmem:[%s871 + $0x82] sm:$0xff]
      %v1046 = vld [vmem:[%s871 + $0x92] sm:$0xff]
      %v1047 = vld [vmem:[%s871 + $0x9a] sm:$0xff]
      %v1048 = vld [vmem:[%s871 + $0xaa] sm:$0xff]
      %v1049 = vld [vmem:[%s871 + $0xb2] sm:$0xff]
      %v1050 = vld [vmem:[%s871 + $0xc2] sm:$0xff]
      %v1051 = vld [vmem:[%s871 + $0xca] sm:$0xff]
      %v1052 = vld [vmem:[%s871 + $0xda] sm:$0xff]
      %v1053 = vld [vmem:[%s871 + $0xe2] sm:$0xff]
      %v1054 = vld [vmem:[%s871 + $0xf2] sm:$0xff]
      %v1055 = vld [vmem:[%s871 + $0xfa] sm:$0xff]
      %v1056 = vld [vmem:[%s871 + $0x10a] sm:$0xff]
      %v1057 = vld [vmem:[%s871 + $0x112] sm:$0xff]
      %v1058 = vld [vmem:[%s871 + $0x122] sm:$0xff]
      %v1059 = vld [vmem:[%s871 + $0x12a] sm:$0xff]
      %v1060 = vld [vmem:[%s871 + $0x13a] sm:$0xff]
      %v1061 = vld [vmem:[%s871 + $0x142] sm:$0xff]
      %v1062 = vld [vmem:[%s871 + $0x152] sm:$0xff]
      %v1063 = vld [vmem:[%s871 + $0x15a] sm:$0xff]
      %v1064 = vld [vmem:[%s871 + $0x16a] sm:$0xff]
      %v1065 = vld [vmem:[%s871 + $0x172] sm:$0xff]
      %v1066 = vperm.slane %v320, 0
      %v1067 = vmul.f32 %v1034, %v1066
      %v1068 = vmul.f32 %v1035, %v1066
      %v1069 = vmul.f32 %v1036, %v1066
      %v1070 = vmul.f32 %v1037, %v1066
      %v1071 = vmul.f32 %v1038, %v1066
      %v1072 = vmul.f32 %v1039, %v1066
      %v1073 = vmul.f32 %v1040, %v1066
      %v1074 = vmul.f32 %v1041, %v1066
      %v1075 = vmul.f32 %v1042, %v1066
      %v1076 = vmul.f32 %v1043, %v1066
      %v1077 = vmul.f32 %v1044, %v1066
      %v1078 = vmul.f32 %v1045, %v1066
      %v1079 = vmul.f32 %v1046, %v1066
      %v1080 = vmul.f32 %v1047, %v1066
      %v1081 = vmul.f32 %v1048, %v1066
      %v1082 = vmul.f32 %v1049, %v1066
      %v1083 = vmul.f32 %v1050, %v1066
      %v1084 = vmul.f32 %v1051, %v1066
      %v1085 = vmul.f32 %v1052, %v1066
      %v1086 = vmul.f32 %v1053, %v1066
      %v1087 = vmul.f32 %v1054, %v1066
      %v1088 = vmul.f32 %v1055, %v1066
      %v1089 = vmul.f32 %v1056, %v1066
      %v1090 = vmul.f32 %v1057, %v1066
      %v1091 = vmul.f32 %v1058, %v1066
      %v1092 = vmul.f32 %v1059, %v1066
      %v1093 = vmul.f32 %v1060, %v1066
      %v1094 = vmul.f32 %v1061, %v1066
      %v1095 = vmul.f32 %v1062, %v1066
      %v1096 = vmul.f32 %v1063, %v1066
      %v1097 = vmul.f32 %v1064, %v1066
      %v1098 = vmul.f32 %v1065, %v1066
      %v1099 = vadd.f32 %v1002, %v1067
      %v1100 = vadd.f32 %v1003, %v1068
      %v1101 = vadd.f32 %v1004, %v1069
      %v1102 = vadd.f32 %v1005, %v1070
      %v1103 = vadd.f32 %v1006, %v1071
      %v1104 = vadd.f32 %v1007, %v1072
      %v1105 = vadd.f32 %v1008, %v1073
      %v1106 = vadd.f32 %v1009, %v1074
      %v1107 = vadd.f32 %v1010, %v1075
      %v1108 = vadd.f32 %v1011, %v1076
      %v1109 = vadd.f32 %v1012, %v1077
      %v1110 = vadd.f32 %v1013, %v1078
      %v1111 = vadd.f32 %v1014, %v1079
      %v1112 = vadd.f32 %v1015, %v1080
      %v1113 = vadd.f32 %v1016, %v1081
      %v1114 = vadd.f32 %v1017, %v1082
      %v1115 = vadd.f32 %v1018, %v1083
      %v1116 = vadd.f32 %v1019, %v1084
      %v1117 = vadd.f32 %v1020, %v1085
      %v1118 = vadd.f32 %v1021, %v1086
      %v1119 = vadd.f32 %v1022, %v1087
      %v1120 = vadd.f32 %v1023, %v1088
      %v1121 = vadd.f32 %v1024, %v1089
      %v1122 = vadd.f32 %v1025, %v1090
      %v1123 = vadd.f32 %v1026, %v1091
      %v1124 = vadd.f32 %v1027, %v1092
      %v1125 = vadd.f32 %v1028, %v1093
      %v1126 = vadd.f32 %v1029, %v1094
      %v1127 = vadd.f32 %v1030, %v1095
      %v1128 = vadd.f32 %v1031, %v1096
      %v1129 = vadd.f32 %v1032, %v1097
      %v1130 = vadd.f32 %v1033, %v1098
      %v1131 = vadd.f32 %v839, %v1099
      %v1132 = vadd.f32 %v840, %v1100
      %v1133 = vadd.f32 %v841, %v1101
      %v1134 = vadd.f32 %v842, %v1102
      %v1135 = vadd.f32 %v843, %v1103
      %v1136 = vadd.f32 %v844, %v1104
      %v1137 = vadd.f32 %v845, %v1105
      %v1138 = vadd.f32 %v846, %v1106
      %v1139 = vadd.f32 %v847, %v1107
      %v1140 = vadd.f32 %v848, %v1108
      %v1141 = vadd.f32 %v849, %v1109
      %v1142 = vadd.f32 %v850, %v1110
      %v1143 = vadd.f32 %v851, %v1111
      %v1144 = vadd.f32 %v852, %v1112
      %v1145 = vadd.f32 %v853, %v1113
      %v1146 = vadd.f32 %v854, %v1114
      %v1147 = vadd.f32 %v855, %v1115
      %v1148 = vadd.f32 %v856, %v1116
      %v1149 = vadd.f32 %v857, %v1117
      %v1150 = vadd.f32 %v858, %v1118
      %v1151 = vadd.f32 %v859, %v1119
      %v1152 = vadd.f32 %v860, %v1120
      %v1153 = vadd.f32 %v861, %v1121
      %v1154 = vadd.f32 %v862, %v1122
      %v1155 = vadd.f32 %v863, %v1123
      %v1156 = vadd.f32 %v864, %v1124
      %v1157 = vadd.f32 %v865, %v1125
      %v1158 = vadd.f32 %v866, %v1126
      %v1159 = vadd.f32 %v867, %v1127
      %v1160 = vadd.f32 %v868, %v1128
      %v1161 = vadd.f32 %v869, %v1129
      %v1162 = vadd.f32 %v870, %v1130
      %v1163 = vperm.slane %v320, 1
      %v1164 = vadd.f32 %v1131, %v1163
      %v1165 = vadd.f32 %v1132, %v1163
      %v1166 = vadd.f32 %v1133, %v1163
      %v1167 = vadd.f32 %v1134, %v1163
      %v1168 = vadd.f32 %v1135, %v1163
      %v1169 = vadd.f32 %v1136, %v1163
      %v1170 = vadd.f32 %v1137, %v1163
      %v1171 = vadd.f32 %v1138, %v1163
      %v1172 = vadd.f32 %v1139, %v1163
      %v1173 = vadd.f32 %v1140, %v1163
      %v1174 = vadd.f32 %v1141, %v1163
      %v1175 = vadd.f32 %v1142, %v1163
      %v1176 = vadd.f32 %v1143, %v1163
      %v1177 = vadd.f32 %v1144, %v1163
      %v1178 = vadd.f32 %v1145, %v1163
      %v1179 = vadd.f32 %v1146, %v1163
      %v1180 = vadd.f32 %v1147, %v1163
      %v1181 = vadd.f32 %v1148, %v1163
      %v1182 = vadd.f32 %v1149, %v1163
      %v1183 = vadd.f32 %v1150, %v1163
      %v1184 = vadd.f32 %v1151, %v1163
      %v1185 = vadd.f32 %v1152, %v1163
      %v1186 = vadd.f32 %v1153, %v1163
      %v1187 = vadd.f32 %v1154, %v1163
      %v1188 = vadd.f32 %v1155, %v1163
      %v1189 = vadd.f32 %v1156, %v1163
      %v1190 = vadd.f32 %v1157, %v1163
      %v1191 = vadd.f32 %v1158, %v1163
      %v1192 = vadd.f32 %v1159, %v1163
      %v1193 = vadd.f32 %v1160, %v1163
      %v1194 = vadd.f32 %v1161, %v1163
      %v1195 = vadd.f32 %v1162, %v1163
      %v1196 = vmul.f32 %v1164, 0.5
      %v1197 = vmul.f32 %v1165, 0.5
      %v1198 = vmul.f32 %v1166, 0.5
      %v1199 = vmul.f32 %v1167, 0.5
      %v1200 = vmul.f32 %v1168, 0.5
      %v1201 = vmul.f32 %v1169, 0.5
      %v1202 = vmul.f32 %v1170, 0.5
      %v1203 = vmul.f32 %v1171, 0.5
      %v1204 = vmul.f32 %v1172, 0.5
      %v1205 = vmul.f32 %v1173, 0.5
      %v1206 = vmul.f32 %v1174, 0.5
      %v1207 = vmul.f32 %v1175, 0.5
      %v1208 = vmul.f32 %v1176, 0.5
      %v1209 = vmul.f32 %v1177, 0.5
      %v1210 = vmul.f32 %v1178, 0.5
      %v1211 = vmul.f32 %v1179, 0.5
      %v1212 = vmul.f32 %v1180, 0.5
      %v1213 = vmul.f32 %v1181, 0.5
      %v1214 = vmul.f32 %v1182, 0.5
      %v1215 = vmul.f32 %v1183, 0.5
      %v1216 = vmul.f32 %v1184, 0.5
      %v1217 = vmul.f32 %v1185, 0.5
      %v1218 = vmul.f32 %v1186, 0.5
      %v1219 = vmul.f32 %v1187, 0.5
      %v1220 = vmul.f32 %v1188, 0.5
      %v1221 = vmul.f32 %v1189, 0.5
      %v1222 = vmul.f32 %v1190, 0.5
      %v1223 = vmul.f32 %v1191, 0.5
      %v1224 = vmul.f32 %v1192, 0.5
      %v1225 = vmul.f32 %v1193, 0.5
      %v1226 = vmul.f32 %v1194, 0.5
      %v1227 = vmul.f32 %v1195, 0.5
      %v1228 = vmul.f32 %v1164, 0.70710677
      %v1229 = vmul.f32 %v1165, 0.70710677
      %v1230 = vmul.f32 %v1166, 0.70710677
      %v1231 = vmul.f32 %v1167, 0.70710677
      %v1232 = vmul.f32 %v1168, 0.70710677
      %v1233 = vmul.f32 %v1169, 0.70710677
      %v1234 = vmul.f32 %v1170, 0.70710677
      %v1235 = vmul.f32 %v1171, 0.70710677
      %v1236 = vmul.f32 %v1172, 0.70710677
      %v1237 = vmul.f32 %v1173, 0.70710677
      %v1238 = vmul.f32 %v1174, 0.70710677
      %v1239 = vmul.f32 %v1175, 0.70710677
      %v1240 = vmul.f32 %v1176, 0.70710677
      %v1241 = vmul.f32 %v1177, 0.70710677
      %v1242 = vmul.f32 %v1178, 0.70710677
      %v1243 = vmul.f32 %v1179, 0.70710677
      %v1244 = vmul.f32 %v1180, 0.70710677
      %v1245 = vmul.f32 %v1181, 0.70710677
      %v1246 = vmul.f32 %v1182, 0.70710677
      %v1247 = vmul.f32 %v1183, 0.70710677
      %v1248 = vmul.f32 %v1184, 0.70710677
      %v1249 = vmul.f32 %v1185, 0.70710677
      %v1250 = vmul.f32 %v1186, 0.70710677
      %v1251 = vmul.f32 %v1187, 0.70710677
      %v1252 = vmul.f32 %v1188, 0.70710677
      %v1253 = vmul.f32 %v1189, 0.70710677
      %v1254 = vmul.f32 %v1190, 0.70710677
      %v1255 = vmul.f32 %v1191, 0.70710677
      %v1256 = vmul.f32 %v1192, 0.70710677
      %v1257 = vmul.f32 %v1193, 0.70710677
      %v1258 = vmul.f32 %v1194, 0.70710677
      %v1259 = vmul.f32 %v1195, 0.70710677
      %v1260 = vmax.f32 %v1228, -4.0
      %v1261 = vmax.f32 %v1229, -4.0
      %v1262 = vmax.f32 %v1230, -4.0
      %v1263 = vmax.f32 %v1231, -4.0
      %v1264 = vmax.f32 %v1232, -4.0
      %v1265 = vmax.f32 %v1233, -4.0
      %v1266 = vmax.f32 %v1234, -4.0
      %v1267 = vmax.f32 %v1235, -4.0
      %v1268 = vmax.f32 %v1236, -4.0
      %v1269 = vmax.f32 %v1237, -4.0
      %v1270 = vmax.f32 %v1238, -4.0
      %v1271 = vmax.f32 %v1239, -4.0
      %v1272 = vmax.f32 %v1240, -4.0
      %v1273 = vmax.f32 %v1241, -4.0
      %v1274 = vmax.f32 %v1242, -4.0
      %v1275 = vmax.f32 %v1243, -4.0
      %v1276 = vmax.f32 %v1244, -4.0
      %v1277 = vmax.f32 %v1245, -4.0
      %v1278 = vmax.f32 %v1246, -4.0
      %v1279 = vmax.f32 %v1247, -4.0
      %v1280 = vmax.f32 %v1248, -4.0
      %v1281 = vmax.f32 %v1249, -4.0
      %v1282 = vmax.f32 %v1250, -4.0
      %v1283 = vmax.f32 %v1251, -4.0
      %v1284 = vmax.f32 %v1252, -4.0
      %v1285 = vmax.f32 %v1253, -4.0
      %v1286 = vmax.f32 %v1254, -4.0
      %v1287 = vmax.f32 %v1255, -4.0
      %v1288 = vmax.f32 %v1256, -4.0
      %v1289 = vmax.f32 %v1257, -4.0
      %v1290 = vmax.f32 %v1258, -4.0
      %v1291 = vmax.f32 %v1259, -4.0
      %v1292 = vmin.f32 %v1260, 4.0
      %v1293 = vmin.f32 %v1261, 4.0
      %v1294 = vmin.f32 %v1262, 4.0
      %v1295 = vmin.f32 %v1263, 4.0
      %v1296 = vmin.f32 %v1264, 4.0
      %v1297 = vmin.f32 %v1265, 4.0
      %v1298 = vmin.f32 %v1266, 4.0
      %v1299 = vmin.f32 %v1267, 4.0
      %v1300 = vmin.f32 %v1268, 4.0
      %v1301 = vmin.f32 %v1269, 4.0
      %v1302 = vmin.f32 %v1270, 4.0
      %v1303 = vmin.f32 %v1271, 4.0
      %v1304 = vmin.f32 %v1272, 4.0
      %v1305 = vmin.f32 %v1273, 4.0
      %v1306 = vmin.f32 %v1274, 4.0
      %v1307 = vmin.f32 %v1275, 4.0
      %v1308 = vmin.f32 %v1276, 4.0
      %v1309 = vmin.f32 %v1277, 4.0
      %v1310 = vmin.f32 %v1278, 4.0
      %v1311 = vmin.f32 %v1279, 4.0
      %v1312 = vmin.f32 %v1280, 4.0
      %v1313 = vmin.f32 %v1281, 4.0
      %v1314 = vmin.f32 %v1282, 4.0
      %v1315 = vmin.f32 %v1283, 4.0
      %v1316 = vmin.f32 %v1284, 4.0
      %v1317 = vmin.f32 %v1285, 4.0
      %v1318 = vmin.f32 %v1286, 4.0
      %v1319 = vmin.f32 %v1287, 4.0
      %v1320 = vmin.f32 %v1288, 4.0
      %v1321 = vmin.f32 %v1289, 4.0
      %v1322 = vmin.f32 %v1290, 4.0
      %v1323 = vmin.f32 %v1291, 4.0
      %v1324 = vmul.f32 %v1292, %v1292
      %v1325 = vmul.f32 %v1293, %v1293
      %v1326 = vmul.f32 %v1294, %v1294
      %v1327 = vmul.f32 %v1295, %v1295
      %v1328 = vmul.f32 %v1296, %v1296
      %v1329 = vmul.f32 %v1297, %v1297
      %v1330 = vmul.f32 %v1298, %v1298
      %v1331 = vmul.f32 %v1299, %v1299
      %v1332 = vmul.f32 %v1300, %v1300
      %v1333 = vmul.f32 %v1301, %v1301
      %v1334 = vmul.f32 %v1302, %v1302
      %v1335 = vmul.f32 %v1303, %v1303
      %v1336 = vmul.f32 %v1304, %v1304
      %v1337 = vmul.f32 %v1305, %v1305
      %v1338 = vmul.f32 %v1306, %v1306
      %v1339 = vmul.f32 %v1307, %v1307
      %v1340 = vmul.f32 %v1308, %v1308
      %v1341 = vmul.f32 %v1309, %v1309
      %v1342 = vmul.f32 %v1310, %v1310
      %v1343 = vmul.f32 %v1311, %v1311
      %v1344 = vmul.f32 %v1312, %v1312
      %v1345 = vmul.f32 %v1313, %v1313
      %v1346 = vmul.f32 %v1314, %v1314
      %v1347 = vmul.f32 %v1315, %v1315
      %v1348 = vmul.f32 %v1316, %v1316
      %v1349 = vmul.f32 %v1317, %v1317
      %v1350 = vmul.f32 %v1318, %v1318
      %v1351 = vmul.f32 %v1319, %v1319
      %v1352 = vmul.f32 %v1320, %v1320
      %v1353 = vmul.f32 %v1321, %v1321
      %v1354 = vmul.f32 %v1322, %v1322
      %v1355 = vmul.f32 %v1323, %v1323
      %v1356 = vmul.f32 %v1324, 0.00022905065
      %v1357 = vmul.f32 %v1325, 0.00022905065
      %v1358 = vmul.f32 %v1326, 0.00022905065
      %v1359 = vmul.f32 %v1327, 0.00022905065
      %v1360 = vmul.f32 %v1328, 0.00022905065
      %v1361 = vmul.f32 %v1329, 0.00022905065
      %v1362 = vmul.f32 %v1330, 0.00022905065
      %v1363 = vmul.f32 %v1331, 0.00022905065
      %v1364 = vmul.f32 %v1332, 0.00022905065
      %v1365 = vmul.f32 %v1333, 0.00022905065
      %v1366 = vmul.f32 %v1334, 0.00022905065
      %v1367 = vmul.f32 %v1335, 0.00022905065
      %v1368 = vmul.f32 %v1336, 0.00022905065
      %v1369 = vmul.f32 %v1337, 0.00022905065
      %v1370 = vmul.f32 %v1338, 0.00022905065
      %v1371 = vmul.f32 %v1339, 0.00022905065
      %v1372 = vmul.f32 %v1340, 0.00022905065
      %v1373 = vmul.f32 %v1341, 0.00022905065
      %v1374 = vmul.f32 %v1342, 0.00022905065
      %v1375 = vmul.f32 %v1343, 0.00022905065
      %v1376 = vmul.f32 %v1344, 0.00022905065
      %v1377 = vmul.f32 %v1345, 0.00022905065
      %v1378 = vmul.f32 %v1346, 0.00022905065
      %v1379 = vmul.f32 %v1347, 0.00022905065
      %v1380 = vmul.f32 %v1348, 0.00022905065
      %v1381 = vmul.f32 %v1349, 0.00022905065
      %v1382 = vmul.f32 %v1350, 0.00022905065
      %v1383 = vmul.f32 %v1351, 0.00022905065
      %v1384 = vmul.f32 %v1352, 0.00022905065
      %v1385 = vmul.f32 %v1353, 0.00022905065
      %v1386 = vmul.f32 %v1354, 0.00022905065
      %v1387 = vmul.f32 %v1355, 0.00022905065
      %v1388 = vadd.f32 %v1356, 0.003408291
      %v1389 = vadd.f32 %v1357, 0.003408291
      %v1390 = vadd.f32 %v1358, 0.003408291
      %v1391 = vadd.f32 %v1359, 0.003408291
      %v1392 = vadd.f32 %v1360, 0.003408291
      %v1393 = vadd.f32 %v1361, 0.003408291
      %v1394 = vadd.f32 %v1362, 0.003408291
      %v1395 = vadd.f32 %v1363, 0.003408291
      %v1396 = vadd.f32 %v1364, 0.003408291
      %v1397 = vadd.f32 %v1365, 0.003408291
      %v1398 = vadd.f32 %v1366, 0.003408291
      %v1399 = vadd.f32 %v1367, 0.003408291
      %v1400 = vadd.f32 %v1368, 0.003408291
      %v1401 = vadd.f32 %v1369, 0.003408291
      %v1402 = vadd.f32 %v1370, 0.003408291
      %v1403 = vadd.f32 %v1371, 0.003408291
      %v1404 = vadd.f32 %v1372, 0.003408291
      %v1405 = vadd.f32 %v1373, 0.003408291
      %v1406 = vadd.f32 %v1374, 0.003408291
      %v1407 = vadd.f32 %v1375, 0.003408291
      %v1408 = vadd.f32 %v1376, 0.003408291
      %v1409 = vadd.f32 %v1377, 0.003408291
      %v1410 = vadd.f32 %v1378, 0.003408291
      %v1411 = vadd.f32 %v1379, 0.003408291
      %v1412 = vadd.f32 %v1380, 0.003408291
      %v1413 = vadd.f32 %v1381, 0.003408291
      %v1414 = vadd.f32 %v1382, 0.003408291
      %v1415 = vadd.f32 %v1383, 0.003408291
      %v1416 = vadd.f32 %v1384, 0.003408291
      %v1417 = vadd.f32 %v1385, 0.003408291
      %v1418 = vadd.f32 %v1386, 0.003408291
      %v1419 = vadd.f32 %v1387, 0.003408291
      %v1420 = vmul.f32 %v1388, %v1324
      %v1421 = vmul.f32 %v1389, %v1325
      %v1422 = vmul.f32 %v1390, %v1326
      %v1423 = vmul.f32 %v1391, %v1327
      %v1424 = vmul.f32 %v1392, %v1328
      %v1425 = vmul.f32 %v1393, %v1329
      %v1426 = vmul.f32 %v1394, %v1330
      %v1427 = vmul.f32 %v1395, %v1331
      %v1428 = vmul.f32 %v1396, %v1332
      %v1429 = vmul.f32 %v1397, %v1333
      %v1430 = vmul.f32 %v1398, %v1334
      %v1431 = vmul.f32 %v1399, %v1335
      %v1432 = vmul.f32 %v1400, %v1336
      %v1433 = vmul.f32 %v1401, %v1337
      %v1434 = vmul.f32 %v1402, %v1338
      %v1435 = vmul.f32 %v1403, %v1339
      %v1436 = vmul.f32 %v1404, %v1340
      %v1437 = vmul.f32 %v1405, %v1341
      %v1438 = vmul.f32 %v1406, %v1342
      %v1439 = vmul.f32 %v1407, %v1343
      %v1440 = vmul.f32 %v1408, %v1344
      %v1441 = vmul.f32 %v1409, %v1345
      %v1442 = vmul.f32 %v1410, %v1346
      %v1443 = vmul.f32 %v1411, %v1347
      %v1444 = vmul.f32 %v1412, %v1348
      %v1445 = vmul.f32 %v1413, %v1349
      %v1446 = vmul.f32 %v1414, %v1350
      %v1447 = vmul.f32 %v1415, %v1351
      %v1448 = vmul.f32 %v1416, %v1352
      %v1449 = vmul.f32 %v1417, %v1353
      %v1450 = vmul.f32 %v1418, %v1354
      %v1451 = vmul.f32 %v1419, %v1355
      %v1452 = vadd.f32 %v1420, 0.050955694
      %v1453 = vadd.f32 %v1421, 0.050955694
      %v1454 = vadd.f32 %v1422, 0.050955694
      %v1455 = vadd.f32 %v1423, 0.050955694
      %v1456 = vadd.f32 %v1424, 0.050955694
      %v1457 = vadd.f32 %v1425, 0.050955694
      %v1458 = vadd.f32 %v1426, 0.050955694
      %v1459 = vadd.f32 %v1427, 0.050955694
      %v1460 = vadd.f32 %v1428, 0.050955694
      %v1461 = vadd.f32 %v1429, 0.050955694
      %v1462 = vadd.f32 %v1430, 0.050955694
      %v1463 = vadd.f32 %v1431, 0.050955694
      %v1464 = vadd.f32 %v1432, 0.050955694
      %v1465 = vadd.f32 %v1433, 0.050955694
      %v1466 = vadd.f32 %v1434, 0.050955694
      %v1467 = vadd.f32 %v1435, 0.050955694
      %v1468 = vadd.f32 %v1436, 0.050955694
      %v1469 = vadd.f32 %v1437, 0.050955694
      %v1470 = vadd.f32 %v1438, 0.050955694
      %v1471 = vadd.f32 %v1439, 0.050955694
      %v1472 = vadd.f32 %v1440, 0.050955694
      %v1473 = vadd.f32 %v1441, 0.050955694
      %v1474 = vadd.f32 %v1442, 0.050955694
      %v1475 = vadd.f32 %v1443, 0.050955694
      %v1476 = vadd.f32 %v1444, 0.050955694
      %v1477 = vadd.f32 %v1445, 0.050955694
      %v1478 = vadd.f32 %v1446, 0.050955694
      %v1479 = vadd.f32 %v1447, 0.050955694
      %v1480 = vadd.f32 %v1448, 0.050955694
      %v1481 = vadd.f32 %v1449, 0.050955694
      %v1482 = vadd.f32 %v1450, 0.050955694
      %v1483 = vadd.f32 %v1451, 0.050955694
      %v1484 = vmul.f32 %v1452, %v1324
      %v1485 = vmul.f32 %v1453, %v1325
      %v1486 = vmul.f32 %v1454, %v1326
      %v1487 = vmul.f32 %v1455, %v1327
      %v1488 = vmul.f32 %v1456, %v1328
      %v1489 = vmul.f32 %v1457, %v1329
      %v1490 = vmul.f32 %v1458, %v1330
      %v1491 = vmul.f32 %v1459, %v1331
      %v1492 = vmul.f32 %v1460, %v1332
      %v1493 = vmul.f32 %v1461, %v1333
      %v1494 = vmul.f32 %v1462, %v1334
      %v1495 = vmul.f32 %v1463, %v1335
      %v1496 = vmul.f32 %v1464, %v1336
      %v1497 = vmul.f32 %v1465, %v1337
      %v1498 = vmul.f32 %v1466, %v1338
      %v1499 = vmul.f32 %v1467, %v1339
      %v1500 = vmul.f32 %v1468, %v1340
      %v1501 = vmul.f32 %v1469, %v1341
      %v1502 = vmul.f32 %v1470, %v1342
      %v1503 = vmul.f32 %v1471, %v1343
      %v1504 = vmul.f32 %v1472, %v1344
      %v1505 = vmul.f32 %v1473, %v1345
      %v1506 = vmul.f32 %v1474, %v1346
      %v1507 = vmul.f32 %v1475, %v1347
      %v1508 = vmul.f32 %v1476, %v1348
      %v1509 = vmul.f32 %v1477, %v1349
      %v1510 = vmul.f32 %v1478, %v1350
      %v1511 = vmul.f32 %v1479, %v1351
      %v1512 = vmul.f32 %v1480, %v1352
      %v1513 = vmul.f32 %v1481, %v1353
      %v1514 = vmul.f32 %v1482, %v1354
      %v1515 = vmul.f32 %v1483, %v1355
      %v1516 = vadd.f32 %v1484, 0.18520832
      %v1517 = vadd.f32 %v1485, 0.18520832
      %v1518 = vadd.f32 %v1486, 0.18520832
      %v1519 = vadd.f32 %v1487, 0.18520832
      %v1520 = vadd.f32 %v1488, 0.18520832
      %v1521 = vadd.f32 %v1489, 0.18520832
      %v1522 = vadd.f32 %v1490, 0.18520832
      %v1523 = vadd.f32 %v1491, 0.18520832
      %v1524 = vadd.f32 %v1492, 0.18520832
      %v1525 = vadd.f32 %v1493, 0.18520832
      %v1526 = vadd.f32 %v1494, 0.18520832
      %v1527 = vadd.f32 %v1495, 0.18520832
      %v1528 = vadd.f32 %v1496, 0.18520832
      %v1529 = vadd.f32 %v1497, 0.18520832
      %v1530 = vadd.f32 %v1498, 0.18520832
      %v1531 = vadd.f32 %v1499, 0.18520832
      %v1532 = vadd.f32 %v1500, 0.18520832
      %v1533 = vadd.f32 %v1501, 0.18520832
      %v1534 = vadd.f32 %v1502, 0.18520832
      %v1535 = vadd.f32 %v1503, 0.18520832
      %v1536 = vadd.f32 %v1504, 0.18520832
      %v1537 = vadd.f32 %v1505, 0.18520832
      %v1538 = vadd.f32 %v1506, 0.18520832
      %v1539 = vadd.f32 %v1507, 0.18520832
      %v1540 = vadd.f32 %v1508, 0.18520832
      %v1541 = vadd.f32 %v1509, 0.18520832
      %v1542 = vadd.f32 %v1510, 0.18520832
      %v1543 = vadd.f32 %v1511, 0.18520832
      %v1544 = vadd.f32 %v1512, 0.18520832
      %v1545 = vadd.f32 %v1513, 0.18520832
      %v1546 = vadd.f32 %v1514, 0.18520832
      %v1547 = vadd.f32 %v1515, 0.18520832
      %v1548 = vmul.f32 %v1516, %v1324
      %v1549 = vmul.f32 %v1517, %v1325
      %v1550 = vmul.f32 %v1518, %v1326
      %v1551 = vmul.f32 %v1519, %v1327
      %v1552 = vmul.f32 %v1520, %v1328
      %v1553 = vmul.f32 %v1521, %v1329
      %v1554 = vmul.f32 %v1522, %v1330
      %v1555 = vmul.f32 %v1523, %v1331
      %v1556 = vmul.f32 %v1524, %v1332
      %v1557 = vmul.f32 %v1525, %v1333
      %v1558 = vmul.f32 %v1526, %v1334
      %v1559 = vmul.f32 %v1527, %v1335
      %v1560 = vmul.f32 %v1528, %v1336
      %v1561 = vmul.f32 %v1529, %v1337
      %v1562 = vmul.f32 %v1530, %v1338
      %v1563 = vmul.f32 %v1531, %v1339
      %v1564 = vmul.f32 %v1532, %v1340
      %v1565 = vmul.f32 %v1533, %v1341
      %v1566 = vmul.f32 %v1534, %v1342
      %v1567 = vmul.f32 %v1535, %v1343
      %v1568 = vmul.f32 %v1536, %v1344
      %v1569 = vmul.f32 %v1537, %v1345
      %v1570 = vmul.f32 %v1538, %v1346
      %v1571 = vmul.f32 %v1539, %v1347
      %v1572 = vmul.f32 %v1540, %v1348
      %v1573 = vmul.f32 %v1541, %v1349
      %v1574 = vmul.f32 %v1542, %v1350
      %v1575 = vmul.f32 %v1543, %v1351
      %v1576 = vmul.f32 %v1544, %v1352
      %v1577 = vmul.f32 %v1545, %v1353
      %v1578 = vmul.f32 %v1546, %v1354
      %v1579 = vmul.f32 %v1547, %v1355
      %v1580 = vadd.f32 %v1548, 1.1283791
      %v1581 = vadd.f32 %v1549, 1.1283791
      %v1582 = vadd.f32 %v1550, 1.1283791
      %v1583 = vadd.f32 %v1551, 1.1283791
      %v1584 = vadd.f32 %v1552, 1.1283791
      %v1585 = vadd.f32 %v1553, 1.1283791
      %v1586 = vadd.f32 %v1554, 1.1283791
      %v1587 = vadd.f32 %v1555, 1.1283791
      %v1588 = vadd.f32 %v1556, 1.1283791
      %v1589 = vadd.f32 %v1557, 1.1283791
      %v1590 = vadd.f32 %v1558, 1.1283791
      %v1591 = vadd.f32 %v1559, 1.1283791
      %v1592 = vadd.f32 %v1560, 1.1283791
      %v1593 = vadd.f32 %v1561, 1.1283791
      %v1594 = vadd.f32 %v1562, 1.1283791
      %v1595 = vadd.f32 %v1563, 1.1283791
      %v1596 = vadd.f32 %v1564, 1.1283791
      %v1597 = vadd.f32 %v1565, 1.1283791
      %v1598 = vadd.f32 %v1566, 1.1283791
      %v1599 = vadd.f32 %v1567, 1.1283791
      %v1600 = vadd.f32 %v1568, 1.1283791
      %v1601 = vadd.f32 %v1569, 1.1283791
      %v1602 = vadd.f32 %v1570, 1.1283791
      %v1603 = vadd.f32 %v1571, 1.1283791
      %v1604 = vadd.f32 %v1572, 1.1283791
      %v1605 = vadd.f32 %v1573, 1.1283791
      %v1606 = vadd.f32 %v1574, 1.1283791
      %v1607 = vadd.f32 %v1575, 1.1283791
      %v1608 = vadd.f32 %v1576, 1.1283791
      %v1609 = vadd.f32 %v1577, 1.1283791
      %v1610 = vadd.f32 %v1578, 1.1283791
      %v1611 = vadd.f32 %v1579, 1.1283791
      %v1612 = vmul.f32 %v1324, -1.1791603e-07
      %v1613 = vmul.f32 %v1325, -1.1791603e-07
      %v1614 = vmul.f32 %v1326, -1.1791603e-07
      %v1615 = vmul.f32 %v1327, -1.1791603e-07
      %v1616 = vmul.f32 %v1328, -1.1791603e-07
      %v1617 = vmul.f32 %v1329, -1.1791603e-07
      %v1618 = vmul.f32 %v1330, -1.1791603e-07
      %v1619 = vmul.f32 %v1331, -1.1791603e-07
      %v1620 = vmul.f32 %v1332, -1.1791603e-07
      %v1621 = vmul.f32 %v1333, -1.1791603e-07
      %v1622 = vmul.f32 %v1334, -1.1791603e-07
      %v1623 = vmul.f32 %v1335, -1.1791603e-07
      %v1624 = vmul.f32 %v1336, -1.1791603e-07
      %v1625 = vmul.f32 %v1337, -1.1791603e-07
      %v1626 = vmul.f32 %v1338, -1.1791603e-07
      %v1627 = vmul.f32 %v1339, -1.1791603e-07
      %v1628 = vmul.f32 %v1340, -1.1791603e-07
      %v1629 = vmul.f32 %v1341, -1.1791603e-07
      %v1630 = vmul.f32 %v1342, -1.1791603e-07
      %v1631 = vmul.f32 %v1343, -1.1791603e-07
      %v1632 = vmul.f32 %v1344, -1.1791603e-07
      %v1633 = vmul.f32 %v1345, -1.1791603e-07
      %v1634 = vmul.f32 %v1346, -1.1791603e-07
      %v1635 = vmul.f32 %v1347, -1.1791603e-07
      %v1636 = vmul.f32 %v1348, -1.1791603e-07
      %v1637 = vmul.f32 %v1349, -1.1791603e-07
      %v1638 = vmul.f32 %v1350, -1.1791603e-07
      %v1639 = vmul.f32 %v1351, -1.1791603e-07
      %v1640 = vmul.f32 %v1352, -1.1791603e-07
      %v1641 = vmul.f32 %v1353, -1.1791603e-07
      %v1642 = vmul.f32 %v1354, -1.1791603e-07
      %v1643 = vmul.f32 %v1355, -1.1791603e-07
      %v1644 = vadd.f32 %v1612, 2.3547966e-05
      %v1645 = vadd.f32 %v1613, 2.3547966e-05
      %v1646 = vadd.f32 %v1614, 2.3547966e-05
      %v1647 = vadd.f32 %v1615, 2.3547966e-05
      %v1648 = vadd.f32 %v1616, 2.3547966e-05
      %v1649 = vadd.f32 %v1617, 2.3547966e-05
      %v1650 = vadd.f32 %v1618, 2.3547966e-05
      %v1651 = vadd.f32 %v1619, 2.3547966e-05
      %v1652 = vadd.f32 %v1620, 2.3547966e-05
      %v1653 = vadd.f32 %v1621, 2.3547966e-05
      %v1654 = vadd.f32 %v1622, 2.3547966e-05
      %v1655 = vadd.f32 %v1623, 2.3547966e-05
      %v1656 = vadd.f32 %v1624, 2.3547966e-05
      %v1657 = vadd.f32 %v1625, 2.3547966e-05
      %v1658 = vadd.f32 %v1626, 2.3547966e-05
      %v1659 = vadd.f32 %v1627, 2.3547966e-05
      %v1660 = vadd.f32 %v1628, 2.3547966e-05
      %v1661 = vadd.f32 %v1629, 2.3547966e-05
      %v1662 = vadd.f32 %v1630, 2.3547966e-05
      %v1663 = vadd.f32 %v1631, 2.3547966e-05
      %v1664 = vadd.f32 %v1632, 2.3547966e-05
      %v1665 = vadd.f32 %v1633, 2.3547966e-05
      %v1666 = vadd.f32 %v1634, 2.3547966e-05
      %v1667 = vadd.f32 %v1635, 2.3547966e-05
      %v1668 = vadd.f32 %v1636, 2.3547966e-05
      %v1669 = vadd.f32 %v1637, 2.3547966e-05
      %v1670 = vadd.f32 %v1638, 2.3547966e-05
      %v1671 = vadd.f32 %v1639, 2.3547966e-05
      %v1672 = vadd.f32 %v1640, 2.3547966e-05
      %v1673 = vadd.f32 %v1641, 2.3547966e-05
      %v1674 = vadd.f32 %v1642, 2.3547966e-05
      %v1675 = vadd.f32 %v1643, 2.3547966e-05
      %v1676 = vmul.f32 %v1644, %v1324
      %v1677 = vmul.f32 %v1645, %v1325
      %v1678 = vmul.f32 %v1646, %v1326
      %v1679 = vmul.f32 %v1647, %v1327
      %v1680 = vmul.f32 %v1648, %v1328
      %v1681 = vmul.f32 %v1649, %v1329
      %v1682 = vmul.f32 %v1650, %v1330
      %v1683 = vmul.f32 %v1651, %v1331
      %v1684 = vmul.f32 %v1652, %v1332
      %v1685 = vmul.f32 %v1653, %v1333
      %v1686 = vmul.f32 %v1654, %v1334
      %v1687 = vmul.f32 %v1655, %v1335
      %v1688 = vmul.f32 %v1656, %v1336
      %v1689 = vmul.f32 %v1657, %v1337
      %v1690 = vmul.f32 %v1658, %v1338
      %v1691 = vmul.f32 %v1659, %v1339
      %v1692 = vmul.f32 %v1660, %v1340
      %v1693 = vmul.f32 %v1661, %v1341
      %v1694 = vmul.f32 %v1662, %v1342
      %v1695 = vmul.f32 %v1663, %v1343
      %v1696 = vmul.f32 %v1664, %v1344
      %v1697 = vmul.f32 %v1665, %v1345
      %v1698 = vmul.f32 %v1666, %v1346
      %v1699 = vmul.f32 %v1667, %v1347
      %v1700 = vmul.f32 %v1668, %v1348
      %v1701 = vmul.f32 %v1669, %v1349
      %v1702 = vmul.f32 %v1670, %v1350
      %v1703 = vmul.f32 %v1671, %v1351
      %v1704 = vmul.f32 %v1672, %v1352
      %v1705 = vmul.f32 %v1673, %v1353
      %v1706 = vmul.f32 %v1674, %v1354
      %v1707 = vmul.f32 %v1675, %v1355
      %v1708 = vadd.f32 %v1676, 0.0010179626
      %v1709 = vadd.f32 %v1677, 0.0010179626
      %v1710 = vadd.f32 %v1678, 0.0010179626
      %v1711 = vadd.f32 %v1679, 0.0010179626
      %v1712 = vadd.f32 %v1680, 0.0010179626
      %v1713 = vadd.f32 %v1681, 0.0010179626
      %v1714 = vadd.f32 %v1682, 0.0010179626
      %v1715 = vadd.f32 %v1683, 0.0010179626
      %v1716 = vadd.f32 %v1684, 0.0010179626
      %v1717 = vadd.f32 %v1685, 0.0010179626
      %v1718 = vadd.f32 %v1686, 0.0010179626
      %v1719 = vadd.f32 %v1687, 0.0010179626
      %v1720 = vadd.f32 %v1688, 0.0010179626
      %v1721 = vadd.f32 %v1689, 0.0010179626
      %v1722 = vadd.f32 %v1690, 0.0010179626
      %v1723 = vadd.f32 %v1691, 0.0010179626
      %v1724 = vadd.f32 %v1692, 0.0010179626
      %v1725 = vadd.f32 %v1693, 0.0010179626
      %v1726 = vadd.f32 %v1694, 0.0010179626
      %v1727 = vadd.f32 %v1695, 0.0010179626
      %v1728 = vadd.f32 %v1696, 0.0010179626
      %v1729 = vadd.f32 %v1697, 0.0010179626
      %v1730 = vadd.f32 %v1698, 0.0010179626
      %v1731 = vadd.f32 %v1699, 0.0010179626
      %v1732 = vadd.f32 %v1700, 0.0010179626
      %v1733 = vadd.f32 %v1701, 0.0010179626
      %v1734 = vadd.f32 %v1702, 0.0010179626
      %v1735 = vadd.f32 %v1703, 0.0010179626
      %v1736 = vadd.f32 %v1704, 0.0010179626
      %v1737 = vadd.f32 %v1705, 0.0010179626
      %v1738 = vadd.f32 %v1706, 0.0010179626
      %v1739 = vadd.f32 %v1707, 0.0010179626
      %v1740 = vmul.f32 %v1708, %v1324
      %v1741 = vmul.f32 %v1709, %v1325
      %v1742 = vmul.f32 %v1710, %v1326
      %v1743 = vmul.f32 %v1711, %v1327
      %v1744 = vmul.f32 %v1712, %v1328
      %v1745 = vmul.f32 %v1713, %v1329
      %v1746 = vmul.f32 %v1714, %v1330
      %v1747 = vmul.f32 %v1715, %v1331
      %v1748 = vmul.f32 %v1716, %v1332
      %v1749 = vmul.f32 %v1717, %v1333
      %v1750 = vmul.f32 %v1718, %v1334
      %v1751 = vmul.f32 %v1719, %v1335
      %v1752 = vmul.f32 %v1720, %v1336
      %v1753 = vmul.f32 %v1721, %v1337
      %v1754 = vmul.f32 %v1722, %v1338
      %v1755 = vmul.f32 %v1723, %v1339
      %v1756 = vmul.f32 %v1724, %v1340
      %v1757 = vmul.f32 %v1725, %v1341
      %v1758 = vmul.f32 %v1726, %v1342
      %v1759 = vmul.f32 %v1727, %v1343
      %v1760 = vmul.f32 %v1728, %v1344
      %v1761 = vmul.f32 %v1729, %v1345
      %v1762 = vmul.f32 %v1730, %v1346
      %v1763 = vmul.f32 %v1731, %v1347
      %v1764 = vmul.f32 %v1732, %v1348
      %v1765 = vmul.f32 %v1733, %v1349
      %v1766 = vmul.f32 %v1734, %v1350
      %v1767 = vmul.f32 %v1735, %v1351
      %v1768 = vmul.f32 %v1736, %v1352
      %v1769 = vmul.f32 %v1737, %v1353
      %v1770 = vmul.f32 %v1738, %v1354
      %v1771 = vmul.f32 %v1739, %v1355
      %v1772 = vadd.f32 %v1740, 0.01407047
      %v1773 = vadd.f32 %v1741, 0.01407047
      %v1774 = vadd.f32 %v1742, 0.01407047
      %v1775 = vadd.f32 %v1743, 0.01407047
      %v1776 = vadd.f32 %v1744, 0.01407047
      %v1777 = vadd.f32 %v1745, 0.01407047
      %v1778 = vadd.f32 %v1746, 0.01407047
      %v1779 = vadd.f32 %v1747, 0.01407047
      %v1780 = vadd.f32 %v1748, 0.01407047
      %v1781 = vadd.f32 %v1749, 0.01407047
      %v1782 = vadd.f32 %v1750, 0.01407047
      %v1783 = vadd.f32 %v1751, 0.01407047
      %v1784 = vadd.f32 %v1752, 0.01407047
      %v1785 = vadd.f32 %v1753, 0.01407047
      %v1786 = vadd.f32 %v1754, 0.01407047
      %v1787 = vadd.f32 %v1755, 0.01407047
      %v1788 = vadd.f32 %v1756, 0.01407047
      %v1789 = vadd.f32 %v1757, 0.01407047
      %v1790 = vadd.f32 %v1758, 0.01407047
      %v1791 = vadd.f32 %v1759, 0.01407047
      %v1792 = vadd.f32 %v1760, 0.01407047
      %v1793 = vadd.f32 %v1761, 0.01407047
      %v1794 = vadd.f32 %v1762, 0.01407047
      %v1795 = vadd.f32 %v1763, 0.01407047
      %v1796 = vadd.f32 %v1764, 0.01407047
      %v1797 = vadd.f32 %v1765, 0.01407047
      %v1798 = vadd.f32 %v1766, 0.01407047
      %v1799 = vadd.f32 %v1767, 0.01407047
      %v1800 = vadd.f32 %v1768, 0.01407047
      %v1801 = vadd.f32 %v1769, 0.01407047
      %v1802 = vadd.f32 %v1770, 0.01407047
      %v1803 = vadd.f32 %v1771, 0.01407047
      %v1804 = vmul.f32 %v1772, %v1324
      %v1805 = vmul.f32 %v1773, %v1325
      %v1806 = vmul.f32 %v1774, %v1326
      %v1807 = vmul.f32 %v1775, %v1327
      %v1808 = vmul.f32 %v1776, %v1328
      %v1809 = vmul.f32 %v1777, %v1329
      %v1810 = vmul.f32 %v1778, %v1330
      %v1811 = vmul.f32 %v1779, %v1331
      %v1812 = vmul.f32 %v1780, %v1332
      %v1813 = vmul.f32 %v1781, %v1333
      %v1814 = vmul.f32 %v1782, %v1334
      %v1815 = vmul.f32 %v1783, %v1335
      %v1816 = vmul.f32 %v1784, %v1336
      %v1817 = vmul.f32 %v1785, %v1337
      %v1818 = vmul.f32 %v1786, %v1338
      %v1819 = vmul.f32 %v1787, %v1339
      %v1820 = vmul.f32 %v1788, %v1340
      %v1821 = vmul.f32 %v1789, %v1341
      %v1822 = vmul.f32 %v1790, %v1342
      %v1823 = vmul.f32 %v1791, %v1343
      %v1824 = vmul.f32 %v1792, %v1344
      %v1825 = vmul.f32 %v1793, %v1345
      %v1826 = vmul.f32 %v1794, %v1346
      %v1827 = vmul.f32 %v1795, %v1347
      %v1828 = vmul.f32 %v1796, %v1348
      %v1829 = vmul.f32 %v1797, %v1349
      %v1830 = vmul.f32 %v1798, %v1350
      %v1831 = vmul.f32 %v1799, %v1351
      %v1832 = vmul.f32 %v1800, %v1352
      %v1833 = vmul.f32 %v1801, %v1353
      %v1834 = vmul.f32 %v1802, %v1354
      %v1835 = vmul.f32 %v1803, %v1355
      %v1836 = vadd.f32 %v1804, 0.11098505
      %v1837 = vadd.f32 %v1805, 0.11098505
      %v1838 = vadd.f32 %v1806, 0.11098505
      %v1839 = vadd.f32 %v1807, 0.11098505
      %v1840 = vadd.f32 %v1808, 0.11098505
      %v1841 = vadd.f32 %v1809, 0.11098505
      %v1842 = vadd.f32 %v1810, 0.11098505
      %v1843 = vadd.f32 %v1811, 0.11098505
      %v1844 = vadd.f32 %v1812, 0.11098505
      %v1845 = vadd.f32 %v1813, 0.11098505
      %v1846 = vadd.f32 %v1814, 0.11098505
      %v1847 = vadd.f32 %v1815, 0.11098505
      %v1848 = vadd.f32 %v1816, 0.11098505
      %v1849 = vadd.f32 %v1817, 0.11098505
      %v1850 = vadd.f32 %v1818, 0.11098505
      %v1851 = vadd.f32 %v1819, 0.11098505
      %v1852 = vadd.f32 %v1820, 0.11098505
      %v1853 = vadd.f32 %v1821, 0.11098505
      %v1854 = vadd.f32 %v1822, 0.11098505
      %v1855 = vadd.f32 %v1823, 0.11098505
      %v1856 = vadd.f32 %v1824, 0.11098505
      %v1857 = vadd.f32 %v1825, 0.11098505
      %v1858 = vadd.f32 %v1826, 0.11098505
      %v1859 = vadd.f32 %v1827, 0.11098505
      %v1860 = vadd.f32 %v1828, 0.11098505
      %v1861 = vadd.f32 %v1829, 0.11098505
      %v1862 = vadd.f32 %v1830, 0.11098505
      %v1863 = vadd.f32 %v1831, 0.11098505
      %v1864 = vadd.f32 %v1832, 0.11098505
      %v1865 = vadd.f32 %v1833, 0.11098505
      %v1866 = vadd.f32 %v1834, 0.11098505
      %v1867 = vadd.f32 %v1835, 0.11098505
      %v1868 = vmul.f32 %v1836, %v1324
      %v1869 = vmul.f32 %v1837, %v1325
      %v1870 = vmul.f32 %v1838, %v1326
      %v1871 = vmul.f32 %v1839, %v1327
      %v1872 = vmul.f32 %v1840, %v1328
      %v1873 = vmul.f32 %v1841, %v1329
      %v1874 = vmul.f32 %v1842, %v1330
      %v1875 = vmul.f32 %v1843, %v1331
      %v1876 = vmul.f32 %v1844, %v1332
      %v1877 = vmul.f32 %v1845, %v1333
      %v1878 = vmul.f32 %v1846, %v1334
      %v1879 = vmul.f32 %v1847, %v1335
      %v1880 = vmul.f32 %v1848, %v1336
      %v1881 = vmul.f32 %v1849, %v1337
      %v1882 = vmul.f32 %v1850, %v1338
      %v1883 = vmul.f32 %v1851, %v1339
      %v1884 = vmul.f32 %v1852, %v1340
      %v1885 = vmul.f32 %v1853, %v1341
      %v1886 = vmul.f32 %v1854, %v1342
      %v1887 = vmul.f32 %v1855, %v1343
      %v1888 = vmul.f32 %v1856, %v1344
      %v1889 = vmul.f32 %v1857, %v1345
      %v1890 = vmul.f32 %v1858, %v1346
      %v1891 = vmul.f32 %v1859, %v1347
      %v1892 = vmul.f32 %v1860, %v1348
      %v1893 = vmul.f32 %v1861, %v1349
      %v1894 = vmul.f32 %v1862, %v1350
      %v1895 = vmul.f32 %v1863, %v1351
      %v1896 = vmul.f32 %v1864, %v1352
      %v1897 = vmul.f32 %v1865, %v1353
      %v1898 = vmul.f32 %v1866, %v1354
      %v1899 = vmul.f32 %v1867, %v1355
      %v1900 = vadd.f32 %v1868, 0.49746925
      %v1901 = vadd.f32 %v1869, 0.49746925
      %v1902 = vadd.f32 %v1870, 0.49746925
      %v1903 = vadd.f32 %v1871, 0.49746925
      %v1904 = vadd.f32 %v1872, 0.49746925
      %v1905 = vadd.f32 %v1873, 0.49746925
      %v1906 = vadd.f32 %v1874, 0.49746925
      %v1907 = vadd.f32 %v1875, 0.49746925
      %v1908 = vadd.f32 %v1876, 0.49746925
      %v1909 = vadd.f32 %v1877, 0.49746925
      %v1910 = vadd.f32 %v1878, 0.49746925
      %v1911 = vadd.f32 %v1879, 0.49746925
      %v1912 = vadd.f32 %v1880, 0.49746925
      %v1913 = vadd.f32 %v1881, 0.49746925
      %v1914 = vadd.f32 %v1882, 0.49746925
      %v1915 = vadd.f32 %v1883, 0.49746925
      %v1916 = vadd.f32 %v1884, 0.49746925
      %v1917 = vadd.f32 %v1885, 0.49746925
      %v1918 = vadd.f32 %v1886, 0.49746925
      %v1919 = vadd.f32 %v1887, 0.49746925
      %v1920 = vadd.f32 %v1888, 0.49746925
      %v1921 = vadd.f32 %v1889, 0.49746925
      %v1922 = vadd.f32 %v1890, 0.49746925
      %v1923 = vadd.f32 %v1891, 0.49746925
      %v1924 = vadd.f32 %v1892, 0.49746925
      %v1925 = vadd.f32 %v1893, 0.49746925
      %v1926 = vadd.f32 %v1894, 0.49746925
      %v1927 = vadd.f32 %v1895, 0.49746925
      %v1928 = vadd.f32 %v1896, 0.49746925
      %v1929 = vadd.f32 %v1897, 0.49746925
      %v1930 = vadd.f32 %v1898, 0.49746925
      %v1931 = vadd.f32 %v1899, 0.49746925
      %v1932 = vmul.f32 %v1900, %v1324
      %v1933 = vmul.f32 %v1901, %v1325
      %v1934 = vmul.f32 %v1902, %v1326
      %v1935 = vmul.f32 %v1903, %v1327
      %v1936 = vmul.f32 %v1904, %v1328
      %v1937 = vmul.f32 %v1905, %v1329
      %v1938 = vmul.f32 %v1906, %v1330
      %v1939 = vmul.f32 %v1907, %v1331
      %v1940 = vmul.f32 %v1908, %v1332
      %v1941 = vmul.f32 %v1909, %v1333
      %v1942 = vmul.f32 %v1910, %v1334
      %v1943 = vmul.f32 %v1911, %v1335
      %v1944 = vmul.f32 %v1912, %v1336
      %v1945 = vmul.f32 %v1913, %v1337
      %v1946 = vmul.f32 %v1914, %v1338
      %v1947 = vmul.f32 %v1915, %v1339
      %v1948 = vmul.f32 %v1916, %v1340
      %v1949 = vmul.f32 %v1917, %v1341
      %v1950 = vmul.f32 %v1918, %v1342
      %v1951 = vmul.f32 %v1919, %v1343
      %v1952 = vmul.f32 %v1920, %v1344
      %v1953 = vmul.f32 %v1921, %v1345
      %v1954 = vmul.f32 %v1922, %v1346
      %v1955 = vmul.f32 %v1923, %v1347
      %v1956 = vmul.f32 %v1924, %v1348
      %v1957 = vmul.f32 %v1925, %v1349
      %v1958 = vmul.f32 %v1926, %v1350
      %v1959 = vmul.f32 %v1927, %v1351
      %v1960 = vmul.f32 %v1928, %v1352
      %v1961 = vmul.f32 %v1929, %v1353
      %v1962 = vmul.f32 %v1930, %v1354
      %v1963 = vmul.f32 %v1931, %v1355
      %v1964 = vadd.f32 %v1932, 1.0
      %v1965 = vadd.f32 %v1933, 1.0
      %v1966 = vadd.f32 %v1934, 1.0
      %v1967 = vadd.f32 %v1935, 1.0
      %v1968 = vadd.f32 %v1936, 1.0
      %v1969 = vadd.f32 %v1937, 1.0
      %v1970 = vadd.f32 %v1938, 1.0
      %v1971 = vadd.f32 %v1939, 1.0
      %v1972 = vadd.f32 %v1940, 1.0
      %v1973 = vadd.f32 %v1941, 1.0
      %v1974 = vadd.f32 %v1942, 1.0
      %v1975 = vadd.f32 %v1943, 1.0
      %v1976 = vadd.f32 %v1944, 1.0
      %v1977 = vadd.f32 %v1945, 1.0
      %v1978 = vadd.f32 %v1946, 1.0
      %v1979 = vadd.f32 %v1947, 1.0
      %v1980 = vadd.f32 %v1948, 1.0
      %v1981 = vadd.f32 %v1949, 1.0
      %v1982 = vadd.f32 %v1950, 1.0
      %v1983 = vadd.f32 %v1951, 1.0
      %v1984 = vadd.f32 %v1952, 1.0
      %v1985 = vadd.f32 %v1953, 1.0
      %v1986 = vadd.f32 %v1954, 1.0
      %v1987 = vadd.f32 %v1955, 1.0
      %v1988 = vadd.f32 %v1956, 1.0
      %v1989 = vadd.f32 %v1957, 1.0
      %v1990 = vadd.f32 %v1958, 1.0
      %v1991 = vadd.f32 %v1959, 1.0
      %v1992 = vadd.f32 %v1960, 1.0
      %v1993 = vadd.f32 %v1961, 1.0
      %v1994 = vadd.f32 %v1962, 1.0
      %v1995 = vadd.f32 %v1963, 1.0
      %v1996 = vmul.f32 %v1292, %v1580
      %v1997 = vmul.f32 %v1293, %v1581
      %v1998 = vmul.f32 %v1294, %v1582
      %v1999 = vmul.f32 %v1295, %v1583
      %v2000 = vmul.f32 %v1296, %v1584
      %v2001 = vmul.f32 %v1297, %v1585
      %v2002 = vmul.f32 %v1298, %v1586
      %v2003 = vmul.f32 %v1299, %v1587
      %v2004 = vmul.f32 %v1300, %v1588
      %v2005 = vmul.f32 %v1301, %v1589
      %v2006 = vmul.f32 %v1302, %v1590
      %v2007 = vmul.f32 %v1303, %v1591
      %v2008 = vmul.f32 %v1304, %v1592
      %v2009 = vmul.f32 %v1305, %v1593
      %v2010 = vmul.f32 %v1306, %v1594
      %v2011 = vmul.f32 %v1307, %v1595
      %v2012 = vmul.f32 %v1308, %v1596
      %v2013 = vmul.f32 %v1309, %v1597
      %v2014 = vmul.f32 %v1310, %v1598
      %v2015 = vmul.f32 %v1311, %v1599
      %v2016 = vmul.f32 %v1312, %v1600
      %v2017 = vmul.f32 %v1313, %v1601
      %v2018 = vmul.f32 %v1314, %v1602
      %v2019 = vmul.f32 %v1315, %v1603
      %v2020 = vmul.f32 %v1316, %v1604
      %v2021 = vmul.f32 %v1317, %v1605
      %v2022 = vmul.f32 %v1318, %v1606
      %v2023 = vmul.f32 %v1319, %v1607
      %v2024 = vmul.f32 %v1320, %v1608
      %v2025 = vmul.f32 %v1321, %v1609
      %v2026 = vmul.f32 %v1322, %v1610
      %v2027 = vmul.f32 %v1323, %v1611
      %v2028 = vrcp.pop %v1964
      %v2029 = vmul.f32 %v1964, %v2028
      %v2030 = vsub.f32 1.0, %v2029
      %v2031 = vmul.f32 %v2028, %v2030
      %v2032 = vadd.f32 %v2028, %v2031
      %vm2033 = vweird.f32 %v1964
      %vm2034 = vweird.f32 %v2028
      %vm2035 = vmor %vm2033, %vm2034
      %v2036 = vsel %vm2035, %v2028, %v2032
      %v2037 = vand.u32 2147483647, %v1964
      %vm2038 = vcmp.eq.f32.partialorder %v2037, 8.507059e+37
      %v2039 = vand.u32 %v1964, 2147483648
      %v2040 = vor.u32 1.1754944e-38, %v2039
      %v2041 = vsel %vm2038, %v2040, %v2036
      %v2042 = vrcp.pop %v1965
      %v2043 = vmul.f32 %v1965, %v2042
      %v2044 = vsub.f32 1.0, %v2043
      %v2045 = vmul.f32 %v2042, %v2044
      %v2046 = vadd.f32 %v2042, %v2045
      %vm2047 = vweird.f32 %v1965
      %vm2048 = vweird.f32 %v2042
      %vm2049 = vmor %vm2047, %vm2048
      %v2050 = vsel %vm2049, %v2042, %v2046
      %v2051 = vand.u32 2147483647, %v1965
      %vm2052 = vcmp.eq.f32.partialorder %v2051, 8.507059e+37
      %v2053 = vand.u32 %v1965, 2147483648
      %v2054 = vor.u32 1.1754944e-38, %v2053
      %v2055 = vsel %vm2052, %v2054, %v2050
      %v2056 = vrcp.pop %v1966
      %v2057 = vmul.f32 %v1966, %v2056
      %v2058 = vsub.f32 1.0, %v2057
      %v2059 = vmul.f32 %v2056, %v2058
      %v2060 = vadd.f32 %v2056, %v2059
      %vm2061 = vweird.f32 %v1966
      %vm2062 = vweird.f32 %v2056
      %vm2063 = vmor %vm2061, %vm2062
      %v2064 = vsel %vm2063, %v2056, %v2060
      %v2065 = vand.u32 2147483647, %v1966
      %vm2066 = vcmp.eq.f32.partialorder %v2065, 8.507059e+37
      %v2067 = vand.u32 %v1966, 2147483648
      %v2068 = vor.u32 1.1754944e-38, %v2067
      %v2069 = vsel %vm2066, %v2068, %v2064
      %v2070 = vrcp.pop %v1967
      %v2071 = vmul.f32 %v1967, %v2070
      %v2072 = vsub.f32 1.0, %v2071
      %v2073 = vmul.f32 %v2070, %v2072
      %v2074 = vadd.f32 %v2070, %v2073
      %vm2075 = vweird.f32 %v1967
      %vm2076 = vweird.f32 %v2070
      %vm2077 = vmor %vm2075, %vm2076
      %v2078 = vsel %vm2077, %v2070, %v2074
      %v2079 = vand.u32 2147483647, %v1967
      %vm2080 = vcmp.eq.f32.partialorder %v2079, 8.507059e+37
      %v2081 = vand.u32 %v1967, 2147483648
      %v2082 = vor.u32 1.1754944e-38, %v2081
      %v2083 = vsel %vm2080, %v2082, %v2078
      %v2084 = vrcp.pop %v1968
      %v2085 = vmul.f32 %v1968, %v2084
      %v2086 = vsub.f32 1.0, %v2085
      %v2087 = vmul.f32 %v2084, %v2086
      %v2088 = vadd.f32 %v2084, %v2087
      %vm2089 = vweird.f32 %v1968
      %vm2090 = vweird.f32 %v2084
      %vm2091 = vmor %vm2089, %vm2090
      %v2092 = vsel %vm2091, %v2084, %v2088
      %v2093 = vand.u32 2147483647, %v1968
      %vm2094 = vcmp.eq.f32.partialorder %v2093, 8.507059e+37
      %v2095 = vand.u32 %v1968, 2147483648
      %v2096 = vor.u32 1.1754944e-38, %v2095
      %v2097 = vsel %vm2094, %v2096, %v2092
      %v2098 = vrcp.pop %v1969
      %v2099 = vmul.f32 %v1969, %v2098
      %v2100 = vsub.f32 1.0, %v2099
      %v2101 = vmul.f32 %v2098, %v2100
      %v2102 = vadd.f32 %v2098, %v2101
      %vm2103 = vweird.f32 %v1969
      %vm2104 = vweird.f32 %v2098
      %vm2105 = vmor %vm2103, %vm2104
      %v2106 = vsel %vm2105, %v2098, %v2102
      %v2107 = vand.u32 2147483647, %v1969
      %vm2108 = vcmp.eq.f32.partialorder %v2107, 8.507059e+37
      %v2109 = vand.u32 %v1969, 2147483648
      %v2110 = vor.u32 1.1754944e-38, %v2109
      %v2111 = vsel %vm2108, %v2110, %v2106
      %v2112 = vrcp.pop %v1970
      %v2113 = vmul.f32 %v1970, %v2112
      %v2114 = vsub.f32 1.0, %v2113
      %v2115 = vmul.f32 %v2112, %v2114
      %v2116 = vadd.f32 %v2112, %v2115
      %vm2117 = vweird.f32 %v1970
      %vm2118 = vweird.f32 %v2112
      %vm2119 = vmor %vm2117, %vm2118
      %v2120 = vsel %vm2119, %v2112, %v2116
      %v2121 = vand.u32 2147483647, %v1970
      %vm2122 = vcmp.eq.f32.partialorder %v2121, 8.507059e+37
      %v2123 = vand.u32 %v1970, 2147483648
      %v2124 = vor.u32 1.1754944e-38, %v2123
      %v2125 = vsel %vm2122, %v2124, %v2120
      %v2126 = vrcp.pop %v1971
      %v2127 = vmul.f32 %v1971, %v2126
      %v2128 = vsub.f32 1.0, %v2127
      %v2129 = vmul.f32 %v2126, %v2128
      %v2130 = vadd.f32 %v2126, %v2129
      %vm2131 = vweird.f32 %v1971
      %vm2132 = vweird.f32 %v2126
      %vm2133 = vmor %vm2131, %vm2132
      %v2134 = vsel %vm2133, %v2126, %v2130
      %v2135 = vand.u32 2147483647, %v1971
      %vm2136 = vcmp.eq.f32.partialorder %v2135, 8.507059e+37
      %v2137 = vand.u32 %v1971, 2147483648
      %v2138 = vor.u32 1.1754944e-38, %v2137
      %v2139 = vsel %vm2136, %v2138, %v2134
      %v2140 = vrcp.pop %v1972
      %v2141 = vmul.f32 %v1972, %v2140
      %v2142 = vsub.f32 1.0, %v2141
      %v2143 = vmul.f32 %v2140, %v2142
      %v2144 = vadd.f32 %v2140, %v2143
      %vm2145 = vweird.f32 %v1972
      %vm2146 = vweird.f32 %v2140
      %vm2147 = vmor %vm2145, %vm2146
      %v2148 = vsel %vm2147, %v2140, %v2144
      %v2149 = vand.u32 2147483647, %v1972
      %vm2150 = vcmp.eq.f32.partialorder %v2149, 8.507059e+37
      %v2151 = vand.u32 %v1972, 2147483648
      %v2152 = vor.u32 1.1754944e-38, %v2151
      %v2153 = vsel %vm2150, %v2152, %v2148
      %v2154 = vrcp.pop %v1973
      %v2155 = vmul.f32 %v1973, %v2154
      %v2156 = vsub.f32 1.0, %v2155
      %v2157 = vmul.f32 %v2154, %v2156
      %v2158 = vadd.f32 %v2154, %v2157
      %vm2159 = vweird.f32 %v1973
      %vm2160 = vweird.f32 %v2154
      %vm2161 = vmor %vm2159, %vm2160
      %v2162 = vsel %vm2161, %v2154, %v2158
      %v2163 = vand.u32 2147483647, %v1973
      %vm2164 = vcmp.eq.f32.partialorder %v2163, 8.507059e+37
      %v2165 = vand.u32 %v1973, 2147483648
      %v2166 = vor.u32 1.1754944e-38, %v2165
      %v2167 = vsel %vm2164, %v2166, %v2162
      %v2168 = vrcp.pop %v1974
      %v2169 = vmul.f32 %v1974, %v2168
      %v2170 = vsub.f32 1.0, %v2169
      %v2171 = vmul.f32 %v2168, %v2170
      %v2172 = vadd.f32 %v2168, %v2171
      %vm2173 = vweird.f32 %v1974
      %vm2174 = vweird.f32 %v2168
      %vm2175 = vmor %vm2173, %vm2174
      %v2176 = vsel %vm2175, %v2168, %v2172
      %v2177 = vand.u32 2147483647, %v1974
      %vm2178 = vcmp.eq.f32.partialorder %v2177, 8.507059e+37
      %v2179 = vand.u32 %v1974, 2147483648
      %v2180 = vor.u32 1.1754944e-38, %v2179
      %v2181 = vsel %vm2178, %v2180, %v2176
      %v2182 = vrcp.pop %v1975
      %v2183 = vmul.f32 %v1975, %v2182
      %v2184 = vsub.f32 1.0, %v2183
      %v2185 = vmul.f32 %v2182, %v2184
      %v2186 = vadd.f32 %v2182, %v2185
      %vm2187 = vweird.f32 %v1975
      %vm2188 = vweird.f32 %v2182
      %vm2189 = vmor %vm2187, %vm2188
      %v2190 = vsel %vm2189, %v2182, %v2186
      %v2191 = vand.u32 2147483647, %v1975
      %vm2192 = vcmp.eq.f32.partialorder %v2191, 8.507059e+37
      %v2193 = vand.u32 %v1975, 2147483648
      %v2194 = vor.u32 1.1754944e-38, %v2193
      %v2195 = vsel %vm2192, %v2194, %v2190
      %v2196 = vrcp.pop %v1976
      %v2197 = vmul.f32 %v1976, %v2196
      %v2198 = vsub.f32 1.0, %v2197
      %v2199 = vmul.f32 %v2196, %v2198
      %v2200 = vadd.f32 %v2196, %v2199
      %vm2201 = vweird.f32 %v1976
      %vm2202 = vweird.f32 %v2196
      %vm2203 = vmor %vm2201, %vm2202
      %v2204 = vsel %vm2203, %v2196, %v2200
      %v2205 = vand.u32 2147483647, %v1976
      %vm2206 = vcmp.eq.f32.partialorder %v2205, 8.507059e+37
      %v2207 = vand.u32 %v1976, 2147483648
      %v2208 = vor.u32 1.1754944e-38, %v2207
      %v2209 = vsel %vm2206, %v2208, %v2204
      %v2210 = vrcp.pop %v1977
      %v2211 = vmul.f32 %v1977, %v2210
      %v2212 = vsub.f32 1.0, %v2211
      %v2213 = vmul.f32 %v2210, %v2212
      %v2214 = vadd.f32 %v2210, %v2213
      %vm2215 = vweird.f32 %v1977
      %vm2216 = vweird.f32 %v2210
      %vm2217 = vmor %vm2215, %vm2216
      %v2218 = vsel %vm2217, %v2210, %v2214
      %v2219 = vand.u32 2147483647, %v1977
      %vm2220 = vcmp.eq.f32.partialorder %v2219, 8.507059e+37
      %v2221 = vand.u32 %v1977, 2147483648
      %v2222 = vor.u32 1.1754944e-38, %v2221
      %v2223 = vsel %vm2220, %v2222, %v2218
      %v2224 = vrcp.pop %v1978
      %v2225 = vmul.f32 %v1978, %v2224
      %v2226 = vsub.f32 1.0, %v2225
      %v2227 = vmul.f32 %v2224, %v2226
      %v2228 = vadd.f32 %v2224, %v2227
      %vm2229 = vweird.f32 %v1978
      %vm2230 = vweird.f32 %v2224
      %vm2231 = vmor %vm2229, %vm2230
      %v2232 = vsel %vm2231, %v2224, %v2228
      %v2233 = vand.u32 2147483647, %v1978
      %vm2234 = vcmp.eq.f32.partialorder %v2233, 8.507059e+37
      %v2235 = vand.u32 %v1978, 2147483648
      %v2236 = vor.u32 1.1754944e-38, %v2235
      %v2237 = vsel %vm2234, %v2236, %v2232
      %v2238 = vrcp.pop %v1979
      %v2239 = vmul.f32 %v1979, %v2238
      %v2240 = vsub.f32 1.0, %v2239
      %v2241 = vmul.f32 %v2238, %v2240
      %v2242 = vadd.f32 %v2238, %v2241
      %vm2243 = vweird.f32 %v1979
      %vm2244 = vweird.f32 %v2238
      %vm2245 = vmor %vm2243, %vm2244
      %v2246 = vsel %vm2245, %v2238, %v2242
      %v2247 = vand.u32 2147483647, %v1979
      %vm2248 = vcmp.eq.f32.partialorder %v2247, 8.507059e+37
      %v2249 = vand.u32 %v1979, 2147483648
      %v2250 = vor.u32 1.1754944e-38, %v2249
      %v2251 = vsel %vm2248, %v2250, %v2246
      %v2252 = vrcp.pop %v1980
      %v2253 = vmul.f32 %v1980, %v2252
      %v2254 = vsub.f32 1.0, %v2253
      %v2255 = vmul.f32 %v2252, %v2254
      %v2256 = vadd.f32 %v2252, %v2255
      %vm2257 = vweird.f32 %v1980
      %vm2258 = vweird.f32 %v2252
      %vm2259 = vmor %vm2257, %vm2258
      %v2260 = vsel %vm2259, %v2252, %v2256
      %v2261 = vand.u32 2147483647, %v1980
      %vm2262 = vcmp.eq.f32.partialorder %v2261, 8.507059e+37
      %v2263 = vand.u32 %v1980, 2147483648
      %v2264 = vor.u32 1.1754944e-38, %v2263
      %v2265 = vsel %vm2262, %v2264, %v2260
      %v2266 = vrcp.pop %v1981
      %v2267 = vmul.f32 %v1981, %v2266
      %v2268 = vsub.f32 1.0, %v2267
      %v2269 = vmul.f32 %v2266, %v2268
      %v2270 = vadd.f32 %v2266, %v2269
      %vm2271 = vweird.f32 %v1981
      %vm2272 = vweird.f32 %v2266
      %vm2273 = vmor %vm2271, %vm2272
      %v2274 = vsel %vm2273, %v2266, %v2270
      %v2275 = vand.u32 2147483647, %v1981
      %vm2276 = vcmp.eq.f32.partialorder %v2275, 8.507059e+37
      %v2277 = vand.u32 %v1981, 2147483648
      %v2278 = vor.u32 1.1754944e-38, %v2277
      %v2279 = vsel %vm2276, %v2278, %v2274
      %v2280 = vrcp.pop %v1982
      %v2281 = vmul.f32 %v1982, %v2280
      %v2282 = vsub.f32 1.0, %v2281
      %v2283 = vmul.f32 %v2280, %v2282
      %v2284 = vadd.f32 %v2280, %v2283
      %vm2285 = vweird.f32 %v1982
      %vm2286 = vweird.f32 %v2280
      %vm2287 = vmor %vm2285, %vm2286
      %v2288 = vsel %vm2287, %v2280, %v2284
      %v2289 = vand.u32 2147483647, %v1982
      %vm2290 = vcmp.eq.f32.partialorder %v2289, 8.507059e+37
      %v2291 = vand.u32 %v1982, 2147483648
      %v2292 = vor.u32 1.1754944e-38, %v2291
      %v2293 = vsel %vm2290, %v2292, %v2288
      %v2294 = vrcp.pop %v1983
      %v2295 = vmul.f32 %v1983, %v2294
      %v2296 = vsub.f32 1.0, %v2295
      %v2297 = vmul.f32 %v2294, %v2296
      %v2298 = vadd.f32 %v2294, %v2297
      %vm2299 = vweird.f32 %v1983
      %vm2300 = vweird.f32 %v2294
      %vm2301 = vmor %vm2299, %vm2300
      %v2302 = vsel %vm2301, %v2294, %v2298
      %v2303 = vand.u32 2147483647, %v1983
      %vm2304 = vcmp.eq.f32.partialorder %v2303, 8.507059e+37
      %v2305 = vand.u32 %v1983, 2147483648
      %v2306 = vor.u32 1.1754944e-38, %v2305
      %v2307 = vsel %vm2304, %v2306, %v2302
      %v2308 = vrcp.pop %v1984
      %v2309 = vmul.f32 %v1984, %v2308
      %v2310 = vsub.f32 1.0, %v2309
      %v2311 = vmul.f32 %v2308, %v2310
      %v2312 = vadd.f32 %v2308, %v2311
      %vm2313 = vweird.f32 %v1984
      %vm2314 = vweird.f32 %v2308
      %vm2315 = vmor %vm2313, %vm2314
      %v2316 = vsel %vm2315, %v2308, %v2312
      %v2317 = vand.u32 2147483647, %v1984
      %vm2318 = vcmp.eq.f32.partialorder %v2317, 8.507059e+37
      %v2319 = vand.u32 %v1984, 2147483648
      %v2320 = vor.u32 1.1754944e-38, %v2319
      %v2321 = vsel %vm2318, %v2320, %v2316
      %v2322 = vrcp.pop %v1985
      %v2323 = vmul.f32 %v1985, %v2322
      %v2324 = vsub.f32 1.0, %v2323
      %v2325 = vmul.f32 %v2322, %v2324
      %v2326 = vadd.f32 %v2322, %v2325
      %vm2327 = vweird.f32 %v1985
      %vm2328 = vweird.f32 %v2322
      %vm2329 = vmor %vm2327, %vm2328
      %v2330 = vsel %vm2329, %v2322, %v2326
      %v2331 = vand.u32 2147483647, %v1985
      %vm2332 = vcmp.eq.f32.partialorder %v2331, 8.507059e+37
      %v2333 = vand.u32 %v1985, 2147483648
      %v2334 = vor.u32 1.1754944e-38, %v2333
      %v2335 = vsel %vm2332, %v2334, %v2330
      %v2336 = vrcp.pop %v1986
      %v2337 = vmul.f32 %v1986, %v2336
      %v2338 = vsub.f32 1.0, %v2337
      %v2339 = vmul.f32 %v2336, %v2338
      %v2340 = vadd.f32 %v2336, %v2339
      %vm2341 = vweird.f32 %v1986
      %vm2342 = vweird.f32 %v2336
      %vm2343 = vmor %vm2341, %vm2342
      %v2344 = vsel %vm2343, %v2336, %v2340
      %v2345 = vand.u32 2147483647, %v1986
      %vm2346 = vcmp.eq.f32.partialorder %v2345, 8.507059e+37
      %v2347 = vand.u32 %v1986, 2147483648
      %v2348 = vor.u32 1.1754944e-38, %v2347
      %v2349 = vsel %vm2346, %v2348, %v2344
      %v2350 = vrcp.pop %v1987
      %v2351 = vmul.f32 %v1987, %v2350
      %v2352 = vsub.f32 1.0, %v2351
      %v2353 = vmul.f32 %v2350, %v2352
      %v2354 = vadd.f32 %v2350, %v2353
      %vm2355 = vweird.f32 %v1987
      %vm2356 = vweird.f32 %v2350
      %vm2357 = vmor %vm2355, %vm2356
      %v2358 = vsel %vm2357, %v2350, %v2354
      %v2359 = vand.u32 2147483647, %v1987
      %vm2360 = vcmp.eq.f32.partialorder %v2359, 8.507059e+37
      %v2361 = vand.u32 %v1987, 2147483648
      %v2362 = vor.u32 1.1754944e-38, %v2361
      %v2363 = vsel %vm2360, %v2362, %v2358
      %v2364 = vrcp.pop %v1988
      %v2365 = vmul.f32 %v1988, %v2364
      %v2366 = vsub.f32 1.0, %v2365
      %v2367 = vmul.f32 %v2364, %v2366
      %v2368 = vadd.f32 %v2364, %v2367
      %vm2369 = vweird.f32 %v1988
      %vm2370 = vweird.f32 %v2364
      %vm2371 = vmor %vm2369, %vm2370
      %v2372 = vsel %vm2371, %v2364, %v2368
      %v2373 = vand.u32 2147483647, %v1988
      %vm2374 = vcmp.eq.f32.partialorder %v2373, 8.507059e+37
      %v2375 = vand.u32 %v1988, 2147483648
      %v2376 = vor.u32 1.1754944e-38, %v2375
      %v2377 = vsel %vm2374, %v2376, %v2372
      %v2378 = vrcp.pop %v1989
      %v2379 = vmul.f32 %v1989, %v2378
      %v2380 = vsub.f32 1.0, %v2379
      %v2381 = vmul.f32 %v2378, %v2380
      %v2382 = vadd.f32 %v2378, %v2381
      %vm2383 = vweird.f32 %v1989
      %vm2384 = vweird.f32 %v2378
      %vm2385 = vmor %vm2383, %vm2384
      %v2386 = vsel %vm2385, %v2378, %v2382
      %v2387 = vand.u32 2147483647, %v1989
      %vm2388 = vcmp.eq.f32.partialorder %v2387, 8.507059e+37
      %v2389 = vand.u32 %v1989, 2147483648
      %v2390 = vor.u32 1.1754944e-38, %v2389
      %v2391 = vsel %vm2388, %v2390, %v2386
      %v2392 = vrcp.pop %v1990
      %v2393 = vmul.f32 %v1990, %v2392
      %v2394 = vsub.f32 1.0, %v2393
      %v2395 = vmul.f32 %v2392, %v2394
      %v2396 = vadd.f32 %v2392, %v2395
      %vm2397 = vweird.f32 %v1990
      %vm2398 = vweird.f32 %v2392
      %vm2399 = vmor %vm2397, %vm2398
      %v2400 = vsel %vm2399, %v2392, %v2396
      %v2401 = vand.u32 2147483647, %v1990
      %vm2402 = vcmp.eq.f32.partialorder %v2401, 8.507059e+37
      %v2403 = vand.u32 %v1990, 2147483648
      %v2404 = vor.u32 1.1754944e-38, %v2403
      %v2405 = vsel %vm2402, %v2404, %v2400
      %v2406 = vrcp.pop %v1991
      %v2407 = vmul.f32 %v1991, %v2406
      %v2408 = vsub.f32 1.0, %v2407
      %v2409 = vmul.f32 %v2406, %v2408
      %v2410 = vadd.f32 %v2406, %v2409
      %vm2411 = vweird.f32 %v1991
      %vm2412 = vweird.f32 %v2406
      %vm2413 = vmor %vm2411, %vm2412
      %v2414 = vsel %vm2413, %v2406, %v2410
      %v2415 = vand.u32 2147483647, %v1991
      %vm2416 = vcmp.eq.f32.partialorder %v2415, 8.507059e+37
      %v2417 = vand.u32 %v1991, 2147483648
      %v2418 = vor.u32 1.1754944e-38, %v2417
      %v2419 = vsel %vm2416, %v2418, %v2414
      %v2420 = vrcp.pop %v1992
      %v2421 = vmul.f32 %v1992, %v2420
      %v2422 = vsub.f32 1.0, %v2421
      %v2423 = vmul.f32 %v2420, %v2422
      %v2424 = vadd.f32 %v2420, %v2423
      %vm2425 = vweird.f32 %v1992
      %vm2426 = vweird.f32 %v2420
      %vm2427 = vmor %vm2425, %vm2426
      %v2428 = vsel %vm2427, %v2420, %v2424
      %v2429 = vand.u32 2147483647, %v1992
      %vm2430 = vcmp.eq.f32.partialorder %v2429, 8.507059e+37
      %v2431 = vand.u32 %v1992, 2147483648
      %v2432 = vor.u32 1.1754944e-38, %v2431
      %v2433 = vsel %vm2430, %v2432, %v2428
      %v2434 = vrcp.pop %v1993
      %v2435 = vmul.f32 %v1993, %v2434
      %v2436 = vsub.f32 1.0, %v2435
      %v2437 = vmul.f32 %v2434, %v2436
      %v2438 = vadd.f32 %v2434, %v2437
      %vm2439 = vweird.f32 %v1993
      %vm2440 = vweird.f32 %v2434
      %vm2441 = vmor %vm2439, %vm2440
      %v2442 = vsel %vm2441, %v2434, %v2438
      %v2443 = vand.u32 2147483647, %v1993
      %vm2444 = vcmp.eq.f32.partialorder %v2443, 8.507059e+37
      %v2445 = vand.u32 %v1993, 2147483648
      %v2446 = vor.u32 1.1754944e-38, %v2445
      %v2447 = vsel %vm2444, %v2446, %v2442
      %v2448 = vrcp.pop %v1994
      %v2449 = vmul.f32 %v1994, %v2448
      %v2450 = vsub.f32 1.0, %v2449
      %v2451 = vmul.f32 %v2448, %v2450
      %v2452 = vadd.f32 %v2448, %v2451
      %vm2453 = vweird.f32 %v1994
      %vm2454 = vweird.f32 %v2448
      %vm2455 = vmor %vm2453, %vm2454
      %v2456 = vsel %vm2455, %v2448, %v2452
      %v2457 = vand.u32 2147483647, %v1994
      %vm2458 = vcmp.eq.f32.partialorder %v2457, 8.507059e+37
      %v2459 = vand.u32 %v1994, 2147483648
      %v2460 = vor.u32 1.1754944e-38, %v2459
      %v2461 = vsel %vm2458, %v2460, %v2456
      %v2462 = vrcp.pop %v1995
      %v2463 = vmul.f32 %v1995, %v2462
      %v2464 = vsub.f32 1.0, %v2463
      %v2465 = vmul.f32 %v2462, %v2464
      %v2466 = vadd.f32 %v2462, %v2465
      %vm2467 = vweird.f32 %v1995
      %vm2468 = vweird.f32 %v2462
      %vm2469 = vmor %vm2467, %vm2468
      %v2470 = vsel %vm2469, %v2462, %v2466
      %v2471 = vand.u32 2147483647, %v1995
      %vm2472 = vcmp.eq.f32.partialorder %v2471, 8.507059e+37
      %v2473 = vand.u32 %v1995, 2147483648
      %v2474 = vor.u32 1.1754944e-38, %v2473
      %v2475 = vsel %vm2472, %v2474, %v2470
      %v2476 = vmul.f32 %v1996, %v2041
      %v2477 = vmul.f32 %v1997, %v2055
      %v2478 = vmul.f32 %v1998, %v2069
      %v2479 = vmul.f32 %v1999, %v2083
      %v2480 = vmul.f32 %v2000, %v2097
      %v2481 = vmul.f32 %v2001, %v2111
      %v2482 = vmul.f32 %v2002, %v2125
      %v2483 = vmul.f32 %v2003, %v2139
      %v2484 = vmul.f32 %v2004, %v2153
      %v2485 = vmul.f32 %v2005, %v2167
      %v2486 = vmul.f32 %v2006, %v2181
      %v2487 = vmul.f32 %v2007, %v2195
      %v2488 = vmul.f32 %v2008, %v2209
      %v2489 = vmul.f32 %v2009, %v2223
      %v2490 = vmul.f32 %v2010, %v2237
      %v2491 = vmul.f32 %v2011, %v2251
      %v2492 = vmul.f32 %v2012, %v2265
      %v2493 = vmul.f32 %v2013, %v2279
      %v2494 = vmul.f32 %v2014, %v2293
      %v2495 = vmul.f32 %v2015, %v2307
      %v2496 = vmul.f32 %v2016, %v2321
      %v2497 = vmul.f32 %v2017, %v2335
      %v2498 = vmul.f32 %v2018, %v2349
      %v2499 = vmul.f32 %v2019, %v2363
      %v2500 = vmul.f32 %v2020, %v2377
      %v2501 = vmul.f32 %v2021, %v2391
      %v2502 = vmul.f32 %v2022, %v2405
      %v2503 = vmul.f32 %v2023, %v2419
      %v2504 = vmul.f32 %v2024, %v2433
      %v2505 = vmul.f32 %v2025, %v2447
      %v2506 = vmul.f32 %v2026, %v2461
      %v2507 = vmul.f32 %v2027, %v2475
      %v2508 = vadd.f32 %v2476, 1.0
      %v2509 = vadd.f32 %v2477, 1.0
      %v2510 = vadd.f32 %v2478, 1.0
      %v2511 = vadd.f32 %v2479, 1.0
      %v2512 = vadd.f32 %v2480, 1.0
      %v2513 = vadd.f32 %v2481, 1.0
      %v2514 = vadd.f32 %v2482, 1.0
      %v2515 = vadd.f32 %v2483, 1.0
      %v2516 = vadd.f32 %v2484, 1.0
      %v2517 = vadd.f32 %v2485, 1.0
      %v2518 = vadd.f32 %v2486, 1.0
      %v2519 = vadd.f32 %v2487, 1.0
      %v2520 = vadd.f32 %v2488, 1.0
      %v2521 = vadd.f32 %v2489, 1.0
      %v2522 = vadd.f32 %v2490, 1.0
      %v2523 = vadd.f32 %v2491, 1.0
      %v2524 = vadd.f32 %v2492, 1.0
      %v2525 = vadd.f32 %v2493, 1.0
      %v2526 = vadd.f32 %v2494, 1.0
      %v2527 = vadd.f32 %v2495, 1.0
      %v2528 = vadd.f32 %v2496, 1.0
      %v2529 = vadd.f32 %v2497, 1.0
      %v2530 = vadd.f32 %v2498, 1.0
      %v2531 = vadd.f32 %v2499, 1.0
      %v2532 = vadd.f32 %v2500, 1.0
      %v2533 = vadd.f32 %v2501, 1.0
      %v2534 = vadd.f32 %v2502, 1.0
      %v2535 = vadd.f32 %v2503, 1.0
      %v2536 = vadd.f32 %v2504, 1.0
      %v2537 = vadd.f32 %v2505, 1.0
      %v2538 = vadd.f32 %v2506, 1.0
      %v2539 = vadd.f32 %v2507, 1.0
      %v2540 = vmul.f32 %v1196, %v2508
      %v2541 = vmul.f32 %v1197, %v2509
      %v2542 = vmul.f32 %v1198, %v2510
      %v2543 = vmul.f32 %v1199, %v2511
      %v2544 = vmul.f32 %v1200, %v2512
      %v2545 = vmul.f32 %v1201, %v2513
      %v2546 = vmul.f32 %v1202, %v2514
      %v2547 = vmul.f32 %v1203, %v2515
      %v2548 = vmul.f32 %v1204, %v2516
      %v2549 = vmul.f32 %v1205, %v2517
      %v2550 = vmul.f32 %v1206, %v2518
      %v2551 = vmul.f32 %v1207, %v2519
      %v2552 = vmul.f32 %v1208, %v2520
      %v2553 = vmul.f32 %v1209, %v2521
      %v2554 = vmul.f32 %v1210, %v2522
      %v2555 = vmul.f32 %v1211, %v2523
      %v2556 = vmul.f32 %v1212, %v2524
      %v2557 = vmul.f32 %v1213, %v2525
      %v2558 = vmul.f32 %v1214, %v2526
      %v2559 = vmul.f32 %v1215, %v2527
      %v2560 = vmul.f32 %v1216, %v2528
      %v2561 = vmul.f32 %v1217, %v2529
      %v2562 = vmul.f32 %v1218, %v2530
      %v2563 = vmul.f32 %v1219, %v2531
      %v2564 = vmul.f32 %v1220, %v2532
      %v2565 = vmul.f32 %v1221, %v2533
      %v2566 = vmul.f32 %v1222, %v2534
      %v2567 = vmul.f32 %v1223, %v2535
      %v2568 = vmul.f32 %v1224, %v2536
      %v2569 = vmul.f32 %v1225, %v2537
      %v2570 = vmul.f32 %v1226, %v2538
      %v2571 = vmul.f32 %v1227, %v2539
      %v2572 = vpack.c.bf16 %v2540, %v2540
      %v2573 = vpack.c.bf16 %v2541, %v2541
      %v2574 = vpack.c.bf16 %v2542, %v2542
      %v2575 = vpack.c.bf16 %v2543, %v2543
      %v2576 = vpack.c.bf16 %v2544, %v2544
      %v2577 = vpack.c.bf16 %v2545, %v2545
      %v2578 = vpack.c.bf16 %v2546, %v2546
      %v2579 = vpack.c.bf16 %v2547, %v2547
      %v2580 = vpack.c.bf16 %v2548, %v2548
      %v2581 = vpack.c.bf16 %v2549, %v2549
      %v2582 = vpack.c.bf16 %v2550, %v2550
      %v2583 = vpack.c.bf16 %v2551, %v2551
      %v2584 = vpack.c.bf16 %v2552, %v2552
      %v2585 = vpack.c.bf16 %v2553, %v2553
      %v2586 = vpack.c.bf16 %v2554, %v2554
      %v2587 = vpack.c.bf16 %v2555, %v2555
      %v2588 = vpack.c.bf16 %v2556, %v2556
      %v2589 = vpack.c.bf16 %v2557, %v2557
      %v2590 = vpack.c.bf16 %v2558, %v2558
      %v2591 = vpack.c.bf16 %v2559, %v2559
      %v2592 = vpack.c.bf16 %v2560, %v2560
      %v2593 = vpack.c.bf16 %v2561, %v2561
      %v2594 = vpack.c.bf16 %v2562, %v2562
      %v2595 = vpack.c.bf16 %v2563, %v2563
      %v2596 = vpack.c.bf16 %v2564, %v2564
      %v2597 = vpack.c.bf16 %v2565, %v2565
      %v2598 = vpack.c.bf16 %v2566, %v2566
      %v2599 = vpack.c.bf16 %v2567, %v2567
      %v2600 = vpack.c.bf16 %v2568, %v2568
      %v2601 = vpack.c.bf16 %v2569, %v2569
      %v2602 = vpack.c.bf16 %v2570, %v2570
      %v2603 = vpack.c.bf16 %v2571, %v2571
      %2604 = vst [vmem:[%s208] sm:$0xf] %v2572
      %2605 = vst [vmem:[%s208 + $0x4] sm:$0xf] %v2573
      %2606 = vst [vmem:[%s208 + $0x8] sm:$0xf] %v2574
      %2607 = vst [vmem:[%s208 + $0xc] sm:$0xf] %v2575
      %2608 = vst [vmem:[%s208 + $0x10] sm:$0xf] %v2576
      %2609 = vst [vmem:[%s208 + $0x14] sm:$0xf] %v2577
      %2610 = vst [vmem:[%s208 + $0x18] sm:$0xf] %v2578
      %2611 = vst [vmem:[%s208 + $0x1c] sm:$0xf] %v2579
      %2612 = vst [vmem:[%s208 + $0x20] sm:$0xf] %v2580
      %2613 = vst [vmem:[%s208 + $0x24] sm:$0xf] %v2581
      %2614 = vst [vmem:[%s208 + $0x28] sm:$0xf] %v2582
      %2615 = vst [vmem:[%s208 + $0x2c] sm:$0xf] %v2583
      %2616 = vst [vmem:[%s208 + $0x30] sm:$0xf] %v2584
      %2617 = vst [vmem:[%s208 + $0x34] sm:$0xf] %v2585
      %2618 = vst [vmem:[%s208 + $0x38] sm:$0xf] %v2586
      %2619 = vst [vmem:[%s208 + $0x3c] sm:$0xf] %v2587
      %2620 = vst [vmem:[%s208 + $0x40] sm:$0xf] %v2588
      %2621 = vst [vmem:[%s208 + $0x44] sm:$0xf] %v2589
      %2622 = vst [vmem:[%s208 + $0x48] sm:$0xf] %v2590
      %2623 = vst [vmem:[%s208 + $0x4c] sm:$0xf] %v2591
      %2624 = vst [vmem:[%s208 + $0x50] sm:$0xf] %v2592
      %2625 = vst [vmem:[%s208 + $0x54] sm:$0xf] %v2593
      %2626 = vst [vmem:[%s208 + $0x58] sm:$0xf] %v2594
      %2627 = vst [vmem:[%s208 + $0x5c] sm:$0xf] %v2595
      %2628 = vst [vmem:[%s208 + $0x60] sm:$0xf] %v2596
      %2629 = vst [vmem:[%s208 + $0x64] sm:$0xf] %v2597
      %2630 = vst [vmem:[%s208 + $0x68] sm:$0xf] %v2598
      %2631 = vst [vmem:[%s208 + $0x6c] sm:$0xf] %v2599
      %2632 = vst [vmem:[%s208 + $0x70] sm:$0xf] %v2600
      %2633 = vst [vmem:[%s208 + $0x74] sm:$0xf] %v2601
      %2634 = vst [vmem:[%s208 + $0x78] sm:$0xf] %v2602
      %2635 = vst [vmem:[%s208 + $0x7c] sm:$0xf] %v2603
      %v2636 = vadd.f32 %v2540, %v2542
      %v2637 = vadd.f32 %v2636, %v2544
      %v2638 = vadd.f32 %v2637, %v2546
      %v2639 = vadd.f32 %v2638, %v2548
      %v2640 = vadd.f32 %v2639, %v2550
      %v2641 = vadd.f32 %v2640, %v2552
      %v2642 = vadd.f32 %v2641, %v2554
      %v2643 = vadd.f32 %v2642, %v2556
      %v2644 = vadd.f32 %v2643, %v2558
      %v2645 = vadd.f32 %v2644, %v2560
      %v2646 = vadd.f32 %v2645, %v2562
      %v2647 = vadd.f32 %v2646, %v2564
      %v2648 = vadd.f32 %v2647, %v2566
      %v2649 = vadd.f32 %v2648, %v2568
      %v2650 = vadd.f32 %v2649, %v2570
      %v2651 = vadd.f32 %v2541, %v2543
      %v2652 = vadd.f32 %v2651, %v2545
      %v2653 = vadd.f32 %v2652, %v2547
      %v2654 = vadd.f32 %v2653, %v2549
      %v2655 = vadd.f32 %v2654, %v2551
      %v2656 = vadd.f32 %v2655, %v2553
      %v2657 = vadd.f32 %v2656, %v2555
      %v2658 = vadd.f32 %v2657, %v2557
      %v2659 = vadd.f32 %v2658, %v2559
      %v2660 = vadd.f32 %v2659, %v2561
      %v2661 = vadd.f32 %v2660, %v2563
      %v2662 = vadd.f32 %v2661, %v2565
      %v2663 = vadd.f32 %v2662, %v2567
      %v2664 = vadd.f32 %v2663, %v2569
      %v2665 = vadd.f32 %v2664, %v2571
      %v2666 = vadd.f32 %v2650, %v2665
      %v2667 = vrot.slane %v2666, 4
      %v2668 = vadd.f32 %v2666, %v2667
      %v2669 = vrot.slane %v2668, 2
      %v2670 = vadd.f32 %v2668, %v2669
      %v2671 = vrot.slane %v2670, 1
      %v2672 = vadd.f32 %v2670, %v2671
      %2673 = vst [vmem:[%s211] sm:$0x1] %v2672
      %v2674 = vmul.f32 %v2540, %v2540
      %v2675 = vmul.f32 %v2541, %v2541
      %v2676 = vmul.f32 %v2542, %v2542
      %v2677 = vmul.f32 %v2543, %v2543
      %v2678 = vmul.f32 %v2544, %v2544
      %v2679 = vmul.f32 %v2545, %v2545
      %v2680 = vmul.f32 %v2546, %v2546
      %v2681 = vmul.f32 %v2547, %v2547
      %v2682 = vmul.f32 %v2548, %v2548
      %v2683 = vmul.f32 %v2549, %v2549
      %v2684 = vmul.f32 %v2550, %v2550
      %v2685 = vmul.f32 %v2551, %v2551
      %v2686 = vmul.f32 %v2552, %v2552
      %v2687 = vmul.f32 %v2553, %v2553
      %v2688 = vmul.f32 %v2554, %v2554
      %v2689 = vmul.f32 %v2555, %v2555
      %v2690 = vmul.f32 %v2556, %v2556
      %v2691 = vmul.f32 %v2557, %v2557
      %v2692 = vmul.f32 %v2558, %v2558
      %v2693 = vmul.f32 %v2559, %v2559
      %v2694 = vmul.f32 %v2560, %v2560
      %v2695 = vmul.f32 %v2561, %v2561
      %v2696 = vmul.f32 %v2562, %v2562
      %v2697 = vmul.f32 %v2563, %v2563
      %v2698 = vmul.f32 %v2564, %v2564
      %v2699 = vmul.f32 %v2565, %v2565
      %v2700 = vmul.f32 %v2566, %v2566
      %v2701 = vmul.f32 %v2567, %v2567
      %v2702 = vmul.f32 %v2568, %v2568
      %v2703 = vmul.f32 %v2569, %v2569
      %v2704 = vmul.f32 %v2570, %v2570
      %v2705 = vmul.f32 %v2571, %v2571
      %v2706 = vadd.f32 %v2674, %v2676
      %v2707 = vadd.f32 %v2706, %v2678
      %v2708 = vadd.f32 %v2707, %v2680
      %v2709 = vadd.f32 %v2708, %v2682
      %v2710 = vadd.f32 %v2709, %v2684
      %v2711 = vadd.f32 %v2710, %v2686
      %v2712 = vadd.f32 %v2711, %v2688
      %v2713 = vadd.f32 %v2712, %v2690
      %v2714 = vadd.f32 %v2713, %v2692
      %v2715 = vadd.f32 %v2714, %v2694
      %v2716 = vadd.f32 %v2715, %v2696
      %v2717 = vadd.f32 %v2716, %v2698
      %v2718 = vadd.f32 %v2717, %v2700
      %v2719 = vadd.f32 %v2718, %v2702
      %v2720 = vadd.f32 %v2719, %v2704
      %v2721 = vadd.f32 %v2675, %v2677
      %v2722 = vadd.f32 %v2721, %v2679
      %v2723 = vadd.f32 %v2722, %v2681
      %v2724 = vadd.f32 %v2723, %v2683
      %v2725 = vadd.f32 %v2724, %v2685
      %v2726 = vadd.f32 %v2725, %v2687
      %v2727 = vadd.f32 %v2726, %v2689
      %v2728 = vadd.f32 %v2727, %v2691
      %v2729 = vadd.f32 %v2728, %v2693
      %v2730 = vadd.f32 %v2729, %v2695
      %v2731 = vadd.f32 %v2730, %v2697
      %v2732 = vadd.f32 %v2731, %v2699
      %v2733 = vadd.f32 %v2732, %v2701
      %v2734 = vadd.f32 %v2733, %v2703
      %v2735 = vadd.f32 %v2734, %v2705
      %v2736 = vadd.f32 %v2720, %v2735
      %v2737 = vrot.slane %v2736, 4
      %v2738 = vadd.f32 %v2736, %v2737
      %v2739 = vrot.slane %v2738, 2
      %v2740 = vadd.f32 %v2738, %v2739
      %v2741 = vrot.slane %v2740, 1
      %v2742 = vadd.f32 %v2740, %v2741
      %2743 = vst [vmem:[%s214] sm:$0x1] %v2742
      %p2744 = scmp.lt.s32.totalorder %s16, 1
      %s2745 = scalar_select %p2744, %s16, 1
      %s2746 = smul.addr %s2745, 32
      %s2747 = smul.addr %s2746, 4
      %s2748 = scalar_lea.vmem %s2, %s2747
      %p2749 = scmp.lt.s32.totalorder %s16, 1
      %s2750 = scalar_select %p2749, %s16, 1
      %s2751 = scalar_lea.vmem %s3, %s2750
      %p2752 = scmp.lt.s32.totalorder %s16, 1
      %s2753 = scalar_select %p2752, %s16, 1
      %s2754 = scalar_lea.vmem %s4, %s2753
      // Predicated region
      $region29: #{convmixer_block.2} parent=27 // pred_check
        %p2755 = pneg %p81
      $region30: #{convmixer_block.2} parent=27 // pred_check_branch
        %2757 = sbr.rel (%p2755) target = $region32
      $region31: #{convmixer_block.2} parent=27 // pred_region
        _
      $region32: #{convmixer_block.2} parent=27 // pred_fallthru
        _
      // Predicated region
      $region33: #{convmixer_block.2} parent=27 // pred_check
        %p2758 = pneg %p107
      $region34: #{convmixer_block.2} parent=27 // pred_check_branch
        %2760 = sbr.rel (%p2758) target = $region36
      $region35: #{convmixer_block.2} parent=27 // pred_region
        _
      $region36: #{convmixer_block.2} parent=27 // pred_fallthru
        _
      // Predicated region
      $region37: #{convmixer_block.2} parent=27 // pred_check
        %p2761 = pneg %p133
      $region38: #{convmixer_block.2} parent=27 // pred_check_branch
        %2763 = sbr.rel (%p2761) target = $region40
      $region39: #{convmixer_block.2} parent=27 // pred_region
        _
      $region40: #{convmixer_block.2} parent=27 // pred_fallthru
        _
    $region28: #{convmixer_block.2} parent=5 // pred_fallthru
      _
    %p2764 = scmp.le.s32.totalorder 2, %s11
    // Predicated region
    $region41: #{convmixer_block.2} parent=5 // pred_check
      %p2765 = pneg %p2764
    $region42: #{convmixer_block.2} parent=5 // pred_check_branch
      %2767 = sbr.rel (%p2765) target = $region44
    $region43: #{convmixer_block.2} parent=5 // pred_region
      %s2768 = ssub.s32 %s11, 2
      // Predicated region
      $region45: #{convmixer_block.2} parent=43 // pred_check
        %p2769 = pneg %p87
      $region46: #{convmixer_block.2} parent=43 // pred_check_branch
        %2771 = sbr.rel (%p2769) target = $region48
      $region47: #{convmixer_block.2} parent=43 // pred_region
        %p2772 = scmp.lt.s32.totalorder %s17, 1
        %s2773 = scalar_select %p2772, %s17, 1
        %s2774 = smul.addr %s2773, 32
        %s2775 = smul.addr %s2774, 4
        %s2776 = scalar_lea.vmem %s2, %s2775
      $region48: #{convmixer_block.2} parent=43 // pred_fallthru
        _
      // Predicated region
      $region49: #{convmixer_block.2} parent=43 // pred_check
        %p2777 = pneg %p113
      $region50: #{convmixer_block.2} parent=43 // pred_check_branch
        %2779 = sbr.rel (%p2777) target = $region52
      $region51: #{convmixer_block.2} parent=43 // pred_region
        %p2780 = scmp.lt.s32.totalorder %s17, 1
        %s2781 = scalar_select %p2780, %s17, 1
        %s2782 = scalar_lea.vmem %s3, %s2781
      $region52: #{convmixer_block.2} parent=43 // pred_fallthru
        _
      // Predicated region
      $region53: #{convmixer_block.2} parent=43 // pred_check
        %p2783 = pneg %p139
      $region54: #{convmixer_block.2} parent=43 // pred_check_branch
        %2785 = sbr.rel (%p2783) target = $region56
      $region55: #{convmixer_block.2} parent=43 // pred_region
        %p2786 = scmp.lt.s32.totalorder %s17, 1
        %s2787 = scalar_select %p2786, %s17, 1
        %s2788 = scalar_lea.vmem %s4, %s2787
      $region56: #{convmixer_block.2} parent=43 // pred_fallthru
        _
    $region44: #{convmixer_block.2} parent=5 // pred_fallthru
      _
  $region6: #{convmixer_block.2} parent=0 // loop_footer
    %s15 = sadd.s32 1, %s11
  $region7: #{convmixer_block.2} parent=0 // loop_footer_branch
    %10 = sbr.rel target = $region3
  $region8: #{convmixer_block.2} parent=0 // loop_exit
    _

</llo_original>
